<compile_context>
chip_gen: v7x
topology: tpu7x:2x2x1
jax: 0.10.0
libtpu: 0.0.40
codegen_flags: <defaults>
</compile_context>

<pallas_src>
import functools

import numpy as np
import jax
import jax.numpy as jnp
from jax import lax
from jax.experimental import pallas as pl
from jax.experimental.pallas import tpu as pltpu


# -----------------------------------------------------------------------------
# Host-side parameter folding
# -----------------------------------------------------------------------------
def _conv_layer_to_matrix(w, b, gamma, beta, L_in, stride):
    """Fold Conv1d(valid) into a dense (L_in*C_in, L_out*C_out) matrix acting on
    row-vectors laid out position-major / channel-minor, plus a
    (3, L_out*C_out) [bias; gamma; beta] row pack for the GroupNorm affine."""
    w = np.asarray(w); b = np.asarray(b)
    g = np.asarray(gamma); bt = np.asarray(beta)
    C_out, C_in, K = w.shape
    L_out = (L_in - K) // stride + 1
    M = np.zeros((L_in * C_in, L_out * C_out), np.float32)
    for j in range(L_out):
        for k in range(K):
            l = j * stride + k
            M[l * C_in:(l + 1) * C_in, j * C_out:(j + 1) * C_out] = w[:, :, k].T
    A = np.stack([np.tile(b, L_out), np.tile(g, L_out), np.tile(bt, L_out)],
                 axis=0).astype(np.float32)
    return M, A, L_out


def init_embedding(key, latent_dim, seq_len):
    cfg = [(2, latent_dim // 8, 6, 3),
           (latent_dim // 8, latent_dim // 4, 5, 3),
           (latent_dim // 4, latent_dim // 2, 5, 2),
           (latent_dim // 2, latent_dim, 3, 1)]
    raw, folded = [], []
    L = seq_len
    for (c_in, c_out, k, s) in cfg:
        key, k1, k2 = jax.random.split(key, 3)
        w = jax.random.normal(k1, (c_out, c_in, k), jnp.float32) / np.sqrt(c_in * k)
        b = jax.random.normal(k2, (c_out,), jnp.float32) * 0.01
        gamma = jnp.ones((c_out,), jnp.float32)
        beta = jnp.zeros((c_out,), jnp.float32)
        M, A, L = _conv_layer_to_matrix(w, b, gamma, beta, L, s)
        raw.append((w, b, gamma, beta, s))
        folded.append((jnp.asarray(M), jnp.asarray(A)))
    assert L == 1, "seq_len must reduce to length 1 through the conv stack"
    return raw, folded


def init_encoder_layer(key, d):
    hid = 4 * d
    ks = jax.random.split(key, 4)
    s = 1.0 / np.sqrt(d)
    wqkv = jax.random.normal(ks[0], (d, 3 * d), jnp.float32) * s
    wo = jax.random.normal(ks[1], (d, d), jnp.float32) * s
    w1 = jax.random.normal(ks[2], (d, hid), jnp.float32) * s
    w2 = jax.random.normal(ks[3], (hid, d), jnp.float32) / np.sqrt(hid)
    zd = jnp.zeros((1, d), jnp.float32)
    return [wqkv, jnp.zeros((1, 3 * d), jnp.float32), wo, zd,
            jnp.ones((1, d), jnp.float32), zd,
            w1, jnp.zeros((1, hid), jnp.float32), w2, zd,
            jnp.ones((1, d), jnp.float32), zd]


def _rope_tables(n_pos, dim):
    inv = 1.0 / (10000.0 ** (np.arange(0, dim, 2, dtype=np.float32) / dim))
    ang = np.repeat(np.arange(n_pos, dtype=np.float32)[:, None] * inv[None, :],
                    2, axis=-1)
    rot = np.zeros((dim, dim), np.float32)       # rotate_half (interleaved) as z @ R
    for i in range(dim // 2):
        rot[2 * i + 1, 2 * i] = -1.0
        rot[2 * i, 2 * i + 1] = 1.0
    return np.cos(ang), np.sin(ang), rot


def build_params(key, latent_dim, nlayers, seq_len):
    k1, k2, k3 = jax.random.split(key, 3)
    raw_k, fold_k = init_embedding(k1, latent_dim, seq_len)
    raw_b, fold_b = init_embedding(k2, latent_dim, seq_len)
    enc = [init_encoder_layer(k, latent_dim) for k in jax.random.split(k3, nlayers)]
    kernel_params = dict(conv_kps=fold_k, conv_bbox=fold_b, enc=enc)
    ref_params = dict(conv_kps=raw_k, conv_bbox=raw_b, enc=enc)
    return kernel_params, ref_params


def _pack_slab(named_mats, dtype, row_align):
    """Pack a list of (name, 2-D array) into one (rows, width) slab.  Each
    entry starts at a row offset aligned to `row_align`; returns the slab and a
    dict name -> (row_offset, rows, cols) for static in-kernel slicing."""
    width = max(int(np.ceil(m.shape[1] / 128.0)) * 128 for _, m in named_mats)
    offs, blocks, row = {}, [], 0
    for name, m in named_mats:
        r, c = m.shape
        rp = -(-r // row_align) * row_align
        offs[name] = (row, r, c)
        blk = jnp.zeros((rp, width), dtype).at[:r, :c].set(m.astype(dtype))
        blocks.append(blk)
        row += rp
    return jnp.concatenate(blocks, axis=0), offs


# -----------------------------------------------------------------------------
# Fused forward pass: one pallas_call, grid over batch chunks (megacore)
# -----------------------------------------------------------------------------
@functools.partial(jax.jit, static_argnames=("nheads", "is_train"))
def encoder_forward(kps, bbox, params, nheads, is_train=False):
    B, S, n_kps, _ = kps.shape
    n_bbox = bbox.shape[2]
    n_tok = n_kps + n_bbox
    D = params["enc"][0][0].shape[0]
    nlayers = len(params["enc"])
    dh = D // nheads
    scale = 1.0 / float(np.sqrt(dh))

    # ---- host-side layout: one (B, n_tok, 2S) row stack (matches the PyTorch
    # permute), then fold samples into the sublane axis of every kernel matmul.
    kps2d = jnp.transpose(kps, (0, 2, 1, 3)).reshape(B, n_kps, 2 * S)
    bbox2d = jnp.transpose(bbox, (0, 2, 1, 3)).reshape(B, n_bbox, 2 * S)
    x = jnp.concatenate([kps2d, bbox2d], axis=1)               # (B, n_tok, 2S)

    max_bb = max(1, 128 // n_tok)              # keep Bb*n_tok within one lane tile
    n_chunks = max(2 if B >= 2 else 1, -(-B // max_bb))
    Bb = -(-B // n_chunks)
    B_pad = n_chunks * Bb
    if B_pad != B:
        x = jnp.concatenate(
            [x, jnp.zeros((B_pad - B, n_tok, 2 * S), x.dtype)], axis=0)
    R = Bb * n_tok
    x = x.reshape(n_chunks, R, 2 * S)

    # ---- constants (depend only on static shapes) -----------------------------
    cos_np, sin_np, rot_np = _rope_tables(n_tok, D)
    cos_t = np.tile(cos_np, (Bb, 1)).astype(np.float32)         # (R, D)
    sin_t = np.tile(sin_np, (Bb, 1)).astype(np.float32)
    selk = np.zeros((R, D), np.float32)                         # 1 on kps rows
    xbias = np.full((R, R), -1e30, np.float32)                  # block-diag mask
    for j in range(Bb):
        selk[j * n_tok: j * n_tok + n_kps, :] = 1.0
        xbias[j * n_tok:(j + 1) * n_tok, j * n_tok:(j + 1) * n_tok] = 0.0
    hmask = np.zeros((nheads, D), np.float32)                   # per-head V mask
    for h in range(nheads):
        hmask[h, h * dh:(h + 1) * dh] = 1.0

    # ---- pack constants into two slabs (1 f32 slab + 1 bf16 weight slab) ------
    f32_mats = [("cos", jnp.asarray(cos_t)), ("sin", jnp.asarray(sin_t)),
                ("rot", jnp.asarray(rot_np)), ("selk", jnp.asarray(selk)),
                ("xbias", jnp.asarray(xbias)), ("hmask", jnp.asarray(hmask))]
    w_mats = []
    for tag, conv in (("k", params["conv_kps"]), ("b", params["conv_bbox"])):
        for li, (M, A) in enumerate(conv):
            f32_mats.append((f"{tag}A{li}", A))
            if li == 0:
                f32_mats.append((f"{tag}M{li}", M))   # first conv layer stays f32
            else:
                w_mats.append((f"{tag}M{li}", M))
    mwidth = 4 * D
    for li, lyr in enumerate(params["enc"]):
        wqkv, bqkv, wo, bo, g1, be1, w1, b1, w2, b2, g2, be2 = lyr
        w_mats += [(f"e{li}_wqkv", wqkv), (f"e{li}_wo", wo),
                   (f"e{li}_w1", w1), (f"e{li}_w2", w2)]
        vecs = [bqkv, bo, g1, be1, b1, b2, g2, be2]
        misc = jnp.concatenate(
            [jnp.pad(v, ((0, 0), (0, mwidth - v.shape[1]))) for v in vecs], axis=0)
        f32_mats.append((f"e{li}_misc", misc))

    f_slab, f_off = _pack_slab(f32_mats, jnp.float32, 8)
    w_slab, w_off = _pack_slab(w_mats, jnp.bfloat16, 16)

    # ---- the fused kernel ------------------------------------------------------
    def kernel(x_ref, f_ref, w_ref, *outs):
        z_out = outs[0]
        attn_out = None if is_train else outs[1]

        def fm(name):
            o, r, c = f_off[name]
            return f_ref[o:o + r, :c]

        def wm(name):
            o, r, c = w_off[name]
            return w_ref[o:o + r, :c]

        def mxm(a, b):                      # bf16 MXU matmul, f32 accumulation
            return jnp.dot(a.astype(jnp.bfloat16), b,
                           preferred_element_type=jnp.float32)

        def f32mm(a, b):
            return jnp.dot(a, b, preferred_element_type=jnp.float32)

        def gn_silu(y, A):                  # per-row GroupNorm(1, C) + exact SiLU
            mu = jnp.mean(y, axis=1, keepdims=True)
            var = jnp.mean((y - mu) * (y - mu), axis=1, keepdims=True)
            y = (y - mu) * lax.rsqrt(var + 1e-5) * A[1:2, :] + A[2:3, :]
            return y * (1.0 / (1.0 + jnp.exp(-y)))

        def layer_norm(v, g, b):
            mu = jnp.mean(v, axis=1, keepdims=True)
            var = jnp.mean((v - mu) * (v - mu), axis=1, keepdims=True)
            return (v - mu) * lax.rsqrt(var + 1e-5) * g + b

        xin = x_ref[0]                                           # (R, 2S) f32

        def conv_chain(tag):
            A = fm(f"{tag}A0")
            h = gn_silu(f32mm(xin, fm(f"{tag}M0")) + A[0:1, :], A)
            for li in range(1, 4):
                A = fm(f"{tag}A{li}")
                h = gn_silu(mxm(h, wm(f"{tag}M{li}")) + A[0:1, :], A)
            return h                                             # (R, D)

        # Both point-embedding stacks run over the full row tile (rows are
        # independent because GroupNorm is per row); select kps vs bbox rows.
        sel = fm("selk")
        z = sel * conv_chain("k") + (1.0 - sel) * conv_chain("b")

        # Rotary PE in f32 (rotate_half as a constant signed permutation matmul).
        z = z * fm("cos") + f32mm(z, fm("rot")) * fm("sin")

        xbias_v = fm("xbias")          # -1e30 across different samples in a chunk
        hmask_v = fm("hmask")          # (nheads, D) head column masks

        for li in range(nlayers):
            misc = fm(f"e{li}_misc")
            bqkv, bo = misc[0:1, :3 * D], misc[1:2, :D]
            g1, be1 = misc[2:3, :D], misc[3:4, :D]
            b1, b2 = misc[4:5, :4 * D], misc[5:6, :D]
            g2, be2 = misc[6:7, :D], misc[7:8, :D]

            qkv = mxm(z, wm(f"e{li}_wqkv")) + bqkv               # fused QKV (R, 3D)
            v_full = qkv[:, 2 * D:]
            ctx = jnp.zeros((R, D), jnp.float32)
            attn_sum = jnp.zeros((R, R), jnp.float32)
            for hd in range(nheads):
                q = qkv[:, hd * dh:(hd + 1) * dh]
                k = qkv[:, D + hd * dh:D + (hd + 1) * dh]
                s = lax.dot_general(q, k, (((1,), (1,)), ((), ())),
                                    preferred_element_type=jnp.float32)
                s = s * scale + xbias_v
                s = s - jnp.max(s, axis=1, keepdims=True)
                p = jnp.exp(s)
                p = p * (1.0 / jnp.sum(p, axis=1, keepdims=True))  # exact softmax
                if attn_out is not None:
                    attn_sum = attn_sum + p
                # head-masked V: each head accumulates into its own D/nheads
                # columns of ctx through one matmul (no concatenates needed).
                ctx = ctx + mxm(p, (v_full * hmask_v[hd:hd + 1, :]
                                    ).astype(jnp.bfloat16))
            o = mxm(ctx, wm(f"e{li}_wo")) + bo                   # single W_o matmul
            y = layer_norm(z + o, g1, be1)
            ff = mxm(jnp.maximum(mxm(y, wm(f"e{li}_w1")) + b1, 0.0),
                     wm(f"e{li}_w2")) + b2
            z = layer_norm(y + ff, g2, be2)
            if attn_out is not None:
                attn_out[0, li] = attn_sum * (1.0 / nheads)

        z_out[0] = z

    # ---- pallas_call -----------------------------------------------------------
    def const_spec(a):
        nd = a.ndim
        return pl.BlockSpec(a.shape, lambda c, _nd=nd: (0,) * _nd)

    z_shape = jax.ShapeDtypeStruct((n_chunks, R, D), jnp.float32)
    z_spec = pl.BlockSpec((1, R, D), lambda c: (c, 0, 0))
    if is_train:
        out_shape = z_shape
        out_specs = z_spec
    else:
        out_shape = (z_shape,
                     jax.ShapeDtypeStruct((n_chunks, nlayers, R, R), jnp.float32))
        out_specs = (z_spec,
                     pl.BlockSpec((1, nlayers, R, R), lambda c: (c, 0, 0, 0)))

    res = pl.pallas_call(
        kernel,
        out_shape=out_shape,
        grid=(n_chunks,),
        in_specs=[pl.BlockSpec((1, R, 2 * S), lambda c: (c, 0, 0)),
                  const_spec(f_slab), const_spec(w_slab)],
        out_specs=out_specs,
        compiler_params=pltpu.CompilerParams(
            dimension_semantics=("parallel",)),
    )(x, f_slab, w_slab)

    if is_train:
        z = res.reshape(B_pad, n_tok, D)[:B]
        return z, None

    z, attn_full = res
    z = z.reshape(B_pad, n_tok, D)[:B]
    a = attn_full.reshape(n_chunks, nlayers, Bb, n_tok, Bb, n_tok)
    attn = jnp.stack([a[:, :, j, :, j, :] for j in range(Bb)], axis=1)
    attn = attn.reshape(B_pad, nlayers, n_tok, n_tok)[:B]
    return z, attn


# -----------------------------------------------------------------------------
# Pure-JAX reference (same assumed semantics) for a numerical check
# -----------------------------------------------------------------------------
def _ref_ln(x, g, b):
    mu = jnp.mean(x, axis=-1, keepdims=True)
    var = jnp.mean((x - mu) ** 2, axis=-1, keepdims=True)
    return (x - mu) * jax.lax.rsqrt(var + 1e-5) * g + b


def _ref_embedding(x, layers, n_pts):
    B, S = x.shape[0], x.shape[1]
    h = jnp.transpose(x, (0, 2, 3, 1)).reshape(B * n_pts, 2, S)
    for (w, b, gamma, beta, stride) in layers:
        C_out, C_in, K = w.shape
        L_in = h.shape[-1]
        L_out = (L_in - K) // stride + 1
        idx = np.arange(L_out)[:, None] * stride + np.arange(K)[None, :]
        patches = h[:, :, idx]                                   # (N, C_in, L_out, K)
        h = jnp.einsum('nclk,ock->nol', patches, w) + b[None, :, None]
        mu = jnp.mean(h, axis=(1, 2), keepdims=True)
        var = jnp.mean((h - mu) ** 2, axis=(1, 2), keepdims=True)
        h = (h - mu) * jax.lax.rsqrt(var + 1e-5)
        h = h * gamma[None, :, None] + beta[None, :, None]
        h = h * jax.nn.sigmoid(h)
    return h[:, :, 0].reshape(B, n_pts, -1)


def ref_forward(kps, bbox, rp, nheads):
    ek = _ref_embedding(kps, rp['conv_kps'], kps.shape[2])
    eb = _ref_embedding(bbox, rp['conv_bbox'], bbox.shape[2])
    z = jnp.concatenate([ek, eb], axis=1)
    B, L, D = z.shape
    cos, sin, R = (jnp.asarray(a) for a in _rope_tables(L, D))
    z = z * cos[None] + jnp.einsum('bld,de->ble', z, R) * sin[None]
    H = nheads
    dh = D // H
    attns = []
    for lyr in rp['enc']:
        wqkv, bqkv, wo, bo, g1, be1, w1, b1, w2, b2, g2, be2 = lyr
        qkv = z @ wqkv + bqkv
        q = qkv[..., :D].reshape(B, L, H, dh).transpose(0, 2, 1, 3)
        k = qkv[..., D:2 * D].reshape(B, L, H, dh).transpose(0, 2, 1, 3)
        v = qkv[..., 2 * D:].reshape(B, L, H, dh).transpose(0, 2, 1, 3)
        s = jnp.einsum('bhqd,bhkd->bhqk', q, k) / np.sqrt(dh)
        p = jax.nn.softmax(s, axis=-1)
        attns.append(jnp.mean(p, axis=1, keepdims=True))
        ctx = jnp.einsum('bhqk,bhkd->bhqd', p, v).transpose(0, 2, 1, 3).reshape(B, L, D)
        o = ctx @ wo + bo
        y = _ref_ln(z + o, g1, be1)
        f = jnp.maximum(y @ w1 + b1, 0.0) @ w2 + b2
        z = _ref_ln(y + f, g2, be2)
    return z, jnp.concatenate(attns, axis=1)


# -----------------------------------------------------------------------------
if __name__ == "__main__":
    B, seq_len, latent_dim, nheads, nlayers = 4, 90, 32, 4, 2

    root = jax.random.PRNGKey(0)
    k_in1, k_in2, k_par = jax.random.split(root, 3)
    kps = jax.random.normal(k_in1, (B, seq_len, 13, 2), jnp.float32)
    bbox = jax.random.normal(k_in2, (B, seq_len, 2, 2), jnp.float32)

    kparams, rparams = build_params(k_par, latent_dim, nlayers, seq_len)

    # eval path (returns averaged attention maps)
    z, attn = encoder_forward(kps, bbox, kparams, nheads=nheads, is_train=False)
    z = jax.block_until_ready(z)
    attn = jax.block_until_ready(attn)

    assert z.shape == (B, 15, latent_dim)
    assert attn.shape == (B, nlayers, 15, 15)
    assert bool(jnp.all(jnp.isfinite(z))) and bool(jnp.all(jnp.isfinite(attn)))
    # exact in-kernel softmax -> attention rows are proper distributions
    assert float(jnp.max(jnp.abs(jnp.sum(attn, axis=-1) - 1.0))) < 1e-3

    # train path (no attention maps materialized)
    z_tr, attn_tr = encoder_forward(kps, bbox, kparams, nheads=nheads, is_train=True)
    z_tr = jax.block_until_ready(z_tr)
    assert attn_tr is None and z_tr.shape == (B, 15, latent_dim)

    # check against a pure-JAX f32 reference (kernel uses bf16 MXU weights, so
    # tolerances are finite but tightened vs. the previous version)
    z_ref, attn_ref = ref_forward(kps, bbox, rparams, nheads)
    assert float(jnp.max(jnp.abs(z - z_ref))) < 0.25
    assert float(jnp.max(jnp.abs(attn - attn_ref))) < 0.05

    print("KERNEL_OK")
</pallas_src>

<mosaic_0001>
module attributes {stable_mosaic.version = 11 : i64} {
  func.func @kernel(%arg0: i32, %arg1: memref<1x30x180xf32, #tpu.memory_space<vmem>>, %arg2: memref<616x128xf32, #tpu.memory_space<vmem>>, %arg3: memref<960x128xbf16, #tpu.memory_space<vmem>>, %arg4: memref<1x30x32xf32, #tpu.memory_space<vmem>>, %arg5: memref<1x2x30x30xf32, #tpu.memory_space<vmem>>) attributes {dimension_semantics = [#tpu.dimension_semantics<parallel>], iteration_bounds = array<i64: 2>, scalar_prefetch = 0 : i64, scratch_operands = 0 : i64, tpu.core_type = #tpu.core_type<tc>, window_params = [{transform_indices = @transform_0, window_bounds = array<i64: 1, 30, 180>}, {pipeline_mode = #tpu.pipeline_mode<synchronous>, transform_indices = @transform_1, window_bounds = array<i64: 616, 128>}, {pipeline_mode = #tpu.pipeline_mode<synchronous>, transform_indices = @transform_2, window_bounds = array<i64: 960, 128>}, {transform_indices = @transform_3, window_bounds = array<i64: 1, 30, 32>}, {transform_indices = @transform_4, window_bounds = array<i64: 1, 2, 30, 30>}]} {
    %c0 = arith.constant 0 : index
    %c0_0 = arith.constant 0 : index
    %c0_1 = arith.constant 0 : index
    %0 = vector.load %arg1[%c0, %c0_0, %c0_1] : memref<1x30x180xf32, #tpu.memory_space<vmem>>, vector<1x30x180xf32>
    %1 = vector.shape_cast %0 : vector<1x30x180xf32> to vector<30x180xf32>
    %c96 = arith.constant 96 : index
    %c0_2 = arith.constant 0 : index
    %2 = vector.load %arg2[%c96, %c0_2] : memref<616x128xf32, #tpu.memory_space<vmem>>, vector<30x32xf32>
    %c168 = arith.constant 168 : index
    %c0_3 = arith.constant 0 : index
    %3 = vector.load %arg2[%c168, %c0_3] : memref<616x128xf32, #tpu.memory_space<vmem>>, vector<3x116xf32>
    %c176 = arith.constant 176 : index
    %c0_4 = arith.constant 0 : index
    %4 = vector.load %arg2[%c176, %c0_4] : memref<616x128xf32, #tpu.memory_space<vmem>>, vector<180x116xf32>
    %cst = arith.constant dense<0.000000e+00> : vector<30x116xf32>
    %5 = tpu.matmul %1, %4, %cst {dimension_numbers = #tpu.dot_dimension_numbers<[1], [0], [0], [1], [0, 0, 1, 1], [], []>} : vector<30x180xf32>, vector<180x116xf32>, vector<30x116xf32> -> vector<30x116xf32>
    %6 = vector.extract_strided_slice %3 {offsets = [0, 0], sizes = [1, 116], strides = [1, 1]} : vector<3x116xf32> to vector<1x116xf32>
    %7 = vector.broadcast %6 : vector<1x116xf32> to vector<30x116xf32>
    %8 = arith.addf %5, %7 : vector<30x116xf32>
    %cst_5 = arith.constant dense<0.000000e+00> : vector<30xf32>
    %9 = vector.multi_reduction <add>, %8, %cst_5 [1] : vector<30x116xf32> to vector<30xf32>
    %10 = vector.shape_cast %9 : vector<30xf32> to vector<30x1xf32>
    %cst_6 = arith.constant 1.160000e+02 : f32
    %11 = vector.broadcast %cst_6 : f32 to vector<30x1xf32>
    %12 = arith.divf %10, %11 : vector<30x1xf32>
    %13 = vector.broadcast %12 : vector<30x1xf32> to vector<30x116xf32>
    %14 = arith.subf %8, %13 : vector<30x116xf32>
    %15 = vector.broadcast %12 : vector<30x1xf32> to vector<30x116xf32>
    %16 = arith.subf %8, %15 : vector<30x116xf32>
    %17 = arith.mulf %14, %16 : vector<30x116xf32>
    %cst_7 = arith.constant dense<0.000000e+00> : vector<30xf32>
    %18 = vector.multi_reduction <add>, %17, %cst_7 [1] : vector<30x116xf32> to vector<30xf32>
    %19 = vector.shape_cast %18 : vector<30xf32> to vector<30x1xf32>
    %cst_8 = arith.constant 1.160000e+02 : f32
    %20 = vector.broadcast %cst_8 : f32 to vector<30x1xf32>
    %21 = arith.divf %19, %20 : vector<30x1xf32>
    %22 = vector.broadcast %12 : vector<30x1xf32> to vector<30x116xf32>
    %23 = arith.subf %8, %22 : vector<30x116xf32>
    %cst_9 = arith.constant 9.99999974E-6 : f32
    %24 = vector.broadcast %cst_9 : f32 to vector<30x1xf32>
    %25 = arith.addf %21, %24 : vector<30x1xf32>
    %26 = math.rsqrt %25 : vector<30x1xf32>
    %27 = vector.broadcast %26 : vector<30x1xf32> to vector<30x116xf32>
    %28 = arith.mulf %23, %27 : vector<30x116xf32>
    %29 = vector.extract_strided_slice %3 {offsets = [1, 0], sizes = [1, 116], strides = [1, 1]} : vector<3x116xf32> to vector<1x116xf32>
    %30 = vector.broadcast %29 : vector<1x116xf32> to vector<30x116xf32>
    %31 = arith.mulf %28, %30 : vector<30x116xf32>
    %32 = vector.extract_strided_slice %3 {offsets = [2, 0], sizes = [1, 116], strides = [1, 1]} : vector<3x116xf32> to vector<1x116xf32>
    %33 = vector.broadcast %32 : vector<1x116xf32> to vector<30x116xf32>
    %34 = arith.addf %31, %33 : vector<30x116xf32>
    %cst_10 = arith.constant 0.000000e+00 : f32
    %35 = vector.broadcast %cst_10 : f32 to vector<30x116xf32>
    %36 = arith.subf %35, %34 : vector<30x116xf32>
    %37 = math.exp %36 : vector<30x116xf32>
    %cst_11 = arith.constant 1.000000e+00 : f32
    %38 = vector.broadcast %cst_11 : f32 to vector<30x116xf32>
    %39 = arith.addf %38, %37 : vector<30x116xf32>
    %cst_12 = arith.constant 1.000000e+00 : f32
    %40 = vector.broadcast %cst_12 : f32 to vector<30x116xf32>
    %41 = arith.divf %40, %39 : vector<30x116xf32>
    %42 = arith.mulf %34, %41 : vector<30x116xf32>
    %c360 = arith.constant 360 : index
    %c0_13 = arith.constant 0 : index
    %43 = vector.load %arg2[%c360, %c0_13] : memref<616x128xf32, #tpu.memory_space<vmem>>, vector<3x72xf32>
    %c0_14 = arith.constant 0 : index
    %c0_15 = arith.constant 0 : index
    %44 = vector.load %arg3[%c0_14, %c0_15] : memref<960x128xbf16, #tpu.memory_space<vmem>>, vector<116x72xbf16>
    %45 = arith.truncf %42 : vector<30x116xf32> to vector<30x116xbf16>
    %cst_16 = arith.constant dense<0.000000e+00> : vector<30x72xf32>
    %46 = tpu.matmul %45, %44, %cst_16 {dimension_numbers = #tpu.dot_dimension_numbers<[1], [0], [0], [1], [0, 0, 1, 1], [], []>} : vector<30x116xbf16>, vector<116x72xbf16>, vector<30x72xf32> -> vector<30x72xf32>
    %47 = vector.extract_strided_slice %43 {offsets = [0, 0], sizes = [1, 72], strides = [1, 1]} : vector<3x72xf32> to vector<1x72xf32>
    %48 = vector.broadcast %47 : vector<1x72xf32> to vector<30x72xf32>
    %49 = arith.addf %46, %48 : vector<30x72xf32>
    %cst_17 = arith.constant dense<0.000000e+00> : vector<30xf32>
    %50 = vector.multi_reduction <add>, %49, %cst_17 [1] : vector<30x72xf32> to vector<30xf32>
    %51 = vector.shape_cast %50 : vector<30xf32> to vector<30x1xf32>
    %cst_18 = arith.constant 7.200000e+01 : f32
    %52 = vector.broadcast %cst_18 : f32 to vector<30x1xf32>
    %53 = arith.divf %51, %52 : vector<30x1xf32>
    %54 = vector.broadcast %53 : vector<30x1xf32> to vector<30x72xf32>
    %55 = arith.subf %49, %54 : vector<30x72xf32>
    %56 = vector.broadcast %53 : vector<30x1xf32> to vector<30x72xf32>
    %57 = arith.subf %49, %56 : vector<30x72xf32>
    %58 = arith.mulf %55, %57 : vector<30x72xf32>
    %cst_19 = arith.constant dense<0.000000e+00> : vector<30xf32>
    %59 = vector.multi_reduction <add>, %58, %cst_19 [1] : vector<30x72xf32> to vector<30xf32>
    %60 = vector.shape_cast %59 : vector<30xf32> to vector<30x1xf32>
    %cst_20 = arith.constant 7.200000e+01 : f32
    %61 = vector.broadcast %cst_20 : f32 to vector<30x1xf32>
    %62 = arith.divf %60, %61 : vector<30x1xf32>
    %63 = vector.broadcast %53 : vector<30x1xf32> to vector<30x72xf32>
    %64 = arith.subf %49, %63 : vector<30x72xf32>
    %cst_21 = arith.constant 9.99999974E-6 : f32
    %65 = vector.broadcast %cst_21 : f32 to vector<30x1xf32>
    %66 = arith.addf %62, %65 : vector<30x1xf32>
    %67 = math.rsqrt %66 : vector<30x1xf32>
    %68 = vector.broadcast %67 : vector<30x1xf32> to vector<30x72xf32>
    %69 = arith.mulf %64, %68 : vector<30x72xf32>
    %70 = vector.extract_strided_slice %43 {offsets = [1, 0], sizes = [1, 72], strides = [1, 1]} : vector<3x72xf32> to vector<1x72xf32>
    %71 = vector.broadcast %70 : vector<1x72xf32> to vector<30x72xf32>
    %72 = arith.mulf %69, %71 : vector<30x72xf32>
    %73 = vector.extract_strided_slice %43 {offsets = [2, 0], sizes = [1, 72], strides = [1, 1]} : vector<3x72xf32> to vector<1x72xf32>
    %74 = vector.broadcast %73 : vector<1x72xf32> to vector<30x72xf32>
    %75 = arith.addf %72, %74 : vector<30x72xf32>
    %cst_22 = arith.constant 0.000000e+00 : f32
    %76 = vector.broadcast %cst_22 : f32 to vector<30x72xf32>
    %77 = arith.subf %76, %75 : vector<30x72xf32>
    %78 = math.exp %77 : vector<30x72xf32>
    %cst_23 = arith.constant 1.000000e+00 : f32
    %79 = vector.broadcast %cst_23 : f32 to vector<30x72xf32>
    %80 = arith.addf %79, %78 : vector<30x72xf32>
    %cst_24 = arith.constant 1.000000e+00 : f32
    %81 = vector.broadcast %cst_24 : f32 to vector<30x72xf32>
    %82 = arith.divf %81, %80 : vector<30x72xf32>
    %83 = arith.mulf %75, %82 : vector<30x72xf32>
    %c368 = arith.constant 368 : index
    %c0_25 = arith.constant 0 : index
    %84 = vector.load %arg2[%c368, %c0_25] : memref<616x128xf32, #tpu.memory_space<vmem>>, vector<3x48xf32>
    %c128 = arith.constant 128 : index
    %c0_26 = arith.constant 0 : index
    %85 = vector.load %arg3[%c128, %c0_26] : memref<960x128xbf16, #tpu.memory_space<vmem>>, vector<72x48xbf16>
    %86 = arith.truncf %83 : vector<30x72xf32> to vector<30x72xbf16>
    %cst_27 = arith.constant dense<0.000000e+00> : vector<30x48xf32>
    %87 = tpu.matmul %86, %85, %cst_27 {dimension_numbers = #tpu.dot_dimension_numbers<[1], [0], [0], [1], [0, 0, 1, 1], [], []>} : vector<30x72xbf16>, vector<72x48xbf16>, vector<30x48xf32> -> vector<30x48xf32>
    %88 = vector.extract_strided_slice %84 {offsets = [0, 0], sizes = [1, 48], strides = [1, 1]} : vector<3x48xf32> to vector<1x48xf32>
    %89 = vector.broadcast %88 : vector<1x48xf32> to vector<30x48xf32>
    %90 = arith.addf %87, %89 : vector<30x48xf32>
    %cst_28 = arith.constant dense<0.000000e+00> : vector<30xf32>
    %91 = vector.multi_reduction <add>, %90, %cst_28 [1] : vector<30x48xf32> to vector<30xf32>
    %92 = vector.shape_cast %91 : vector<30xf32> to vector<30x1xf32>
    %cst_29 = arith.constant 4.800000e+01 : f32
    %93 = vector.broadcast %cst_29 : f32 to vector<30x1xf32>
    %94 = arith.divf %92, %93 : vector<30x1xf32>
    %95 = vector.broadcast %94 : vector<30x1xf32> to vector<30x48xf32>
    %96 = arith.subf %90, %95 : vector<30x48xf32>
    %97 = vector.broadcast %94 : vector<30x1xf32> to vector<30x48xf32>
    %98 = arith.subf %90, %97 : vector<30x48xf32>
    %99 = arith.mulf %96, %98 : vector<30x48xf32>
    %cst_30 = arith.constant dense<0.000000e+00> : vector<30xf32>
    %100 = vector.multi_reduction <add>, %99, %cst_30 [1] : vector<30x48xf32> to vector<30xf32>
    %101 = vector.shape_cast %100 : vector<30xf32> to vector<30x1xf32>
    %cst_31 = arith.constant 4.800000e+01 : f32
    %102 = vector.broadcast %cst_31 : f32 to vector<30x1xf32>
    %103 = arith.divf %101, %102 : vector<30x1xf32>
    %104 = vector.broadcast %94 : vector<30x1xf32> to vector<30x48xf32>
    %105 = arith.subf %90, %104 : vector<30x48xf32>
    %cst_32 = arith.constant 9.99999974E-6 : f32
    %106 = vector.broadcast %cst_32 : f32 to vector<30x1xf32>
    %107 = arith.addf %103, %106 : vector<30x1xf32>
    %108 = math.rsqrt %107 : vector<30x1xf32>
    %109 = vector.broadcast %108 : vector<30x1xf32> to vector<30x48xf32>
    %110 = arith.mulf %105, %109 : vector<30x48xf32>
    %111 = vector.extract_strided_slice %84 {offsets = [1, 0], sizes = [1, 48], strides = [1, 1]} : vector<3x48xf32> to vector<1x48xf32>
    %112 = vector.broadcast %111 : vector<1x48xf32> to vector<30x48xf32>
    %113 = arith.mulf %110, %112 : vector<30x48xf32>
    %114 = vector.extract_strided_slice %84 {offsets = [2, 0], sizes = [1, 48], strides = [1, 1]} : vector<3x48xf32> to vector<1x48xf32>
    %115 = vector.broadcast %114 : vector<1x48xf32> to vector<30x48xf32>
    %116 = arith.addf %113, %115 : vector<30x48xf32>
    %cst_33 = arith.constant 0.000000e+00 : f32
    %117 = vector.broadcast %cst_33 : f32 to vector<30x48xf32>
    %118 = arith.subf %117, %116 : vector<30x48xf32>
    %119 = math.exp %118 : vector<30x48xf32>
    %cst_34 = arith.constant 1.000000e+00 : f32
    %120 = vector.broadcast %cst_34 : f32 to vector<30x48xf32>
    %121 = arith.addf %120, %119 : vector<30x48xf32>
    %cst_35 = arith.constant 1.000000e+00 : f32
    %122 = vector.broadcast %cst_35 : f32 to vector<30x48xf32>
    %123 = arith.divf %122, %121 : vector<30x48xf32>
    %124 = arith.mulf %116, %123 : vector<30x48xf32>
    %c376 = arith.constant 376 : index
    %c0_36 = arith.constant 0 : index
    %125 = vector.load %arg2[%c376, %c0_36] : memref<616x128xf32, #tpu.memory_space<vmem>>, vector<3x32xf32>
    %c208 = arith.constant 208 : index
    %c0_37 = arith.constant 0 : index
    %126 = vector.load %arg3[%c208, %c0_37] : memref<960x128xbf16, #tpu.memory_space<vmem>>, vector<48x32xbf16>
    %127 = arith.truncf %124 : vector<30x48xf32> to vector<30x48xbf16>
    %cst_38 = arith.constant dense<0.000000e+00> : vector<30x32xf32>
    %128 = tpu.matmul %127, %126, %cst_38 {dimension_numbers = #tpu.dot_dimension_numbers<[1], [0], [0], [1], [0, 0, 1, 1], [], []>} : vector<30x48xbf16>, vector<48x32xbf16>, vector<30x32xf32> -> vector<30x32xf32>
    %129 = vector.extract_strided_slice %125 {offsets = [0, 0], sizes = [1, 32], strides = [1, 1]} : vector<3x32xf32> to vector<1x32xf32>
    %130 = vector.broadcast %129 : vector<1x32xf32> to vector<30x32xf32>
    %131 = arith.addf %128, %130 : vector<30x32xf32>
    %cst_39 = arith.constant dense<0.000000e+00> : vector<30xf32>
    %132 = vector.multi_reduction <add>, %131, %cst_39 [1] : vector<30x32xf32> to vector<30xf32>
    %133 = vector.shape_cast %132 : vector<30xf32> to vector<30x1xf32>
    %cst_40 = arith.constant 3.200000e+01 : f32
    %134 = vector.broadcast %cst_40 : f32 to vector<30x1xf32>
    %135 = arith.divf %133, %134 : vector<30x1xf32>
    %136 = vector.broadcast %135 : vector<30x1xf32> to vector<30x32xf32>
    %137 = arith.subf %131, %136 : vector<30x32xf32>
    %138 = vector.broadcast %135 : vector<30x1xf32> to vector<30x32xf32>
    %139 = arith.subf %131, %138 : vector<30x32xf32>
    %140 = arith.mulf %137, %139 : vector<30x32xf32>
    %cst_41 = arith.constant dense<0.000000e+00> : vector<30xf32>
    %141 = vector.multi_reduction <add>, %140, %cst_41 [1] : vector<30x32xf32> to vector<30xf32>
    %142 = vector.shape_cast %141 : vector<30xf32> to vector<30x1xf32>
    %cst_42 = arith.constant 3.200000e+01 : f32
    %143 = vector.broadcast %cst_42 : f32 to vector<30x1xf32>
    %144 = arith.divf %142, %143 : vector<30x1xf32>
    %145 = vector.broadcast %135 : vector<30x1xf32> to vector<30x32xf32>
    %146 = arith.subf %131, %145 : vector<30x32xf32>
    %cst_43 = arith.constant 9.99999974E-6 : f32
    %147 = vector.broadcast %cst_43 : f32 to vector<30x1xf32>
    %148 = arith.addf %144, %147 : vector<30x1xf32>
    %149 = math.rsqrt %148 : vector<30x1xf32>
    %150 = vector.broadcast %149 : vector<30x1xf32> to vector<30x32xf32>
    %151 = arith.mulf %146, %150 : vector<30x32xf32>
    %152 = vector.extract_strided_slice %125 {offsets = [1, 0], sizes = [1, 32], strides = [1, 1]} : vector<3x32xf32> to vector<1x32xf32>
    %153 = vector.broadcast %152 : vector<1x32xf32> to vector<30x32xf32>
    %154 = arith.mulf %151, %153 : vector<30x32xf32>
    %155 = vector.extract_strided_slice %125 {offsets = [2, 0], sizes = [1, 32], strides = [1, 1]} : vector<3x32xf32> to vector<1x32xf32>
    %156 = vector.broadcast %155 : vector<1x32xf32> to vector<30x32xf32>
    %157 = arith.addf %154, %156 : vector<30x32xf32>
    %cst_44 = arith.constant 0.000000e+00 : f32
    %158 = vector.broadcast %cst_44 : f32 to vector<30x32xf32>
    %159 = arith.subf %158, %157 : vector<30x32xf32>
    %160 = math.exp %159 : vector<30x32xf32>
    %cst_45 = arith.constant 1.000000e+00 : f32
    %161 = vector.broadcast %cst_45 : f32 to vector<30x32xf32>
    %162 = arith.addf %161, %160 : vector<30x32xf32>
    %cst_46 = arith.constant 1.000000e+00 : f32
    %163 = vector.broadcast %cst_46 : f32 to vector<30x32xf32>
    %164 = arith.divf %163, %162 : vector<30x32xf32>
    %165 = arith.mulf %157, %164 : vector<30x32xf32>
    %166 = arith.mulf %2, %165 : vector<30x32xf32>
    %cst_47 = arith.constant 1.000000e+00 : f32
    %167 = vector.broadcast %cst_47 : f32 to vector<30x32xf32>
    %168 = arith.subf %167, %2 : vector<30x32xf32>
    %c384 = arith.constant 384 : index
    %c0_48 = arith.constant 0 : index
    %169 = vector.load %arg2[%c384, %c0_48] : memref<616x128xf32, #tpu.memory_space<vmem>>, vector<3x116xf32>
    %c392 = arith.constant 392 : index
    %c0_49 = arith.constant 0 : index
    %170 = vector.load %arg2[%c392, %c0_49] : memref<616x128xf32, #tpu.memory_space<vmem>>, vector<180x116xf32>
    %cst_50 = arith.constant dense<0.000000e+00> : vector<30x116xf32>
    %171 = tpu.matmul %1, %170, %cst_50 {dimension_numbers = #tpu.dot_dimension_numbers<[1], [0], [0], [1], [0, 0, 1, 1], [], []>} : vector<30x180xf32>, vector<180x116xf32>, vector<30x116xf32> -> vector<30x116xf32>
    %172 = vector.extract_strided_slice %169 {offsets = [0, 0], sizes = [1, 116], strides = [1, 1]} : vector<3x116xf32> to vector<1x116xf32>
    %173 = vector.broadcast %172 : vector<1x116xf32> to vector<30x116xf32>
    %174 = arith.addf %171, %173 : vector<30x116xf32>
    %cst_51 = arith.constant dense<0.000000e+00> : vector<30xf32>
    %175 = vector.multi_reduction <add>, %174, %cst_51 [1] : vector<30x116xf32> to vector<30xf32>
    %176 = vector.shape_cast %175 : vector<30xf32> to vector<30x1xf32>
    %cst_52 = arith.constant 1.160000e+02 : f32
    %177 = vector.broadcast %cst_52 : f32 to vector<30x1xf32>
    %178 = arith.divf %176, %177 : vector<30x1xf32>
    %179 = vector.broadcast %178 : vector<30x1xf32> to vector<30x116xf32>
    %180 = arith.subf %174, %179 : vector<30x116xf32>
    %181 = vector.broadcast %178 : vector<30x1xf32> to vector<30x116xf32>
    %182 = arith.subf %174, %181 : vector<30x116xf32>
    %183 = arith.mulf %180, %182 : vector<30x116xf32>
    %cst_53 = arith.constant dense<0.000000e+00> : vector<30xf32>
    %184 = vector.multi_reduction <add>, %183, %cst_53 [1] : vector<30x116xf32> to vector<30xf32>
    %185 = vector.shape_cast %184 : vector<30xf32> to vector<30x1xf32>
    %cst_54 = arith.constant 1.160000e+02 : f32
    %186 = vector.broadcast %cst_54 : f32 to vector<30x1xf32>
    %187 = arith.divf %185, %186 : vector<30x1xf32>
    %188 = vector.broadcast %178 : vector<30x1xf32> to vector<30x116xf32>
    %189 = arith.subf %174, %188 : vector<30x116xf32>
    %cst_55 = arith.constant 9.99999974E-6 : f32
    %190 = vector.broadcast %cst_55 : f32 to vector<30x1xf32>
    %191 = arith.addf %187, %190 : vector<30x1xf32>
    %192 = math.rsqrt %191 : vector<30x1xf32>
    %193 = vector.broadcast %192 : vector<30x1xf32> to vector<30x116xf32>
    %194 = arith.mulf %189, %193 : vector<30x116xf32>
    %195 = vector.extract_strided_slice %169 {offsets = [1, 0], sizes = [1, 116], strides = [1, 1]} : vector<3x116xf32> to vector<1x116xf32>
    %196 = vector.broadcast %195 : vector<1x116xf32> to vector<30x116xf32>
    %197 = arith.mulf %194, %196 : vector<30x116xf32>
    %198 = vector.extract_strided_slice %169 {offsets = [2, 0], sizes = [1, 116], strides = [1, 1]} : vector<3x116xf32> to vector<1x116xf32>
    %199 = vector.broadcast %198 : vector<1x116xf32> to vector<30x116xf32>
    %200 = arith.addf %197, %199 : vector<30x116xf32>
    %cst_56 = arith.constant 0.000000e+00 : f32
    %201 = vector.broadcast %cst_56 : f32 to vector<30x116xf32>
    %202 = arith.subf %201, %200 : vector<30x116xf32>
    %203 = math.exp %202 : vector<30x116xf32>
    %cst_57 = arith.constant 1.000000e+00 : f32
    %204 = vector.broadcast %cst_57 : f32 to vector<30x116xf32>
    %205 = arith.addf %204, %203 : vector<30x116xf32>
    %cst_58 = arith.constant 1.000000e+00 : f32
    %206 = vector.broadcast %cst_58 : f32 to vector<30x116xf32>
    %207 = arith.divf %206, %205 : vector<30x116xf32>
    %208 = arith.mulf %200, %207 : vector<30x116xf32>
    %c576 = arith.constant 576 : index
    %c0_59 = arith.constant 0 : index
    %209 = vector.load %arg2[%c576, %c0_59] : memref<616x128xf32, #tpu.memory_space<vmem>>, vector<3x72xf32>
    %c256 = arith.constant 256 : index
    %c0_60 = arith.constant 0 : index
    %210 = vector.load %arg3[%c256, %c0_60] : memref<960x128xbf16, #tpu.memory_space<vmem>>, vector<116x72xbf16>
    %211 = arith.truncf %208 : vector<30x116xf32> to vector<30x116xbf16>
    %cst_61 = arith.constant dense<0.000000e+00> : vector<30x72xf32>
    %212 = tpu.matmul %211, %210, %cst_61 {dimension_numbers = #tpu.dot_dimension_numbers<[1], [0], [0], [1], [0, 0, 1, 1], [], []>} : vector<30x116xbf16>, vector<116x72xbf16>, vector<30x72xf32> -> vector<30x72xf32>
    %213 = vector.extract_strided_slice %209 {offsets = [0, 0], sizes = [1, 72], strides = [1, 1]} : vector<3x72xf32> to vector<1x72xf32>
    %214 = vector.broadcast %213 : vector<1x72xf32> to vector<30x72xf32>
    %215 = arith.addf %212, %214 : vector<30x72xf32>
    %cst_62 = arith.constant dense<0.000000e+00> : vector<30xf32>
    %216 = vector.multi_reduction <add>, %215, %cst_62 [1] : vector<30x72xf32> to vector<30xf32>
    %217 = vector.shape_cast %216 : vector<30xf32> to vector<30x1xf32>
    %cst_63 = arith.constant 7.200000e+01 : f32
    %218 = vector.broadcast %cst_63 : f32 to vector<30x1xf32>
    %219 = arith.divf %217, %218 : vector<30x1xf32>
    %220 = vector.broadcast %219 : vector<30x1xf32> to vector<30x72xf32>
    %221 = arith.subf %215, %220 : vector<30x72xf32>
    %222 = vector.broadcast %219 : vector<30x1xf32> to vector<30x72xf32>
    %223 = arith.subf %215, %222 : vector<30x72xf32>
    %224 = arith.mulf %221, %223 : vector<30x72xf32>
    %cst_64 = arith.constant dense<0.000000e+00> : vector<30xf32>
    %225 = vector.multi_reduction <add>, %224, %cst_64 [1] : vector<30x72xf32> to vector<30xf32>
    %226 = vector.shape_cast %225 : vector<30xf32> to vector<30x1xf32>
    %cst_65 = arith.constant 7.200000e+01 : f32
    %227 = vector.broadcast %cst_65 : f32 to vector<30x1xf32>
    %228 = arith.divf %226, %227 : vector<30x1xf32>
    %229 = vector.broadcast %219 : vector<30x1xf32> to vector<30x72xf32>
    %230 = arith.subf %215, %229 : vector<30x72xf32>
    %cst_66 = arith.constant 9.99999974E-6 : f32
    %231 = vector.broadcast %cst_66 : f32 to vector<30x1xf32>
    %232 = arith.addf %228, %231 : vector<30x1xf32>
    %233 = math.rsqrt %232 : vector<30x1xf32>
    %234 = vector.broadcast %233 : vector<30x1xf32> to vector<30x72xf32>
    %235 = arith.mulf %230, %234 : vector<30x72xf32>
    %236 = vector.extract_strided_slice %209 {offsets = [1, 0], sizes = [1, 72], strides = [1, 1]} : vector<3x72xf32> to vector<1x72xf32>
    %237 = vector.broadcast %236 : vector<1x72xf32> to vector<30x72xf32>
    %238 = arith.mulf %235, %237 : vector<30x72xf32>
    %239 = vector.extract_strided_slice %209 {offsets = [2, 0], sizes = [1, 72], strides = [1, 1]} : vector<3x72xf32> to vector<1x72xf32>
    %240 = vector.broadcast %239 : vector<1x72xf32> to vector<30x72xf32>
    %241 = arith.addf %238, %240 : vector<30x72xf32>
    %cst_67 = arith.constant 0.000000e+00 : f32
    %242 = vector.broadcast %cst_67 : f32 to vector<30x72xf32>
    %243 = arith.subf %242, %241 : vector<30x72xf32>
    %244 = math.exp %243 : vector<30x72xf32>
    %cst_68 = arith.constant 1.000000e+00 : f32
    %245 = vector.broadcast %cst_68 : f32 to vector<30x72xf32>
    %246 = arith.addf %245, %244 : vector<30x72xf32>
    %cst_69 = arith.constant 1.000000e+00 : f32
    %247 = vector.broadcast %cst_69 : f32 to vector<30x72xf32>
    %248 = arith.divf %247, %246 : vector<30x72xf32>
    %249 = arith.mulf %241, %248 : vector<30x72xf32>
    %c584 = arith.constant 584 : index
    %c0_70 = arith.constant 0 : index
    %250 = vector.load %arg2[%c584, %c0_70] : memref<616x128xf32, #tpu.memory_space<vmem>>, vector<3x48xf32>
    %c384_71 = arith.constant 384 : index
    %c0_72 = arith.constant 0 : index
    %251 = vector.load %arg3[%c384_71, %c0_72] : memref<960x128xbf16, #tpu.memory_space<vmem>>, vector<72x48xbf16>
    %252 = arith.truncf %249 : vector<30x72xf32> to vector<30x72xbf16>
    %cst_73 = arith.constant dense<0.000000e+00> : vector<30x48xf32>
    %253 = tpu.matmul %252, %251, %cst_73 {dimension_numbers = #tpu.dot_dimension_numbers<[1], [0], [0], [1], [0, 0, 1, 1], [], []>} : vector<30x72xbf16>, vector<72x48xbf16>, vector<30x48xf32> -> vector<30x48xf32>
    %254 = vector.extract_strided_slice %250 {offsets = [0, 0], sizes = [1, 48], strides = [1, 1]} : vector<3x48xf32> to vector<1x48xf32>
    %255 = vector.broadcast %254 : vector<1x48xf32> to vector<30x48xf32>
    %256 = arith.addf %253, %255 : vector<30x48xf32>
    %cst_74 = arith.constant dense<0.000000e+00> : vector<30xf32>
    %257 = vector.multi_reduction <add>, %256, %cst_74 [1] : vector<30x48xf32> to vector<30xf32>
    %258 = vector.shape_cast %257 : vector<30xf32> to vector<30x1xf32>
    %cst_75 = arith.constant 4.800000e+01 : f32
    %259 = vector.broadcast %cst_75 : f32 to vector<30x1xf32>
    %260 = arith.divf %258, %259 : vector<30x1xf32>
    %261 = vector.broadcast %260 : vector<30x1xf32> to vector<30x48xf32>
    %262 = arith.subf %256, %261 : vector<30x48xf32>
    %263 = vector.broadcast %260 : vector<30x1xf32> to vector<30x48xf32>
    %264 = arith.subf %256, %263 : vector<30x48xf32>
    %265 = arith.mulf %262, %264 : vector<30x48xf32>
    %cst_76 = arith.constant dense<0.000000e+00> : vector<30xf32>
    %266 = vector.multi_reduction <add>, %265, %cst_76 [1] : vector<30x48xf32> to vector<30xf32>
    %267 = vector.shape_cast %266 : vector<30xf32> to vector<30x1xf32>
    %cst_77 = arith.constant 4.800000e+01 : f32
    %268 = vector.broadcast %cst_77 : f32 to vector<30x1xf32>
    %269 = arith.divf %267, %268 : vector<30x1xf32>
    %270 = vector.broadcast %260 : vector<30x1xf32> to vector<30x48xf32>
    %271 = arith.subf %256, %270 : vector<30x48xf32>
    %cst_78 = arith.constant 9.99999974E-6 : f32
    %272 = vector.broadcast %cst_78 : f32 to vector<30x1xf32>
    %273 = arith.addf %269, %272 : vector<30x1xf32>
    %274 = math.rsqrt %273 : vector<30x1xf32>
    %275 = vector.broadcast %274 : vector<30x1xf32> to vector<30x48xf32>
    %276 = arith.mulf %271, %275 : vector<30x48xf32>
    %277 = vector.extract_strided_slice %250 {offsets = [1, 0], sizes = [1, 48], strides = [1, 1]} : vector<3x48xf32> to vector<1x48xf32>
    %278 = vector.broadcast %277 : vector<1x48xf32> to vector<30x48xf32>
    %279 = arith.mulf %276, %278 : vector<30x48xf32>
    %280 = vector.extract_strided_slice %250 {offsets = [2, 0], sizes = [1, 48], strides = [1, 1]} : vector<3x48xf32> to vector<1x48xf32>
    %281 = vector.broadcast %280 : vector<1x48xf32> to vector<30x48xf32>
    %282 = arith.addf %279, %281 : vector<30x48xf32>
    %cst_79 = arith.constant 0.000000e+00 : f32
    %283 = vector.broadcast %cst_79 : f32 to vector<30x48xf32>
    %284 = arith.subf %283, %282 : vector<30x48xf32>
    %285 = math.exp %284 : vector<30x48xf32>
    %cst_80 = arith.constant 1.000000e+00 : f32
    %286 = vector.broadcast %cst_80 : f32 to vector<30x48xf32>
    %287 = arith.addf %286, %285 : vector<30x48xf32>
    %cst_81 = arith.constant 1.000000e+00 : f32
    %288 = vector.broadcast %cst_81 : f32 to vector<30x48xf32>
    %289 = arith.divf %288, %287 : vector<30x48xf32>
    %290 = arith.mulf %282, %289 : vector<30x48xf32>
    %c592 = arith.constant 592 : index
    %c0_82 = arith.constant 0 : index
    %291 = vector.load %arg2[%c592, %c0_82] : memref<616x128xf32, #tpu.memory_space<vmem>>, vector<3x32xf32>
    %c464 = arith.constant 464 : index
    %c0_83 = arith.constant 0 : index
    %292 = vector.load %arg3[%c464, %c0_83] : memref<960x128xbf16, #tpu.memory_space<vmem>>, vector<48x32xbf16>
    %293 = arith.truncf %290 : vector<30x48xf32> to vector<30x48xbf16>
    %cst_84 = arith.constant dense<0.000000e+00> : vector<30x32xf32>
    %294 = tpu.matmul %293, %292, %cst_84 {dimension_numbers = #tpu.dot_dimension_numbers<[1], [0], [0], [1], [0, 0, 1, 1], [], []>} : vector<30x48xbf16>, vector<48x32xbf16>, vector<30x32xf32> -> vector<30x32xf32>
    %295 = vector.extract_strided_slice %291 {offsets = [0, 0], sizes = [1, 32], strides = [1, 1]} : vector<3x32xf32> to vector<1x32xf32>
    %296 = vector.broadcast %295 : vector<1x32xf32> to vector<30x32xf32>
    %297 = arith.addf %294, %296 : vector<30x32xf32>
    %cst_85 = arith.constant dense<0.000000e+00> : vector<30xf32>
    %298 = vector.multi_reduction <add>, %297, %cst_85 [1] : vector<30x32xf32> to vector<30xf32>
    %299 = vector.shape_cast %298 : vector<30xf32> to vector<30x1xf32>
    %cst_86 = arith.constant 3.200000e+01 : f32
    %300 = vector.broadcast %cst_86 : f32 to vector<30x1xf32>
    %301 = arith.divf %299, %300 : vector<30x1xf32>
    %302 = vector.broadcast %301 : vector<30x1xf32> to vector<30x32xf32>
    %303 = arith.subf %297, %302 : vector<30x32xf32>
    %304 = vector.broadcast %301 : vector<30x1xf32> to vector<30x32xf32>
    %305 = arith.subf %297, %304 : vector<30x32xf32>
    %306 = arith.mulf %303, %305 : vector<30x32xf32>
    %cst_87 = arith.constant dense<0.000000e+00> : vector<30xf32>
    %307 = vector.multi_reduction <add>, %306, %cst_87 [1] : vector<30x32xf32> to vector<30xf32>
    %308 = vector.shape_cast %307 : vector<30xf32> to vector<30x1xf32>
    %cst_88 = arith.constant 3.200000e+01 : f32
    %309 = vector.broadcast %cst_88 : f32 to vector<30x1xf32>
    %310 = arith.divf %308, %309 : vector<30x1xf32>
    %311 = vector.broadcast %301 : vector<30x1xf32> to vector<30x32xf32>
    %312 = arith.subf %297, %311 : vector<30x32xf32>
    %cst_89 = arith.constant 9.99999974E-6 : f32
    %313 = vector.broadcast %cst_89 : f32 to vector<30x1xf32>
    %314 = arith.addf %310, %313 : vector<30x1xf32>
    %315 = math.rsqrt %314 : vector<30x1xf32>
    %316 = vector.broadcast %315 : vector<30x1xf32> to vector<30x32xf32>
    %317 = arith.mulf %312, %316 : vector<30x32xf32>
    %318 = vector.extract_strided_slice %291 {offsets = [1, 0], sizes = [1, 32], strides = [1, 1]} : vector<3x32xf32> to vector<1x32xf32>
    %319 = vector.broadcast %318 : vector<1x32xf32> to vector<30x32xf32>
    %320 = arith.mulf %317, %319 : vector<30x32xf32>
    %321 = vector.extract_strided_slice %291 {offsets = [2, 0], sizes = [1, 32], strides = [1, 1]} : vector<3x32xf32> to vector<1x32xf32>
    %322 = vector.broadcast %321 : vector<1x32xf32> to vector<30x32xf32>
    %323 = arith.addf %320, %322 : vector<30x32xf32>
    %cst_90 = arith.constant 0.000000e+00 : f32
    %324 = vector.broadcast %cst_90 : f32 to vector<30x32xf32>
    %325 = arith.subf %324, %323 : vector<30x32xf32>
    %326 = math.exp %325 : vector<30x32xf32>
    %cst_91 = arith.constant 1.000000e+00 : f32
    %327 = vector.broadcast %cst_91 : f32 to vector<30x32xf32>
    %328 = arith.addf %327, %326 : vector<30x32xf32>
    %cst_92 = arith.constant 1.000000e+00 : f32
    %329 = vector.broadcast %cst_92 : f32 to vector<30x32xf32>
    %330 = arith.divf %329, %328 : vector<30x32xf32>
    %331 = arith.mulf %323, %330 : vector<30x32xf32>
    %332 = arith.mulf %168, %331 : vector<30x32xf32>
    %333 = arith.addf %166, %332 : vector<30x32xf32>
    %c0_93 = arith.constant 0 : index
    %c0_94 = arith.constant 0 : index
    %334 = vector.load %arg2[%c0_93, %c0_94] : memref<616x128xf32, #tpu.memory_space<vmem>>, vector<30x32xf32>
    %335 = arith.mulf %333, %334 : vector<30x32xf32>
    %c64 = arith.constant 64 : index
    %c0_95 = arith.constant 0 : index
    %336 = vector.load %arg2[%c64, %c0_95] : memref<616x128xf32, #tpu.memory_space<vmem>>, vector<32x32xf32>
    %cst_96 = arith.constant dense<0.000000e+00> : vector<30x32xf32>
    %337 = tpu.matmul %333, %336, %cst_96 {dimension_numbers = #tpu.dot_dimension_numbers<[1], [0], [0], [1], [0, 0, 1, 1], [], []>} : vector<30x32xf32>, vector<32x32xf32>, vector<30x32xf32> -> vector<30x32xf32>
    %c32 = arith.constant 32 : index
    %c0_97 = arith.constant 0 : index
    %338 = vector.load %arg2[%c32, %c0_97] : memref<616x128xf32, #tpu.memory_space<vmem>>, vector<30x32xf32>
    %339 = arith.mulf %337, %338 : vector<30x32xf32>
    %340 = arith.addf %335, %339 : vector<30x32xf32>
    %c128_98 = arith.constant 128 : index
    %c0_99 = arith.constant 0 : index
    %341 = vector.load %arg2[%c128_98, %c0_99] : memref<616x128xf32, #tpu.memory_space<vmem>>, vector<30x30xf32>
    %c160 = arith.constant 160 : index
    %c0_100 = arith.constant 0 : index
    %342 = vector.load %arg2[%c160, %c0_100] : memref<616x128xf32, #tpu.memory_space<vmem>>, vector<4x32xf32>
    %c600 = arith.constant 600 : index
    %c0_101 = arith.constant 0 : index
    %343 = vector.load %arg2[%c600, %c0_101] : memref<616x128xf32, #tpu.memory_space<vmem>>, vector<8x128xf32>
    %344 = vector.extract_strided_slice %343 {offsets = [0, 0], sizes = [1, 96], strides = [1, 1]} : vector<8x128xf32> to vector<1x96xf32>
    %345 = vector.extract_strided_slice %343 {offsets = [1, 0], sizes = [1, 32], strides = [1, 1]} : vector<8x128xf32> to vector<1x32xf32>
    %346 = vector.extract_strided_slice %343 {offsets = [2, 0], sizes = [1, 32], strides = [1, 1]} : vector<8x128xf32> to vector<1x32xf32>
    %347 = vector.extract_strided_slice %343 {offsets = [3, 0], sizes = [1, 32], strides = [1, 1]} : vector<8x128xf32> to vector<1x32xf32>
    %348 = vector.extract_strided_slice %343 {offsets = [4, 0], sizes = [1, 128], strides = [1, 1]} : vector<8x128xf32> to vector<1x128xf32>
    %349 = vector.extract_strided_slice %343 {offsets = [5, 0], sizes = [1, 32], strides = [1, 1]} : vector<8x128xf32> to vector<1x32xf32>
    %350 = vector.extract_strided_slice %343 {offsets = [6, 0], sizes = [1, 32], strides = [1, 1]} : vector<8x128xf32> to vector<1x32xf32>
    %351 = vector.extract_strided_slice %343 {offsets = [7, 0], sizes = [1, 32], strides = [1, 1]} : vector<8x128xf32> to vector<1x32xf32>
    %c512 = arith.constant 512 : index
    %c0_102 = arith.constant 0 : index
    %352 = vector.load %arg3[%c512, %c0_102] : memref<960x128xbf16, #tpu.memory_space<vmem>>, vector<32x96xbf16>
    %353 = arith.truncf %340 : vector<30x32xf32> to vector<30x32xbf16>
    %cst_103 = arith.constant dense<0.000000e+00> : vector<30x96xf32>
    %354 = tpu.matmul %353, %352, %cst_103 {dimension_numbers = #tpu.dot_dimension_numbers<[1], [0], [0], [1], [0, 0, 1, 1], [], []>} : vector<30x32xbf16>, vector<32x96xbf16>, vector<30x96xf32> -> vector<30x96xf32>
    %355 = vector.broadcast %344 : vector<1x96xf32> to vector<30x96xf32>
    %356 = arith.addf %354, %355 : vector<30x96xf32>
    %357 = vector.extract_strided_slice %356 {offsets = [0, 64], sizes = [30, 32], strides = [1, 1]} : vector<30x96xf32> to vector<30x32xf32>
    %cst_104 = arith.constant 0.000000e+00 : f32
    %358 = vector.broadcast %cst_104 : f32 to vector<30x32xf32>
    %cst_105 = arith.constant 0.000000e+00 : f32
    %359 = vector.broadcast %cst_105 : f32 to vector<30x30xf32>
    %360 = vector.extract_strided_slice %356 {offsets = [0, 0], sizes = [30, 8], strides = [1, 1]} : vector<30x96xf32> to vector<30x8xf32>
    %361 = vector.extract_strided_slice %356 {offsets = [0, 32], sizes = [30, 8], strides = [1, 1]} : vector<30x96xf32> to vector<30x8xf32>
    %cst_106 = arith.constant dense<0.000000e+00> : vector<30x30xf32>
    %362 = tpu.matmul %360, %361, %cst_106 {dimension_numbers = #tpu.dot_dimension_numbers<[1], [1], [0], [0], [0, 0, 1, 0], [], []>} : vector<30x8xf32>, vector<30x8xf32>, vector<30x30xf32> -> vector<30x30xf32>
    %cst_107 = arith.constant 0.353553385 : f32
    %363 = vector.broadcast %cst_107 : f32 to vector<30x30xf32>
    %364 = arith.mulf %362, %363 : vector<30x30xf32>
    %365 = arith.addf %364, %341 : vector<30x30xf32>
    %cst_108 = arith.constant dense<0xFF800000> : vector<30xf32>
    %366 = vector.multi_reduction <maximumf>, %365, %cst_108 [1] : vector<30x30xf32> to vector<30xf32>
    %367 = vector.shape_cast %366 : vector<30xf32> to vector<30x1xf32>
    %368 = vector.broadcast %367 : vector<30x1xf32> to vector<30x30xf32>
    %369 = arith.subf %365, %368 : vector<30x30xf32>
    %370 = math.exp %369 : vector<30x30xf32>
    %cst_109 = arith.constant dense<0.000000e+00> : vector<30xf32>
    %371 = vector.multi_reduction <add>, %370, %cst_109 [1] : vector<30x30xf32> to vector<30xf32>
    %372 = vector.shape_cast %371 : vector<30xf32> to vector<30x1xf32>
    %cst_110 = arith.constant 1.000000e+00 : f32
    %373 = vector.broadcast %cst_110 : f32 to vector<30x1xf32>
    %374 = arith.divf %373, %372 : vector<30x1xf32>
    %375 = vector.broadcast %374 : vector<30x1xf32> to vector<30x30xf32>
    %376 = arith.mulf %370, %375 : vector<30x30xf32>
    %377 = arith.addf %359, %376 : vector<30x30xf32>
    %378 = vector.extract_strided_slice %342 {offsets = [0, 0], sizes = [1, 32], strides = [1, 1]} : vector<4x32xf32> to vector<1x32xf32>
    %379 = vector.broadcast %378 : vector<1x32xf32> to vector<30x32xf32>
    %380 = arith.mulf %357, %379 : vector<30x32xf32>
    %381 = arith.truncf %380 : vector<30x32xf32> to vector<30x32xbf16>
    %382 = arith.truncf %376 : vector<30x30xf32> to vector<30x30xbf16>
    %cst_111 = arith.constant dense<0.000000e+00> : vector<30x32xf32>
    %383 = tpu.matmul %382, %381, %cst_111 {dimension_numbers = #tpu.dot_dimension_numbers<[1], [0], [0], [1], [0, 0, 1, 1], [], []>} : vector<30x30xbf16>, vector<30x32xbf16>, vector<30x32xf32> -> vector<30x32xf32>
    %384 = arith.addf %358, %383 : vector<30x32xf32>
    %385 = vector.extract_strided_slice %356 {offsets = [0, 8], sizes = [30, 8], strides = [1, 1]} : vector<30x96xf32> to vector<30x8xf32>
    %386 = vector.extract_strided_slice %356 {offsets = [0, 40], sizes = [30, 8], strides = [1, 1]} : vector<30x96xf32> to vector<30x8xf32>
    %cst_112 = arith.constant dense<0.000000e+00> : vector<30x30xf32>
    %387 = tpu.matmul %385, %386, %cst_112 {dimension_numbers = #tpu.dot_dimension_numbers<[1], [1], [0], [0], [0, 0, 1, 0], [], []>} : vector<30x8xf32>, vector<30x8xf32>, vector<30x30xf32> -> vector<30x30xf32>
    %cst_113 = arith.constant 0.353553385 : f32
    %388 = vector.broadcast %cst_113 : f32 to vector<30x30xf32>
    %389 = arith.mulf %387, %388 : vector<30x30xf32>
    %390 = arith.addf %389, %341 : vector<30x30xf32>
    %cst_114 = arith.constant dense<0xFF800000> : vector<30xf32>
    %391 = vector.multi_reduction <maximumf>, %390, %cst_114 [1] : vector<30x30xf32> to vector<30xf32>
    %392 = vector.shape_cast %391 : vector<30xf32> to vector<30x1xf32>
    %393 = vector.broadcast %392 : vector<30x1xf32> to vector<30x30xf32>
    %394 = arith.subf %390, %393 : vector<30x30xf32>
    %395 = math.exp %394 : vector<30x30xf32>
    %cst_115 = arith.constant dense<0.000000e+00> : vector<30xf32>
    %396 = vector.multi_reduction <add>, %395, %cst_115 [1] : vector<30x30xf32> to vector<30xf32>
    %397 = vector.shape_cast %396 : vector<30xf32> to vector<30x1xf32>
    %cst_116 = arith.constant 1.000000e+00 : f32
    %398 = vector.broadcast %cst_116 : f32 to vector<30x1xf32>
    %399 = arith.divf %398, %397 : vector<30x1xf32>
    %400 = vector.broadcast %399 : vector<30x1xf32> to vector<30x30xf32>
    %401 = arith.mulf %395, %400 : vector<30x30xf32>
    %402 = arith.addf %377, %401 : vector<30x30xf32>
    %403 = vector.extract_strided_slice %342 {offsets = [1, 0], sizes = [1, 32], strides = [1, 1]} : vector<4x32xf32> to vector<1x32xf32>
    %404 = vector.broadcast %403 : vector<1x32xf32> to vector<30x32xf32>
    %405 = arith.mulf %357, %404 : vector<30x32xf32>
    %406 = arith.truncf %405 : vector<30x32xf32> to vector<30x32xbf16>
    %407 = arith.truncf %401 : vector<30x30xf32> to vector<30x30xbf16>
    %cst_117 = arith.constant dense<0.000000e+00> : vector<30x32xf32>
    %408 = tpu.matmul %407, %406, %cst_117 {dimension_numbers = #tpu.dot_dimension_numbers<[1], [0], [0], [1], [0, 0, 1, 1], [], []>} : vector<30x30xbf16>, vector<30x32xbf16>, vector<30x32xf32> -> vector<30x32xf32>
    %409 = arith.addf %384, %408 : vector<30x32xf32>
    %410 = vector.extract_strided_slice %356 {offsets = [0, 16], sizes = [30, 8], strides = [1, 1]} : vector<30x96xf32> to vector<30x8xf32>
    %411 = vector.extract_strided_slice %356 {offsets = [0, 48], sizes = [30, 8], strides = [1, 1]} : vector<30x96xf32> to vector<30x8xf32>
    %cst_118 = arith.constant dense<0.000000e+00> : vector<30x30xf32>
    %412 = tpu.matmul %410, %411, %cst_118 {dimension_numbers = #tpu.dot_dimension_numbers<[1], [1], [0], [0], [0, 0, 1, 0], [], []>} : vector<30x8xf32>, vector<30x8xf32>, vector<30x30xf32> -> vector<30x30xf32>
    %cst_119 = arith.constant 0.353553385 : f32
    %413 = vector.broadcast %cst_119 : f32 to vector<30x30xf32>
    %414 = arith.mulf %412, %413 : vector<30x30xf32>
    %415 = arith.addf %414, %341 : vector<30x30xf32>
    %cst_120 = arith.constant dense<0xFF800000> : vector<30xf32>
    %416 = vector.multi_reduction <maximumf>, %415, %cst_120 [1] : vector<30x30xf32> to vector<30xf32>
    %417 = vector.shape_cast %416 : vector<30xf32> to vector<30x1xf32>
    %418 = vector.broadcast %417 : vector<30x1xf32> to vector<30x30xf32>
    %419 = arith.subf %415, %418 : vector<30x30xf32>
    %420 = math.exp %419 : vector<30x30xf32>
    %cst_121 = arith.constant dense<0.000000e+00> : vector<30xf32>
    %421 = vector.multi_reduction <add>, %420, %cst_121 [1] : vector<30x30xf32> to vector<30xf32>
    %422 = vector.shape_cast %421 : vector<30xf32> to vector<30x1xf32>
    %cst_122 = arith.constant 1.000000e+00 : f32
    %423 = vector.broadcast %cst_122 : f32 to vector<30x1xf32>
    %424 = arith.divf %423, %422 : vector<30x1xf32>
    %425 = vector.broadcast %424 : vector<30x1xf32> to vector<30x30xf32>
    %426 = arith.mulf %420, %425 : vector<30x30xf32>
    %427 = arith.addf %402, %426 : vector<30x30xf32>
    %428 = vector.extract_strided_slice %342 {offsets = [2, 0], sizes = [1, 32], strides = [1, 1]} : vector<4x32xf32> to vector<1x32xf32>
    %429 = vector.broadcast %428 : vector<1x32xf32> to vector<30x32xf32>
    %430 = arith.mulf %357, %429 : vector<30x32xf32>
    %431 = arith.truncf %430 : vector<30x32xf32> to vector<30x32xbf16>
    %432 = arith.truncf %426 : vector<30x30xf32> to vector<30x30xbf16>
    %cst_123 = arith.constant dense<0.000000e+00> : vector<30x32xf32>
    %433 = tpu.matmul %432, %431, %cst_123 {dimension_numbers = #tpu.dot_dimension_numbers<[1], [0], [0], [1], [0, 0, 1, 1], [], []>} : vector<30x30xbf16>, vector<30x32xbf16>, vector<30x32xf32> -> vector<30x32xf32>
    %434 = arith.addf %409, %433 : vector<30x32xf32>
    %435 = vector.extract_strided_slice %356 {offsets = [0, 24], sizes = [30, 8], strides = [1, 1]} : vector<30x96xf32> to vector<30x8xf32>
    %436 = vector.extract_strided_slice %356 {offsets = [0, 56], sizes = [30, 8], strides = [1, 1]} : vector<30x96xf32> to vector<30x8xf32>
    %cst_124 = arith.constant dense<0.000000e+00> : vector<30x30xf32>
    %437 = tpu.matmul %435, %436, %cst_124 {dimension_numbers = #tpu.dot_dimension_numbers<[1], [1], [0], [0], [0, 0, 1, 0], [], []>} : vector<30x8xf32>, vector<30x8xf32>, vector<30x30xf32> -> vector<30x30xf32>
    %cst_125 = arith.constant 0.353553385 : f32
    %438 = vector.broadcast %cst_125 : f32 to vector<30x30xf32>
    %439 = arith.mulf %437, %438 : vector<30x30xf32>
    %440 = arith.addf %439, %341 : vector<30x30xf32>
    %cst_126 = arith.constant dense<0xFF800000> : vector<30xf32>
    %441 = vector.multi_reduction <maximumf>, %440, %cst_126 [1] : vector<30x30xf32> to vector<30xf32>
    %442 = vector.shape_cast %441 : vector<30xf32> to vector<30x1xf32>
    %443 = vector.broadcast %442 : vector<30x1xf32> to vector<30x30xf32>
    %444 = arith.subf %440, %443 : vector<30x30xf32>
    %445 = math.exp %444 : vector<30x30xf32>
    %cst_127 = arith.constant dense<0.000000e+00> : vector<30xf32>
    %446 = vector.multi_reduction <add>, %445, %cst_127 [1] : vector<30x30xf32> to vector<30xf32>
    %447 = vector.shape_cast %446 : vector<30xf32> to vector<30x1xf32>
    %cst_128 = arith.constant 1.000000e+00 : f32
    %448 = vector.broadcast %cst_128 : f32 to vector<30x1xf32>
    %449 = arith.divf %448, %447 : vector<30x1xf32>
    %450 = vector.broadcast %449 : vector<30x1xf32> to vector<30x30xf32>
    %451 = arith.mulf %445, %450 : vector<30x30xf32>
    %452 = arith.addf %427, %451 : vector<30x30xf32>
    %453 = vector.extract_strided_slice %342 {offsets = [3, 0], sizes = [1, 32], strides = [1, 1]} : vector<4x32xf32> to vector<1x32xf32>
    %454 = vector.broadcast %453 : vector<1x32xf32> to vector<30x32xf32>
    %455 = arith.mulf %357, %454 : vector<30x32xf32>
    %456 = arith.truncf %455 : vector<30x32xf32> to vector<30x32xbf16>
    %457 = arith.truncf %451 : vector<30x30xf32> to vector<30x30xbf16>
    %cst_129 = arith.constant dense<0.000000e+00> : vector<30x32xf32>
    %458 = tpu.matmul %457, %456, %cst_129 {dimension_numbers = #tpu.dot_dimension_numbers<[1], [0], [0], [1], [0, 0, 1, 1], [], []>} : vector<30x30xbf16>, vector<30x32xbf16>, vector<30x32xf32> -> vector<30x32xf32>
    %459 = arith.addf %434, %458 : vector<30x32xf32>
    %c544 = arith.constant 544 : index
    %c0_130 = arith.constant 0 : index
    %460 = vector.load %arg3[%c544, %c0_130] : memref<960x128xbf16, #tpu.memory_space<vmem>>, vector<32x32xbf16>
    %461 = arith.truncf %459 : vector<30x32xf32> to vector<30x32xbf16>
    %cst_131 = arith.constant dense<0.000000e+00> : vector<30x32xf32>
    %462 = tpu.matmul %461, %460, %cst_131 {dimension_numbers = #tpu.dot_dimension_numbers<[1], [0], [0], [1], [0, 0, 1, 1], [], []>} : vector<30x32xbf16>, vector<32x32xbf16>, vector<30x32xf32> -> vector<30x32xf32>
    %463 = vector.broadcast %345 : vector<1x32xf32> to vector<30x32xf32>
    %464 = arith.addf %462, %463 : vector<30x32xf32>
    %465 = arith.addf %340, %464 : vector<30x32xf32>
    %cst_132 = arith.constant dense<0.000000e+00> : vector<30xf32>
    %466 = vector.multi_reduction <add>, %465, %cst_132 [1] : vector<30x32xf32> to vector<30xf32>
    %467 = vector.shape_cast %466 : vector<30xf32> to vector<30x1xf32>
    %cst_133 = arith.constant 3.200000e+01 : f32
    %468 = vector.broadcast %cst_133 : f32 to vector<30x1xf32>
    %469 = arith.divf %467, %468 : vector<30x1xf32>
    %470 = vector.broadcast %469 : vector<30x1xf32> to vector<30x32xf32>
    %471 = arith.subf %465, %470 : vector<30x32xf32>
    %472 = vector.broadcast %469 : vector<30x1xf32> to vector<30x32xf32>
    %473 = arith.subf %465, %472 : vector<30x32xf32>
    %474 = arith.mulf %471, %473 : vector<30x32xf32>
    %cst_134 = arith.constant dense<0.000000e+00> : vector<30xf32>
    %475 = vector.multi_reduction <add>, %474, %cst_134 [1] : vector<30x32xf32> to vector<30xf32>
    %476 = vector.shape_cast %475 : vector<30xf32> to vector<30x1xf32>
    %cst_135 = arith.constant 3.200000e+01 : f32
    %477 = vector.broadcast %cst_135 : f32 to vector<30x1xf32>
    %478 = arith.divf %476, %477 : vector<30x1xf32>
    %479 = vector.broadcast %469 : vector<30x1xf32> to vector<30x32xf32>
    %480 = arith.subf %465, %479 : vector<30x32xf32>
    %cst_136 = arith.constant 9.99999974E-6 : f32
    %481 = vector.broadcast %cst_136 : f32 to vector<30x1xf32>
    %482 = arith.addf %478, %481 : vector<30x1xf32>
    %483 = math.rsqrt %482 : vector<30x1xf32>
    %484 = vector.broadcast %483 : vector<30x1xf32> to vector<30x32xf32>
    %485 = arith.mulf %480, %484 : vector<30x32xf32>
    %486 = vector.broadcast %346 : vector<1x32xf32> to vector<30x32xf32>
    %487 = arith.mulf %485, %486 : vector<30x32xf32>
    %488 = vector.broadcast %347 : vector<1x32xf32> to vector<30x32xf32>
    %489 = arith.addf %487, %488 : vector<30x32xf32>
    %c576_137 = arith.constant 576 : index
    %c0_138 = arith.constant 0 : index
    %490 = vector.load %arg3[%c576_137, %c0_138] : memref<960x128xbf16, #tpu.memory_space<vmem>>, vector<32x128xbf16>
    %491 = arith.truncf %489 : vector<30x32xf32> to vector<30x32xbf16>
    %cst_139 = arith.constant dense<0.000000e+00> : vector<30x128xf32>
    %492 = tpu.matmul %491, %490, %cst_139 {dimension_numbers = #tpu.dot_dimension_numbers<[1], [0], [0], [1], [0, 0, 1, 1], [], []>} : vector<30x32xbf16>, vector<32x128xbf16>, vector<30x128xf32> -> vector<30x128xf32>
    %493 = vector.broadcast %348 : vector<1x128xf32> to vector<30x128xf32>
    %494 = arith.addf %492, %493 : vector<30x128xf32>
    %cst_140 = arith.constant 0.000000e+00 : f32
    %495 = vector.broadcast %cst_140 : f32 to vector<30x128xf32>
    %496 = arith.maximumf %494, %495 : vector<30x128xf32>
    %c608 = arith.constant 608 : index
    %c0_141 = arith.constant 0 : index
    %497 = vector.load %arg3[%c608, %c0_141] : memref<960x128xbf16, #tpu.memory_space<vmem>>, vector<128x32xbf16>
    %498 = arith.truncf %496 : vector<30x128xf32> to vector<30x128xbf16>
    %cst_142 = arith.constant dense<0.000000e+00> : vector<30x32xf32>
    %499 = tpu.matmul %498, %497, %cst_142 {dimension_numbers = #tpu.dot_dimension_numbers<[1], [0], [0], [1], [0, 0, 1, 1], [], []>} : vector<30x128xbf16>, vector<128x32xbf16>, vector<30x32xf32> -> vector<30x32xf32>
    %500 = vector.broadcast %349 : vector<1x32xf32> to vector<30x32xf32>
    %501 = arith.addf %499, %500 : vector<30x32xf32>
    %502 = arith.addf %489, %501 : vector<30x32xf32>
    %cst_143 = arith.constant dense<0.000000e+00> : vector<30xf32>
    %503 = vector.multi_reduction <add>, %502, %cst_143 [1] : vector<30x32xf32> to vector<30xf32>
    %504 = vector.shape_cast %503 : vector<30xf32> to vector<30x1xf32>
    %cst_144 = arith.constant 3.200000e+01 : f32
    %505 = vector.broadcast %cst_144 : f32 to vector<30x1xf32>
    %506 = arith.divf %504, %505 : vector<30x1xf32>
    %507 = vector.broadcast %506 : vector<30x1xf32> to vector<30x32xf32>
    %508 = arith.subf %502, %507 : vector<30x32xf32>
    %509 = vector.broadcast %506 : vector<30x1xf32> to vector<30x32xf32>
    %510 = arith.subf %502, %509 : vector<30x32xf32>
    %511 = arith.mulf %508, %510 : vector<30x32xf32>
    %cst_145 = arith.constant dense<0.000000e+00> : vector<30xf32>
    %512 = vector.multi_reduction <add>, %511, %cst_145 [1] : vector<30x32xf32> to vector<30xf32>
    %513 = vector.shape_cast %512 : vector<30xf32> to vector<30x1xf32>
    %cst_146 = arith.constant 3.200000e+01 : f32
    %514 = vector.broadcast %cst_146 : f32 to vector<30x1xf32>
    %515 = arith.divf %513, %514 : vector<30x1xf32>
    %516 = vector.broadcast %506 : vector<30x1xf32> to vector<30x32xf32>
    %517 = arith.subf %502, %516 : vector<30x32xf32>
    %cst_147 = arith.constant 9.99999974E-6 : f32
    %518 = vector.broadcast %cst_147 : f32 to vector<30x1xf32>
    %519 = arith.addf %515, %518 : vector<30x1xf32>
    %520 = math.rsqrt %519 : vector<30x1xf32>
    %521 = vector.broadcast %520 : vector<30x1xf32> to vector<30x32xf32>
    %522 = arith.mulf %517, %521 : vector<30x32xf32>
    %523 = vector.broadcast %350 : vector<1x32xf32> to vector<30x32xf32>
    %524 = arith.mulf %522, %523 : vector<30x32xf32>
    %525 = vector.broadcast %351 : vector<1x32xf32> to vector<30x32xf32>
    %526 = arith.addf %524, %525 : vector<30x32xf32>
    %cst_148 = arith.constant 2.500000e-01 : f32
    %527 = vector.broadcast %cst_148 : f32 to vector<30x30xf32>
    %528 = arith.mulf %452, %527 : vector<30x30xf32>
    %c0_149 = arith.constant 0 : index
    %c0_150 = arith.constant 0 : index
    %c0_151 = arith.constant 0 : index
    %c0_152 = arith.constant 0 : index
    %529 = vector.load %arg5[%c0_149, %c0_150, %c0_151, %c0_152] : memref<1x2x30x30xf32, #tpu.memory_space<vmem>>, vector<1x1x30x30xf32>
    %530 = vector.shape_cast %529 : vector<1x1x30x30xf32> to vector<30x30xf32>
    %531 = vector.shape_cast %528 : vector<30x30xf32> to vector<1x1x30x30xf32>
    tpu.vector_store %arg5[%c0_149, %c0_150, %c0_151, %c0_152], %531 {strides = array<i32>} : memref<1x2x30x30xf32, #tpu.memory_space<vmem>>, vector<1x1x30x30xf32>,
    %c608_153 = arith.constant 608 : index
    %c0_154 = arith.constant 0 : index
    %532 = vector.load %arg2[%c608_153, %c0_154] : memref<616x128xf32, #tpu.memory_space<vmem>>, vector<8x128xf32>
    %533 = vector.extract_strided_slice %532 {offsets = [0, 0], sizes = [1, 96], strides = [1, 1]} : vector<8x128xf32> to vector<1x96xf32>
    %534 = vector.extract_strided_slice %532 {offsets = [1, 0], sizes = [1, 32], strides = [1, 1]} : vector<8x128xf32> to vector<1x32xf32>
    %535 = vector.extract_strided_slice %532 {offsets = [2, 0], sizes = [1, 32], strides = [1, 1]} : vector<8x128xf32> to vector<1x32xf32>
    %536 = vector.extract_strided_slice %532 {offsets = [3, 0], sizes = [1, 32], strides = [1, 1]} : vector<8x128xf32> to vector<1x32xf32>
    %537 = vector.extract_strided_slice %532 {offsets = [4, 0], sizes = [1, 128], strides = [1, 1]} : vector<8x128xf32> to vector<1x128xf32>
    %538 = vector.extract_strided_slice %532 {offsets = [5, 0], sizes = [1, 32], strides = [1, 1]} : vector<8x128xf32> to vector<1x32xf32>
    %539 = vector.extract_strided_slice %532 {offsets = [6, 0], sizes = [1, 32], strides = [1, 1]} : vector<8x128xf32> to vector<1x32xf32>
    %540 = vector.extract_strided_slice %532 {offsets = [7, 0], sizes = [1, 32], strides = [1, 1]} : vector<8x128xf32> to vector<1x32xf32>
    %c736 = arith.constant 736 : index
    %c0_155 = arith.constant 0 : index
    %541 = vector.load %arg3[%c736, %c0_155] : memref<960x128xbf16, #tpu.memory_space<vmem>>, vector<32x96xbf16>
    %542 = arith.truncf %526 : vector<30x32xf32> to vector<30x32xbf16>
    %cst_156 = arith.constant dense<0.000000e+00> : vector<30x96xf32>
    %543 = tpu.matmul %542, %541, %cst_156 {dimension_numbers = #tpu.dot_dimension_numbers<[1], [0], [0], [1], [0, 0, 1, 1], [], []>} : vector<30x32xbf16>, vector<32x96xbf16>, vector<30x96xf32> -> vector<30x96xf32>
    %544 = vector.broadcast %533 : vector<1x96xf32> to vector<30x96xf32>
    %545 = arith.addf %543, %544 : vector<30x96xf32>
    %546 = vector.extract_strided_slice %545 {offsets = [0, 64], sizes = [30, 32], strides = [1, 1]} : vector<30x96xf32> to vector<30x32xf32>
    %cst_157 = arith.constant 0.000000e+00 : f32
    %547 = vector.broadcast %cst_157 : f32 to vector<30x32xf32>
    %cst_158 = arith.constant 0.000000e+00 : f32
    %548 = vector.broadcast %cst_158 : f32 to vector<30x30xf32>
    %549 = vector.extract_strided_slice %545 {offsets = [0, 0], sizes = [30, 8], strides = [1, 1]} : vector<30x96xf32> to vector<30x8xf32>
    %550 = vector.extract_strided_slice %545 {offsets = [0, 32], sizes = [30, 8], strides = [1, 1]} : vector<30x96xf32> to vector<30x8xf32>
    %cst_159 = arith.constant dense<0.000000e+00> : vector<30x30xf32>
    %551 = tpu.matmul %549, %550, %cst_159 {dimension_numbers = #tpu.dot_dimension_numbers<[1], [1], [0], [0], [0, 0, 1, 0], [], []>} : vector<30x8xf32>, vector<30x8xf32>, vector<30x30xf32> -> vector<30x30xf32>
    %cst_160 = arith.constant 0.353553385 : f32
    %552 = vector.broadcast %cst_160 : f32 to vector<30x30xf32>
    %553 = arith.mulf %551, %552 : vector<30x30xf32>
    %554 = arith.addf %553, %341 : vector<30x30xf32>
    %cst_161 = arith.constant dense<0xFF800000> : vector<30xf32>
    %555 = vector.multi_reduction <maximumf>, %554, %cst_161 [1] : vector<30x30xf32> to vector<30xf32>
    %556 = vector.shape_cast %555 : vector<30xf32> to vector<30x1xf32>
    %557 = vector.broadcast %556 : vector<30x1xf32> to vector<30x30xf32>
    %558 = arith.subf %554, %557 : vector<30x30xf32>
    %559 = math.exp %558 : vector<30x30xf32>
    %cst_162 = arith.constant dense<0.000000e+00> : vector<30xf32>
    %560 = vector.multi_reduction <add>, %559, %cst_162 [1] : vector<30x30xf32> to vector<30xf32>
    %561 = vector.shape_cast %560 : vector<30xf32> to vector<30x1xf32>
    %cst_163 = arith.constant 1.000000e+00 : f32
    %562 = vector.broadcast %cst_163 : f32 to vector<30x1xf32>
    %563 = arith.divf %562, %561 : vector<30x1xf32>
    %564 = vector.broadcast %563 : vector<30x1xf32> to vector<30x30xf32>
    %565 = arith.mulf %559, %564 : vector<30x30xf32>
    %566 = arith.addf %548, %565 : vector<30x30xf32>
    %567 = vector.extract_strided_slice %342 {offsets = [0, 0], sizes = [1, 32], strides = [1, 1]} : vector<4x32xf32> to vector<1x32xf32>
    %568 = vector.broadcast %567 : vector<1x32xf32> to vector<30x32xf32>
    %569 = arith.mulf %546, %568 : vector<30x32xf32>
    %570 = arith.truncf %569 : vector<30x32xf32> to vector<30x32xbf16>
    %571 = arith.truncf %565 : vector<30x30xf32> to vector<30x30xbf16>
    %cst_164 = arith.constant dense<0.000000e+00> : vector<30x32xf32>
    %572 = tpu.matmul %571, %570, %cst_164 {dimension_numbers = #tpu.dot_dimension_numbers<[1], [0], [0], [1], [0, 0, 1, 1], [], []>} : vector<30x30xbf16>, vector<30x32xbf16>, vector<30x32xf32> -> vector<30x32xf32>
    %573 = arith.addf %547, %572 : vector<30x32xf32>
    %574 = vector.extract_strided_slice %545 {offsets = [0, 8], sizes = [30, 8], strides = [1, 1]} : vector<30x96xf32> to vector<30x8xf32>
    %575 = vector.extract_strided_slice %545 {offsets = [0, 40], sizes = [30, 8], strides = [1, 1]} : vector<30x96xf32> to vector<30x8xf32>
    %cst_165 = arith.constant dense<0.000000e+00> : vector<30x30xf32>
    %576 = tpu.matmul %574, %575, %cst_165 {dimension_numbers = #tpu.dot_dimension_numbers<[1], [1], [0], [0], [0, 0, 1, 0], [], []>} : vector<30x8xf32>, vector<30x8xf32>, vector<30x30xf32> -> vector<30x30xf32>
    %cst_166 = arith.constant 0.353553385 : f32
    %577 = vector.broadcast %cst_166 : f32 to vector<30x30xf32>
    %578 = arith.mulf %576, %577 : vector<30x30xf32>
    %579 = arith.addf %578, %341 : vector<30x30xf32>
    %cst_167 = arith.constant dense<0xFF800000> : vector<30xf32>
    %580 = vector.multi_reduction <maximumf>, %579, %cst_167 [1] : vector<30x30xf32> to vector<30xf32>
    %581 = vector.shape_cast %580 : vector<30xf32> to vector<30x1xf32>
    %582 = vector.broadcast %581 : vector<30x1xf32> to vector<30x30xf32>
    %583 = arith.subf %579, %582 : vector<30x30xf32>
    %584 = math.exp %583 : vector<30x30xf32>
    %cst_168 = arith.constant dense<0.000000e+00> : vector<30xf32>
    %585 = vector.multi_reduction <add>, %584, %cst_168 [1] : vector<30x30xf32> to vector<30xf32>
    %586 = vector.shape_cast %585 : vector<30xf32> to vector<30x1xf32>
    %cst_169 = arith.constant 1.000000e+00 : f32
    %587 = vector.broadcast %cst_169 : f32 to vector<30x1xf32>
    %588 = arith.divf %587, %586 : vector<30x1xf32>
    %589 = vector.broadcast %588 : vector<30x1xf32> to vector<30x30xf32>
    %590 = arith.mulf %584, %589 : vector<30x30xf32>
    %591 = arith.addf %566, %590 : vector<30x30xf32>
    %592 = vector.extract_strided_slice %342 {offsets = [1, 0], sizes = [1, 32], strides = [1, 1]} : vector<4x32xf32> to vector<1x32xf32>
    %593 = vector.broadcast %592 : vector<1x32xf32> to vector<30x32xf32>
    %594 = arith.mulf %546, %593 : vector<30x32xf32>
    %595 = arith.truncf %594 : vector<30x32xf32> to vector<30x32xbf16>
    %596 = arith.truncf %590 : vector<30x30xf32> to vector<30x30xbf16>
    %cst_170 = arith.constant dense<0.000000e+00> : vector<30x32xf32>
    %597 = tpu.matmul %596, %595, %cst_170 {dimension_numbers = #tpu.dot_dimension_numbers<[1], [0], [0], [1], [0, 0, 1, 1], [], []>} : vector<30x30xbf16>, vector<30x32xbf16>, vector<30x32xf32> -> vector<30x32xf32>
    %598 = arith.addf %573, %597 : vector<30x32xf32>
    %599 = vector.extract_strided_slice %545 {offsets = [0, 16], sizes = [30, 8], strides = [1, 1]} : vector<30x96xf32> to vector<30x8xf32>
    %600 = vector.extract_strided_slice %545 {offsets = [0, 48], sizes = [30, 8], strides = [1, 1]} : vector<30x96xf32> to vector<30x8xf32>
    %cst_171 = arith.constant dense<0.000000e+00> : vector<30x30xf32>
    %601 = tpu.matmul %599, %600, %cst_171 {dimension_numbers = #tpu.dot_dimension_numbers<[1], [1], [0], [0], [0, 0, 1, 0], [], []>} : vector<30x8xf32>, vector<30x8xf32>, vector<30x30xf32> -> vector<30x30xf32>
    %cst_172 = arith.constant 0.353553385 : f32
    %602 = vector.broadcast %cst_172 : f32 to vector<30x30xf32>
    %603 = arith.mulf %601, %602 : vector<30x30xf32>
    %604 = arith.addf %603, %341 : vector<30x30xf32>
    %cst_173 = arith.constant dense<0xFF800000> : vector<30xf32>
    %605 = vector.multi_reduction <maximumf>, %604, %cst_173 [1] : vector<30x30xf32> to vector<30xf32>
    %606 = vector.shape_cast %605 : vector<30xf32> to vector<30x1xf32>
    %607 = vector.broadcast %606 : vector<30x1xf32> to vector<30x30xf32>
    %608 = arith.subf %604, %607 : vector<30x30xf32>
    %609 = math.exp %608 : vector<30x30xf32>
    %cst_174 = arith.constant dense<0.000000e+00> : vector<30xf32>
    %610 = vector.multi_reduction <add>, %609, %cst_174 [1] : vector<30x30xf32> to vector<30xf32>
    %611 = vector.shape_cast %610 : vector<30xf32> to vector<30x1xf32>
    %cst_175 = arith.constant 1.000000e+00 : f32
    %612 = vector.broadcast %cst_175 : f32 to vector<30x1xf32>
    %613 = arith.divf %612, %611 : vector<30x1xf32>
    %614 = vector.broadcast %613 : vector<30x1xf32> to vector<30x30xf32>
    %615 = arith.mulf %609, %614 : vector<30x30xf32>
    %616 = arith.addf %591, %615 : vector<30x30xf32>
    %617 = vector.extract_strided_slice %342 {offsets = [2, 0], sizes = [1, 32], strides = [1, 1]} : vector<4x32xf32> to vector<1x32xf32>
    %618 = vector.broadcast %617 : vector<1x32xf32> to vector<30x32xf32>
    %619 = arith.mulf %546, %618 : vector<30x32xf32>
    %620 = arith.truncf %619 : vector<30x32xf32> to vector<30x32xbf16>
    %621 = arith.truncf %615 : vector<30x30xf32> to vector<30x30xbf16>
    %cst_176 = arith.constant dense<0.000000e+00> : vector<30x32xf32>
    %622 = tpu.matmul %621, %620, %cst_176 {dimension_numbers = #tpu.dot_dimension_numbers<[1], [0], [0], [1], [0, 0, 1, 1], [], []>} : vector<30x30xbf16>, vector<30x32xbf16>, vector<30x32xf32> -> vector<30x32xf32>
    %623 = arith.addf %598, %622 : vector<30x32xf32>
    %624 = vector.extract_strided_slice %545 {offsets = [0, 24], sizes = [30, 8], strides = [1, 1]} : vector<30x96xf32> to vector<30x8xf32>
    %625 = vector.extract_strided_slice %545 {offsets = [0, 56], sizes = [30, 8], strides = [1, 1]} : vector<30x96xf32> to vector<30x8xf32>
    %cst_177 = arith.constant dense<0.000000e+00> : vector<30x30xf32>
    %626 = tpu.matmul %624, %625, %cst_177 {dimension_numbers = #tpu.dot_dimension_numbers<[1], [1], [0], [0], [0, 0, 1, 0], [], []>} : vector<30x8xf32>, vector<30x8xf32>, vector<30x30xf32> -> vector<30x30xf32>
    %cst_178 = arith.constant 0.353553385 : f32
    %627 = vector.broadcast %cst_178 : f32 to vector<30x30xf32>
    %628 = arith.mulf %626, %627 : vector<30x30xf32>
    %629 = arith.addf %628, %341 : vector<30x30xf32>
    %cst_179 = arith.constant dense<0xFF800000> : vector<30xf32>
    %630 = vector.multi_reduction <maximumf>, %629, %cst_179 [1] : vector<30x30xf32> to vector<30xf32>
    %631 = vector.shape_cast %630 : vector<30xf32> to vector<30x1xf32>
    %632 = vector.broadcast %631 : vector<30x1xf32> to vector<30x30xf32>
    %633 = arith.subf %629, %632 : vector<30x30xf32>
    %634 = math.exp %633 : vector<30x30xf32>
    %cst_180 = arith.constant dense<0.000000e+00> : vector<30xf32>
    %635 = vector.multi_reduction <add>, %634, %cst_180 [1] : vector<30x30xf32> to vector<30xf32>
    %636 = vector.shape_cast %635 : vector<30xf32> to vector<30x1xf32>
    %cst_181 = arith.constant 1.000000e+00 : f32
    %637 = vector.broadcast %cst_181 : f32 to vector<30x1xf32>
    %638 = arith.divf %637, %636 : vector<30x1xf32>
    %639 = vector.broadcast %638 : vector<30x1xf32> to vector<30x30xf32>
    %640 = arith.mulf %634, %639 : vector<30x30xf32>
    %641 = arith.addf %616, %640 : vector<30x30xf32>
    %642 = vector.extract_strided_slice %342 {offsets = [3, 0], sizes = [1, 32], strides = [1, 1]} : vector<4x32xf32> to vector<1x32xf32>
    %643 = vector.broadcast %642 : vector<1x32xf32> to vector<30x32xf32>
    %644 = arith.mulf %546, %643 : vector<30x32xf32>
    %645 = arith.truncf %644 : vector<30x32xf32> to vector<30x32xbf16>
    %646 = arith.truncf %640 : vector<30x30xf32> to vector<30x30xbf16>
    %cst_182 = arith.constant dense<0.000000e+00> : vector<30x32xf32>
    %647 = tpu.matmul %646, %645, %cst_182 {dimension_numbers = #tpu.dot_dimension_numbers<[1], [0], [0], [1], [0, 0, 1, 1], [], []>} : vector<30x30xbf16>, vector<30x32xbf16>, vector<30x32xf32> -> vector<30x32xf32>
    %648 = arith.addf %623, %647 : vector<30x32xf32>
    %c768 = arith.constant 768 : index
    %c0_183 = arith.constant 0 : index
    %649 = vector.load %arg3[%c768, %c0_183] : memref<960x128xbf16, #tpu.memory_space<vmem>>, vector<32x32xbf16>
    %650 = arith.truncf %648 : vector<30x32xf32> to vector<30x32xbf16>
    %cst_184 = arith.constant dense<0.000000e+00> : vector<30x32xf32>
    %651 = tpu.matmul %650, %649, %cst_184 {dimension_numbers = #tpu.dot_dimension_numbers<[1], [0], [0], [1], [0, 0, 1, 1], [], []>} : vector<30x32xbf16>, vector<32x32xbf16>, vector<30x32xf32> -> vector<30x32xf32>
    %652 = vector.broadcast %534 : vector<1x32xf32> to vector<30x32xf32>
    %653 = arith.addf %651, %652 : vector<30x32xf32>
    %654 = arith.addf %526, %653 : vector<30x32xf32>
    %cst_185 = arith.constant dense<0.000000e+00> : vector<30xf32>
    %655 = vector.multi_reduction <add>, %654, %cst_185 [1] : vector<30x32xf32> to vector<30xf32>
    %656 = vector.shape_cast %655 : vector<30xf32> to vector<30x1xf32>
    %cst_186 = arith.constant 3.200000e+01 : f32
    %657 = vector.broadcast %cst_186 : f32 to vector<30x1xf32>
    %658 = arith.divf %656, %657 : vector<30x1xf32>
    %659 = vector.broadcast %658 : vector<30x1xf32> to vector<30x32xf32>
    %660 = arith.subf %654, %659 : vector<30x32xf32>
    %661 = vector.broadcast %658 : vector<30x1xf32> to vector<30x32xf32>
    %662 = arith.subf %654, %661 : vector<30x32xf32>
    %663 = arith.mulf %660, %662 : vector<30x32xf32>
    %cst_187 = arith.constant dense<0.000000e+00> : vector<30xf32>
    %664 = vector.multi_reduction <add>, %663, %cst_187 [1] : vector<30x32xf32> to vector<30xf32>
    %665 = vector.shape_cast %664 : vector<30xf32> to vector<30x1xf32>
    %cst_188 = arith.constant 3.200000e+01 : f32
    %666 = vector.broadcast %cst_188 : f32 to vector<30x1xf32>
    %667 = arith.divf %665, %666 : vector<30x1xf32>
    %668 = vector.broadcast %658 : vector<30x1xf32> to vector<30x32xf32>
    %669 = arith.subf %654, %668 : vector<30x32xf32>
    %cst_189 = arith.constant 9.99999974E-6 : f32
    %670 = vector.broadcast %cst_189 : f32 to vector<30x1xf32>
    %671 = arith.addf %667, %670 : vector<30x1xf32>
    %672 = math.rsqrt %671 : vector<30x1xf32>
    %673 = vector.broadcast %672 : vector<30x1xf32> to vector<30x32xf32>
    %674 = arith.mulf %669, %673 : vector<30x32xf32>
    %675 = vector.broadcast %535 : vector<1x32xf32> to vector<30x32xf32>
    %676 = arith.mulf %674, %675 : vector<30x32xf32>
    %677 = vector.broadcast %536 : vector<1x32xf32> to vector<30x32xf32>
    %678 = arith.addf %676, %677 : vector<30x32xf32>
    %c800 = arith.constant 800 : index
    %c0_190 = arith.constant 0 : index
    %679 = vector.load %arg3[%c800, %c0_190] : memref<960x128xbf16, #tpu.memory_space<vmem>>, vector<32x128xbf16>
    %680 = arith.truncf %678 : vector<30x32xf32> to vector<30x32xbf16>
    %cst_191 = arith.constant dense<0.000000e+00> : vector<30x128xf32>
    %681 = tpu.matmul %680, %679, %cst_191 {dimension_numbers = #tpu.dot_dimension_numbers<[1], [0], [0], [1], [0, 0, 1, 1], [], []>} : vector<30x32xbf16>, vector<32x128xbf16>, vector<30x128xf32> -> vector<30x128xf32>
    %682 = vector.broadcast %537 : vector<1x128xf32> to vector<30x128xf32>
    %683 = arith.addf %681, %682 : vector<30x128xf32>
    %cst_192 = arith.constant 0.000000e+00 : f32
    %684 = vector.broadcast %cst_192 : f32 to vector<30x128xf32>
    %685 = arith.maximumf %683, %684 : vector<30x128xf32>
    %c832 = arith.constant 832 : index
    %c0_193 = arith.constant 0 : index
    %686 = vector.load %arg3[%c832, %c0_193] : memref<960x128xbf16, #tpu.memory_space<vmem>>, vector<128x32xbf16>
    %687 = arith.truncf %685 : vector<30x128xf32> to vector<30x128xbf16>
    %cst_194 = arith.constant dense<0.000000e+00> : vector<30x32xf32>
    %688 = tpu.matmul %687, %686, %cst_194 {dimension_numbers = #tpu.dot_dimension_numbers<[1], [0], [0], [1], [0, 0, 1, 1], [], []>} : vector<30x128xbf16>, vector<128x32xbf16>, vector<30x32xf32> -> vector<30x32xf32>
    %689 = vector.broadcast %538 : vector<1x32xf32> to vector<30x32xf32>
    %690 = arith.addf %688, %689 : vector<30x32xf32>
    %691 = arith.addf %678, %690 : vector<30x32xf32>
    %cst_195 = arith.constant dense<0.000000e+00> : vector<30xf32>
    %692 = vector.multi_reduction <add>, %691, %cst_195 [1] : vector<30x32xf32> to vector<30xf32>
    %693 = vector.shape_cast %692 : vector<30xf32> to vector<30x1xf32>
    %cst_196 = arith.constant 3.200000e+01 : f32
    %694 = vector.broadcast %cst_196 : f32 to vector<30x1xf32>
    %695 = arith.divf %693, %694 : vector<30x1xf32>
    %696 = vector.broadcast %695 : vector<30x1xf32> to vector<30x32xf32>
    %697 = arith.subf %691, %696 : vector<30x32xf32>
    %698 = vector.broadcast %695 : vector<30x1xf32> to vector<30x32xf32>
    %699 = arith.subf %691, %698 : vector<30x32xf32>
    %700 = arith.mulf %697, %699 : vector<30x32xf32>
    %cst_197 = arith.constant dense<0.000000e+00> : vector<30xf32>
    %701 = vector.multi_reduction <add>, %700, %cst_197 [1] : vector<30x32xf32> to vector<30xf32>
    %702 = vector.shape_cast %701 : vector<30xf32> to vector<30x1xf32>
    %cst_198 = arith.constant 3.200000e+01 : f32
    %703 = vector.broadcast %cst_198 : f32 to vector<30x1xf32>
    %704 = arith.divf %702, %703 : vector<30x1xf32>
    %705 = vector.broadcast %695 : vector<30x1xf32> to vector<30x32xf32>
    %706 = arith.subf %691, %705 : vector<30x32xf32>
    %cst_199 = arith.constant 9.99999974E-6 : f32
    %707 = vector.broadcast %cst_199 : f32 to vector<30x1xf32>
    %708 = arith.addf %704, %707 : vector<30x1xf32>
    %709 = math.rsqrt %708 : vector<30x1xf32>
    %710 = vector.broadcast %709 : vector<30x1xf32> to vector<30x32xf32>
    %711 = arith.mulf %706, %710 : vector<30x32xf32>
    %712 = vector.broadcast %539 : vector<1x32xf32> to vector<30x32xf32>
    %713 = arith.mulf %711, %712 : vector<30x32xf32>
    %714 = vector.broadcast %540 : vector<1x32xf32> to vector<30x32xf32>
    %715 = arith.addf %713, %714 : vector<30x32xf32>
    %cst_200 = arith.constant 2.500000e-01 : f32
    %716 = vector.broadcast %cst_200 : f32 to vector<30x30xf32>
    %717 = arith.mulf %641, %716 : vector<30x30xf32>
    %c0_201 = arith.constant 0 : index
    %c1 = arith.constant 1 : index
    %c0_202 = arith.constant 0 : index
    %c0_203 = arith.constant 0 : index
    %718 = vector.load %arg5[%c0_201, %c1, %c0_202, %c0_203] : memref<1x2x30x30xf32, #tpu.memory_space<vmem>>, vector<1x1x30x30xf32>
    %719 = vector.shape_cast %718 : vector<1x1x30x30xf32> to vector<30x30xf32>
    %720 = vector.shape_cast %717 : vector<30x30xf32> to vector<1x1x30x30xf32>
    tpu.vector_store %arg5[%c0_201, %c1, %c0_202, %c0_203], %720 {strides = array<i32>} : memref<1x2x30x30xf32, #tpu.memory_space<vmem>>, vector<1x1x30x30xf32>,
    %c0_204 = arith.constant 0 : index
    %c0_205 = arith.constant 0 : index
    %c0_206 = arith.constant 0 : index
    %721 = vector.load %arg4[%c0_204, %c0_205, %c0_206] : memref<1x30x32xf32, #tpu.memory_space<vmem>>, vector<1x30x32xf32>
    %722 = vector.shape_cast %721 : vector<1x30x32xf32> to vector<30x32xf32>
    %723 = vector.shape_cast %715 : vector<30x32xf32> to vector<1x30x32xf32>
    tpu.vector_store %arg4[%c0_204, %c0_205, %c0_206], %723 {strides = array<i32>} : memref<1x30x32xf32, #tpu.memory_space<vmem>>, vector<1x30x32xf32>,
    return
  }
  func.func @transform_0(%arg0: i32) -> (i32, i32, i32) {
    %c0_i32 = arith.constant 0 : i32
    %c0_i32_0 = arith.constant 0 : i32
    %c0_i32_1 = arith.constant 0 : i32
    return %arg0, %c0_i32, %c0_i32_0 : i32, i32, i32
  }
  func.func @transform_1(%arg0: i32) -> (i32, i32) {
    %c0_i32 = arith.constant 0 : i32
    %c0_i32_0 = arith.constant 0 : i32
    %c0_i32_1 = arith.constant 0 : i32
    return %c0_i32, %c0_i32_0 : i32, i32
  }
  func.func @transform_2(%arg0: i32) -> (i32, i32) {
    %c0_i32 = arith.constant 0 : i32
    %c0_i32_0 = arith.constant 0 : i32
    %c0_i32_1 = arith.constant 0 : i32
    return %c0_i32, %c0_i32_0 : i32, i32
  }
  func.func @transform_3(%arg0: i32) -> (i32, i32, i32) {
    %c0_i32 = arith.constant 0 : i32
    %c0_i32_0 = arith.constant 0 : i32
    %c0_i32_1 = arith.constant 0 : i32
    return %arg0, %c0_i32, %c0_i32_0 : i32, i32, i32
  }
  func.func @transform_4(%arg0: i32) -> (i32, i32, i32, i32) {
    %c0_i32 = arith.constant 0 : i32
    %c0_i32_0 = arith.constant 0 : i32
    %c0_i32_1 = arith.constant 0 : i32
    %c0_i32_2 = arith.constant 0 : i32
    return %arg0, %c0_i32, %c0_i32_0, %c0_i32_1 : i32, i32, i32, i32
  }
}

</mosaic_0001>

<llo_original>
// kernel: encoder_forward.1
$region0: #{encoder_forward.1}
  #allocation0 [shape = 'u32[]', space=smem, size = 0x4, offset = 0x4, fixed_abs, tag = 'smem constant byte address 0x4 - core index']
  #allocation1 [shape = 'u32[144,128]{1,0:T(1,128)}', space=vmem, size = 0x12000, scoped, tag = 'internal scratch']
  %s0 = inlined_call_operand.vmem [shape: f32[2,30,180], index: 0, kind: input, shape index: {}]
  %s1 = inlined_call_operand.vmem [shape: f32[616,128], index: 1, kind: input, shape index: {}]
  %s2 = inlined_call_operand.vmem [shape: bf16[960,128], index: 2, kind: input, shape index: {}]
  %s3 = inlined_call_operand.vmem [shape: f32[2,30,32], index: 3, kind: output, shape index: {0}]
  %s4 = inlined_call_operand.vmem [shape: f32[2,2,30,30], index: 4, kind: output, shape index: {1}]
  %5 = xla_tuple %s3, %s4
  %s6 = sld [smem:[#allocation0]]
  $region53: #{encoder_forward.1} parent=0
    _
  %s8 = ssub.s32 1, %s6
  %s9 = scalar_select 0, %s8, %s6
  loop: start=0, step=1, limit=4
  $region2: #{encoder_forward.1} parent=0 // loop_pre_header
    _
  $region3: #{encoder_forward.1} parent=0 // loop_header
    %s11 = sphi 0, %s15
    %p12 = scmp.ge.s32.totalorder %s11, 4
    %s21 = sphi 0, %s23
    %s24 = sphi 0, %s21
    %s25 = sphi 0, %s24
    %s41 = sphi 0, %s25
    %s45 = sphi 0, %s45
    %s47 = sphi 0, %s45
    %s48 = sphi 0, %s47
    %s62 = sphi 0, %s48
    %s66 = sphi 0, %s66
    %s68 = sphi 0, %s66
    %s69 = sphi 0, %s68
    %s83 = sphi 0, %s69
    %s89 = sphi 0, %s91
    %s92 = sphi 0, %s89
    %s93 = sphi 0, %s92
    %s109 = sphi 0, %s93
    %s115 = sphi 0, %s117
    %s118 = sphi 0, %s115
    %s119 = sphi 0, %s118
    %s135 = sphi 0, %s119
  $region4: #{encoder_forward.1} parent=0 // loop_header_branch
    %14 = sbr.rel (%p12) target = $region8
  $region5: #{encoder_forward.1} parent=0 // loop_body
    %s16 = ssub.s32 %s11, 1
    %s17 = ssub.s32 %s11, 2
    %s18 = sadd.s32 %s11, 1
    %s19 = ssub.s32 %s11, %s18
    %p20 = scmp.eq.s32.totalorder %s19, 0
    %s22 = sadd.s32 %s21, 1
    %s23 = scalar_select %p20, %s21, %s22
    %p26 = pneg %p20
    %p27 = scmp.eq.s32.totalorder %s11, 1
    %p28 = por %p26, %p27
    %p29 = scmp.ne.s32.totalorder %s21, %s24
    %p30 = scmp.eq.s32.totalorder %s11, 0
    %p31 = por %p29, %p30
    %p32 = scmp.ne.s32.totalorder %s21, %s24
    %p33 = scmp.eq.s32.totalorder %s16, 1
    %p34 = por %p32, %p33
    %p35 = scmp.ne.s32.totalorder %s24, %s25
    %p36 = scmp.eq.s32.totalorder %s16, 0
    %p37 = por %p35, %p36
    %p38 = scmp.ne.s32.totalorder %s24, %s25
    %p39 = scmp.eq.s32.totalorder %s17, 1
    %p40 = por %p38, %p39
    %p42 = scmp.ne.s32.totalorder %s25, %s41
    %p43 = scmp.eq.s32.totalorder %s17, 0
    %p44 = por %p42, %p43
    %s46 = sadd.s32 %s45, 1
    %p49 = scmp.eq.s32.totalorder %s11, 1
    %p50 = scmp.ne.s32.totalorder %s45, %s47
    %p51 = scmp.eq.s32.totalorder %s11, 0
    %p52 = por %p50, %p51
    %p53 = scmp.ne.s32.totalorder %s45, %s47
    %p54 = scmp.eq.s32.totalorder %s16, 1
    %p55 = por %p53, %p54
    %p56 = scmp.ne.s32.totalorder %s47, %s48
    %p57 = scmp.eq.s32.totalorder %s16, 0
    %p58 = por %p56, %p57
    %p59 = scmp.ne.s32.totalorder %s47, %s48
    %p60 = scmp.eq.s32.totalorder %s17, 1
    %p61 = por %p59, %p60
    %p63 = scmp.ne.s32.totalorder %s48, %s62
    %p64 = scmp.eq.s32.totalorder %s17, 0
    %p65 = por %p63, %p64
    %s67 = sadd.s32 %s66, 1
    %p70 = scmp.eq.s32.totalorder %s11, 1
    %p71 = scmp.ne.s32.totalorder %s66, %s68
    %p72 = scmp.eq.s32.totalorder %s11, 0
    %p73 = por %p71, %p72
    %p74 = scmp.ne.s32.totalorder %s66, %s68
    %p75 = scmp.eq.s32.totalorder %s16, 1
    %p76 = por %p74, %p75
    %p77 = scmp.ne.s32.totalorder %s68, %s69
    %p78 = scmp.eq.s32.totalorder %s16, 0
    %p79 = por %p77, %p78
    %p80 = scmp.ne.s32.totalorder %s68, %s69
    %p81 = scmp.eq.s32.totalorder %s17, 1
    %p82 = por %p80, %p81
    %p84 = scmp.ne.s32.totalorder %s69, %s83
    %p85 = scmp.eq.s32.totalorder %s17, 0
    %p86 = por %p84, %p85
    %s87 = ssub.s32 %s11, %s18
    %p88 = scmp.eq.s32.totalorder %s87, 0
    %s90 = sadd.s32 %s89, 1
    %s91 = scalar_select %p88, %s89, %s90
    %p94 = pneg %p88
    %p95 = scmp.eq.s32.totalorder %s11, 1
    %p96 = por %p94, %p95
    %p97 = scmp.ne.s32.totalorder %s89, %s92
    %p98 = scmp.eq.s32.totalorder %s11, 0
    %p99 = por %p97, %p98
    %p100 = scmp.ne.s32.totalorder %s89, %s92
    %p101 = scmp.eq.s32.totalorder %s16, 1
    %p102 = por %p100, %p101
    %p103 = scmp.ne.s32.totalorder %s92, %s93
    %p104 = scmp.eq.s32.totalorder %s16, 0
    %p105 = por %p103, %p104
    %p106 = scmp.ne.s32.totalorder %s92, %s93
    %p107 = scmp.eq.s32.totalorder %s17, 1
    %p108 = por %p106, %p107
    %p110 = scmp.ne.s32.totalorder %s93, %s109
    %p111 = scmp.eq.s32.totalorder %s17, 0
    %p112 = por %p110, %p111
    %s113 = ssub.s32 %s11, %s18
    %p114 = scmp.eq.s32.totalorder %s113, 0
    %s116 = sadd.s32 %s115, 1
    %s117 = scalar_select %p114, %s115, %s116
    %p120 = pneg %p114
    %p121 = scmp.eq.s32.totalorder %s11, 1
    %p122 = por %p120, %p121
    %p123 = scmp.ne.s32.totalorder %s115, %s118
    %p124 = scmp.eq.s32.totalorder %s11, 0
    %p125 = por %p123, %p124
    %p126 = scmp.ne.s32.totalorder %s115, %s118
    %p127 = scmp.eq.s32.totalorder %s16, 1
    %p128 = por %p126, %p127
    %p129 = scmp.ne.s32.totalorder %s118, %s119
    %p130 = scmp.eq.s32.totalorder %s16, 0
    %p131 = por %p129, %p130
    %p132 = scmp.ne.s32.totalorder %s118, %s119
    %p133 = scmp.eq.s32.totalorder %s17, 1
    %p134 = por %p132, %p133
    %p136 = scmp.ne.s32.totalorder %s119, %s135
    %p137 = scmp.eq.s32.totalorder %s17, 0
    %p138 = por %p136, %p137
    %p139 = scmp.le.s32.totalorder 1, %s11
    %p140 = scmp.lt.s32.totalorder %s11, 3
    %p141 = pnand %p139, %p140
    %p142 = pneg %p141
    // Predicated region
    $region9: #{encoder_forward.1} parent=5 // pred_check
      _
    $region10: #{encoder_forward.1} parent=5 // pred_check_branch
      %144 = sbr.rel (%p141) target = $region12
    $region11: #{encoder_forward.1} parent=5 // pred_region
      %s145 = ssub.s32 %s11, 1
      // Predicated region
      $region13: #{encoder_forward.1} parent=11 // pred_check
        %p146 = pneg %p58
      $region14: #{encoder_forward.1} parent=11 // pred_check_branch
        %148 = sbr.rel (%p146) target = $region16
      $region15: #{encoder_forward.1} parent=11 // pred_region
        _
      $region16: #{encoder_forward.1} parent=11 // pred_fallthru
        _
      // Predicated region
      $region17: #{encoder_forward.1} parent=11 // pred_check
        %p149 = pneg %p79
      $region18: #{encoder_forward.1} parent=11 // pred_check_branch
        %151 = sbr.rel (%p149) target = $region20
      $region19: #{encoder_forward.1} parent=11 // pred_region
        _
      $region20: #{encoder_forward.1} parent=11 // pred_fallthru
        _
    $region12: #{encoder_forward.1} parent=5 // pred_fallthru
      _
    %p152 = scmp.lt.s32.totalorder %s11, 2
    // Predicated region
    $region21: #{encoder_forward.1} parent=5 // pred_check
      %p153 = pneg %p152
    $region22: #{encoder_forward.1} parent=5 // pred_check_branch
      %155 = sbr.rel (%p153) target = $region24
    $region23: #{encoder_forward.1} parent=5 // pred_region
      // Predicated region
      $region25: #{encoder_forward.1} parent=23 // pred_check
        %p156 = pneg %p31
      $region26: #{encoder_forward.1} parent=23 // pred_check_branch
        %158 = sbr.rel (%p156) target = $region28
      $region27: #{encoder_forward.1} parent=23 // pred_region
        %p159 = scmp.lt.s32.totalorder %s11, 1
        %s160 = scalar_select %p159, %s11, 1
        %s161 = smul.addr %s160, 8
        %s162 = smul.addr %s161, 8
        %s163 = scalar_lea.vmem %s0, %s162
      $region28: #{encoder_forward.1} parent=23 // pred_fallthru
        _
    $region24: #{encoder_forward.1} parent=5 // pred_fallthru
      _
    %p164 = scmp.le.s32.totalorder 1, %s11
    %p165 = scmp.lt.s32.totalorder %s11, 3
    %p166 = pnand %p164, %p165
    %p167 = pneg %p166
    // Predicated region
    $region29: #{encoder_forward.1} parent=5 // pred_check
      _
    $region30: #{encoder_forward.1} parent=5 // pred_check_branch
      %169 = sbr.rel (%p166) target = $region32
    $region31: #{encoder_forward.1} parent=5 // pred_region
      %s170 = ssub.s32 %s11, 1
      %p171 = scmp.lt.s32.totalorder %s16, 1
      %s172 = scalar_select %p171, %s16, 1
      %s173 = smul.addr %s172, 8
      %s174 = smul.addr %s173, 8
      %s175 = scalar_lea.vmem %s0, %s174
      %p176 = pneg %p37
      %p177 = pneg %p34
      %p178 = pneg %p58
      %p179 = pneg %p55
      %p180 = pneg %p79
      %p181 = pneg %p76
      %p182 = pneg %p105
      %p183 = pneg %p102
      %p184 = scmp.lt.s32.totalorder %s16, 1
      %s185 = scalar_select %p184, %s16, 1
      %s186 = smul.addr %s185, 4
      %s187 = smul.addr %s186, 8
      %s188 = scalar_lea.vmem %s3, %s187
      %p189 = pneg %p131
      %p190 = pneg %p128
      %p191 = scmp.lt.s32.totalorder %s16, 1
      %s192 = scalar_select %p191, %s16, 1
      %s193 = smul.addr %s192, 8
      %s194 = smul.addr %s193, 8
      %s195 = scalar_lea.vmem %s4, %s194
      %p196 = scmp.lt.s32.totalorder %s16, 1
      %s197 = scalar_select %p196, %s16, 1
      %s198 = smul.addr %s197, 8
      %s199 = smul.addr %s198, 8
      %s200 = scalar_lea.vmem %s0, %s199
      %p201 = scmp.lt.s32.totalorder %s16, 1
      %s202 = scalar_select %p201, %s16, 1
      %s203 = smul.addr %s202, 4
      %s204 = smul.addr %s203, 8
      %s205 = scalar_lea.vmem %s3, %s204
      %p206 = scmp.lt.s32.totalorder %s16, 1
      %s207 = scalar_select %p206, %s16, 1
      %s208 = smul.addr %s207, 8
      %s209 = smul.addr %s208, 8
      %s210 = scalar_lea.vmem %s4, %s209
      %v212 = vld [vmem:[%s200] sm:$0xff]
      %v213 = vld [vmem:[%s200 + $0x8] sm:$0xff]
      %v214 = vld [vmem:[%s200 + $0x10] sm:$0xff]
      %v215 = vld [vmem:[%s200 + $0x18] sm:$0xff]
      %v216 = vld [vmem:[%s200 + $0x20] sm:$0xff]
      %v217 = vld [vmem:[%s200 + $0x28] sm:$0xff]
      %v218 = vld [vmem:[%s200 + $0x30] sm:$0x3f]
      %v219 = vld [vmem:[%s200 + $0x38] sm:$0x3f]
      %v220 = vld [vmem:[%s1 + $0x60] sm:$0xff]
      %v221 = vld [vmem:[%s1 + $0x68] sm:$0xff]
      %v222 = vld [vmem:[%s1 + $0x70] sm:$0xff]
      %v223 = vld [vmem:[%s1 + $0x78] sm:$0x3f]
      %v224 = vld [vmem:[%s1 + $0xa8] sm:$0x7]
      %v225 = vld [vmem:[%s1 + $0xb0] sm:$0xff]
      %v226 = vld [vmem:[%s1 + $0xb8] sm:$0xff]
      %v227 = vld [vmem:[%s1 + $0xc0] sm:$0xff]
      %v228 = vld [vmem:[%s1 + $0xc8] sm:$0xff]
      %v229 = vld [vmem:[%s1 + $0xd0] sm:$0xff]
      %v230 = vld [vmem:[%s1 + $0xd8] sm:$0xff]
      %v231 = vld [vmem:[%s1 + $0xe0] sm:$0xff]
      %v232 = vld [vmem:[%s1 + $0xe8] sm:$0xff]
      %v233 = vld [vmem:[%s1 + $0xf0] sm:$0xff]
      %v234 = vld [vmem:[%s1 + $0xf8] sm:$0xff]
      %v235 = vld [vmem:[%s1 + $0x100] sm:$0xff]
      %v236 = vld [vmem:[%s1 + $0x108] sm:$0xff]
      %v237 = vld [vmem:[%s1 + $0x110] sm:$0xff]
      %v238 = vld [vmem:[%s1 + $0x118] sm:$0xff]
      %v239 = vld [vmem:[%s1 + $0x120] sm:$0xff]
      %v240 = vld [vmem:[%s1 + $0x128] sm:$0xff]
      %v241 = vld [vmem:[%s1 + $0x130] sm:$0xff]
      %v242 = vld [vmem:[%s1 + $0x138] sm:$0xff]
      %v243 = vld [vmem:[%s1 + $0x140] sm:$0xff]
      %v244 = vld [vmem:[%s1 + $0x148] sm:$0xff]
      %v245 = vld [vmem:[%s1 + $0x150] sm:$0xff]
      %v246 = vld [vmem:[%s1 + $0x158] sm:$0xff]
      %v247 = vld [vmem:[%s1 + $0x160] sm:$0xf]
      %v248 = vlaneseq
      %v249 = vshrl.u32 %v248, 7
      %v250 = vsub.s32 0, %v249
      %v251 = vrot.slane %v224, %v250
      %vm252 = vcmask 424960
      %v254 = vsel %vm252, %v213, 0
      %v257 = vsel %vm252, %v215, 0
      %v260 = vsel %vm252, %v217, 0
      %v263 = vsel %vm252, %v219, 0
      %vm265 = vcmask 1043456
      %v267 = vsel %vm265, %v247, 0
      %269 = vmatprep.subr.mxu0 0.0
      %270 = vmatpush1.msra.mxu0 %v225
      %271 = vmatprep.subr.mxu0 0.0
      %272 = vmatpush1.msra.mxu0 %v226
      %273 = vmatprep.subr.mxu0 0.0
      %274 = vmatpush1.msra.mxu0 %v227
      %275 = vmatprep.subr.mxu0 0.0
      %276 = vmatpush1.msra.mxu0 %v228
      %277 = vmatprep.subr.mxu0 0.0
      %278 = vmatpush1.msra.mxu0 %v229
      %279 = vmatprep.subr.mxu0 0.0
      %280 = vmatpush1.msra.mxu0 %v230
      %281 = vmatprep.subr.mxu0 0.0
      %282 = vmatpush1.msra.mxu0 %v231
      %283 = vmatprep.subr.mxu0 0.0
      %284 = vmatpush1.msra.mxu0 %v232
      %285 = vmatprep.subr.mxu0 0.0
      %286 = vmatpush1.msra.mxu0 %v233
      %287 = vmatprep.subr.mxu0 0.0
      %288 = vmatpush1.msra.mxu0 %v234
      %289 = vmatprep.subr.mxu0 0.0
      %290 = vmatpush1.msra.mxu0 %v235
      %291 = vmatprep.subr.mxu0 0.0
      %292 = vmatpush1.msra.mxu0 %v236
      %293 = vmatprep.subr.mxu0 0.0
      %294 = vmatpush1.msra.mxu0 %v237
      %295 = vmatprep.subr.mxu0 0.0
      %296 = vmatpush1.msra.mxu0 %v238
      %297 = vmatprep.subr.mxu0 0.0
      %298 = vmatpush1.msra.mxu0 %v239
      %299 = vmatprep.subr.mxu0 0.0
      %300 = vmatpush1.msra.mxu0 %v240
      %301 = vmatprep.subr.mxu0 0.0
      %302 = vmatpush1.msra.mxu0 %v241
      %303 = vmatprep.subr.mxu0 0.0
      %304 = vmatpush1.msra.mxu0 %v242
      %305 = vmatprep.subr.mxu0 0.0
      %306 = vmatpush1.msra.mxu0 %v243
      %307 = vmatprep.subr.mxu0 0.0
      %308 = vmatpush1.msra.mxu0 %v244
      %309 = vmatprep.subr.mxu0 0.0
      %310 = vmatpush1.msra.mxu0 %v245
      %311 = vmatprep.subr.mxu0 0.0
      %312 = vmatpush1.msra.mxu0 %v246
      %313 = vmatprep.subr.mxu0 0.0
      %314 = vmatpush1.msra.mxu0 %v267
      %315 = vmatprep.subr.mxu0 0.0
      %316 = vmatpush1.msra.mxu0 0.0
      %317 = vmatprep.subr.mxu0 0.0
      %318 = vmatpush1.msra.mxu0 0.0
      %319 = vmatprep.subr.mxu0 0.0
      %320 = vmatpush1.msra.mxu0 0.0
      %321 = vmatprep.subr.mxu0 0.0
      %322 = vmatpush1.msra.mxu0 0.0
      %323 = vmatprep.subr.mxu0 0.0
      %324 = vmatpush1.msra.mxu0 0.0
      %325 = vmatprep.subr.mxu0 0.0
      %326 = vmatpush1.msra.mxu0 0.0
      %327 = vmatprep.subr.mxu0 0.0
      %328 = vmatpush1.msra.mxu0 0.0
      %329 = vmatprep.subr.mxu0 0.0
      %330 = vmatpush1.msra.mxu0 0.0
      %331 = vmatprep.subr.mxu0 0.0
      %332 = vmatpush1.msra.mxu0 0.0
      %333 = vmatprep.mubr.f32.mxu0 %v254
      %334 = vmatmul.mubr.f32.gmra.mrb[0].mxu0 %v212
      %v335 = vpop.f32.mrb[0].mxu0
      %v336 = vadd.f32 %v251, %v335
      %v337 = vpop.f32.mrb[0].mxu0
      %338 = vmatprep.mubr.f32.mxu0 %v257
      %339 = vmatmul.mubr.f32.gmra.mrb[0].mxu0 %v214
      %v340 = vpop.f32.mrb[0].mxu0
      %v341 = vadd.f32 %v251, %v340
      %v342 = vpop.f32.mrb[0].mxu0
      %343 = vmatprep.mubr.f32.mxu0 %v260
      %344 = vmatmul.mubr.f32.gmra.mrb[0].mxu0 %v216
      %v345 = vpop.f32.mrb[0].mxu0
      %v346 = vadd.f32 %v251, %v345
      %v347 = vpop.f32.mrb[0].mxu0
      %348 = vmatprep.mubr.f32.mxu0 %v263
      %349 = vmatmul.mubr.f32.gmra.mrb[0].mxu0 %v218
      %v350 = vpop.f32.mrb[0].mxu0
      %v351 = vadd.f32 %v251, %v350
      %v352 = vpop.f32.mrb[0].mxu0
      %353 = vdwg.mxu0
      %vm354 = vcmask 949248
      %v355 = vsel %vm354, %v336, 0.0
      %356 = vadd.xlane.f32.xlu0 %v355
      %v357 = vpop.xlane.xlu0 %356
      %v358 = vsel %vm354, %v341, 0.0
      %359 = vadd.xlane.f32.xlu0 %v358
      %v360 = vpop.xlane.xlu0 %359
      %v361 = vsel %vm354, %v346, 0.0
      %362 = vadd.xlane.f32.xlu0 %v361
      %v363 = vpop.xlane.xlu0 %362
      %vm364 = vcmask 947200
      %v365 = vsel %vm364, %v351, 0.0
      %366 = vadd.xlane.f32.xlu0 %v365
      %v367 = vpop.xlane.xlu0 %366
      %v368 = vrcp.pop 116.0
      %v369 = vmul.f32 %v357, %v368
      %v370 = vmul.f32 %v360, %v368
      %v371 = vmul.f32 %v363, %v368
      %v372 = vmul.f32 %v367, %v368
      %v373 = vsub.f32 %v336, %v369
      %v374 = vsub.f32 %v341, %v370
      %v375 = vsub.f32 %v346, %v371
      %v376 = vsub.f32 %v351, %v372
      %v377 = vmul.f32 %v373, %v373
      %v378 = vmul.f32 %v374, %v374
      %v379 = vmul.f32 %v375, %v375
      %v380 = vmul.f32 %v376, %v376
      %v381 = vsel %vm354, %v377, 0.0
      %382 = vadd.xlane.f32.xlu0 %v381
      %v383 = vpop.xlane.xlu0 %382
      %v384 = vsel %vm354, %v378, 0.0
      %385 = vadd.xlane.f32.xlu0 %v384
      %v386 = vpop.xlane.xlu0 %385
      %v387 = vsel %vm354, %v379, 0.0
      %388 = vadd.xlane.f32.xlu0 %v387
      %v389 = vpop.xlane.xlu0 %388
      %v390 = vsel %vm364, %v380, 0.0
      %391 = vadd.xlane.f32.xlu0 %v390
      %v392 = vpop.xlane.xlu0 %391
      %v393 = vmul.f32 %v383, %v368
      %v394 = vmul.f32 %v386, %v368
      %v395 = vmul.f32 %v389, %v368
      %v396 = vmul.f32 %v392, %v368
      %v397 = vadd.f32 %v393, 1e-05
      %v398 = vadd.f32 %v394, 1e-05
      %v399 = vadd.f32 %v395, 1e-05
      %v400 = vadd.f32 %v396, 1e-05
      %v401 = vrsqrt.pop %v397
      %v402 = vrsqrt.pop %v398
      %v403 = vrsqrt.pop %v399
      %v404 = vrsqrt.pop %v400
      %v405 = vmul.f32 %v373, %v401
      %v406 = vmul.f32 %v374, %v402
      %v407 = vmul.f32 %v375, %v403
      %v408 = vmul.f32 %v376, %v404
      %v409 = vlaneseq
      %v410 = vshrl.u32 %v409, 7
      %v411 = vsub.s32 1, %v410
      %v412 = vrot.slane %v224, %v411
      %v413 = vmul.f32 %v405, %v412
      %v414 = vmul.f32 %v406, %v412
      %v415 = vmul.f32 %v407, %v412
      %v416 = vmul.f32 %v408, %v412
      %v417 = vlaneseq
      %v418 = vshrl.u32 %v417, 7
      %v419 = vsub.s32 2, %v418
      %v420 = vrot.slane %v224, %v419
      %v421 = vadd.f32 %v413, %v420
      %v422 = vadd.f32 %v414, %v420
      %v423 = vadd.f32 %v415, %v420
      %v424 = vadd.f32 %v416, %v420
      %v425 = vsub.f32 0.0, %v421
      %v426 = vsub.f32 0.0, %v422
      %v427 = vsub.f32 0.0, %v423
      %v428 = vsub.f32 0.0, %v424
      %v429 = vmul.f32 %v425, 1.442695
      %v430 = vpow.pop %v429
      %v431 = vmul.f32 %v426, 1.442695
      %v432 = vpow.pop %v431
      %v433 = vmul.f32 %v427, 1.442695
      %v434 = vpow.pop %v433
      %v435 = vmul.f32 %v428, 1.442695
      %v436 = vpow.pop %v435
      %v437 = vadd.f32 %v430, 1.0
      %v438 = vadd.f32 %v432, 1.0
      %v439 = vadd.f32 %v434, 1.0
      %v440 = vadd.f32 %v436, 1.0
      %v441 = vrcp.pop %v437
      %v442 = vmul.f32 1.0, %v441
      %v443 = vrcp.pop %v438
      %v444 = vmul.f32 1.0, %v443
      %v445 = vrcp.pop %v439
      %v446 = vmul.f32 1.0, %v445
      %v447 = vrcp.pop %v440
      %v448 = vmul.f32 1.0, %v447
      %v449 = vmul.f32 %v421, %v442
      %v450 = vmul.f32 %v422, %v444
      %v451 = vmul.f32 %v423, %v446
      %v452 = vmul.f32 %v424, %v448
      %v453 = vld [vmem:[%s1 + $0x168] sm:$0x7]
      %v454 = vld [vmem:[%s2] sm:$0xf]
      %v455 = vld [vmem:[%s2 + $0x4] sm:$0xf]
      %v456 = vld [vmem:[%s2 + $0x8] sm:$0xf]
      %v457 = vld [vmem:[%s2 + $0xc] sm:$0xf]
      %v458 = vld [vmem:[%s2 + $0x10] sm:$0xf]
      %v459 = vld [vmem:[%s2 + $0x14] sm:$0xf]
      %v460 = vld [vmem:[%s2 + $0x18] sm:$0xf]
      %v461 = vld [vmem:[%s2 + $0x1c] sm:$0xf]
      %v462 = vld [vmem:[%s2 + $0x20] sm:$0xf]
      %v463 = vld [vmem:[%s2 + $0x24] sm:$0xf]
      %v464 = vld [vmem:[%s2 + $0x28] sm:$0xf]
      %v465 = vld [vmem:[%s2 + $0x2c] sm:$0xf]
      %v466 = vld [vmem:[%s2 + $0x30] sm:$0xf]
      %v467 = vld [vmem:[%s2 + $0x34] sm:$0xf]
      %v468 = vld [vmem:[%s2 + $0x38] sm:$0x3]
      %v469 = vpack.c.bf16 %v450, %v449
      %v470 = vpack.c.bf16 %v452, %v451
      %v471 = vlaneseq
      %v472 = vshrl.u32 %v471, 7
      %v473 = vsub.s32 0, %v472
      %v474 = vrot.slane %v453, %v473
      %v490 = vunpack.c.l.b16 %v454
      %v491 = vunpack.c.l.b16 %v455
      %v492 = vunpack.c.l.b16 %v456
      %v493 = vunpack.c.l.b16 %v457
      %v494 = vunpack.c.l.b16 %v458
      %v495 = vunpack.c.l.b16 %v459
      %v496 = vunpack.c.l.b16 %v460
      %v497 = vunpack.c.l.b16 %v461
      %v498 = vunpack.c.l.b16 %v462
      %v499 = vunpack.c.l.b16 %v463
      %v500 = vunpack.c.l.b16 %v464
      %v501 = vunpack.c.l.b16 %v465
      %v502 = vunpack.c.l.b16 %v466
      %v503 = vunpack.c.l.b16 %v467
      %v504 = vunpack.c.l.b16 %v468
      %v505 = vpack.c.b16 %v491, %v490
      %v506 = vpack.c.b16 %v493, %v492
      %v507 = vpack.c.b16 %v495, %v494
      %v508 = vpack.c.b16 %v497, %v496
      %v509 = vpack.c.b16 %v499, %v498
      %v510 = vpack.c.b16 %v501, %v500
      %v511 = vpack.c.b16 %v503, %v502
      %v512 = vpack.c.b16 %v504, %v504
      %v521 = vsel %vm354, %v469, 0
      %v524 = vsel %vm354, %v470, 0
      %vm526 = vcmask 1041408
      %v528 = vsel %vm526, %v512, 0
      %530 = vmatprep.subr.bf16.mxu0 0
      %531 = vmatpush1.bf16.msra.mxu0 %v505
      %532 = vmatprep.subr.bf16.mxu0 0
      %533 = vmatpush1.bf16.msra.mxu0 %v506
      %534 = vmatprep.subr.bf16.mxu0 0
      %535 = vmatpush1.bf16.msra.mxu0 %v507
      %536 = vmatprep.subr.bf16.mxu0 0
      %537 = vmatpush1.bf16.msra.mxu0 %v508
      %538 = vmatprep.subr.bf16.mxu0 0
      %539 = vmatpush1.bf16.msra.mxu0 %v509
      %540 = vmatprep.subr.bf16.mxu0 0
      %541 = vmatpush1.bf16.msra.mxu0 %v510
      %542 = vmatprep.subr.bf16.mxu0 0
      %543 = vmatpush1.bf16.msra.mxu0 %v511
      %544 = vmatprep.subr.bf16.mxu0 0
      %545 = vmatpush1.bf16.msra.mxu0 %v528
      %546 = vmatprep.subr.bf16.mxu0 0
      %547 = vmatpush1.bf16.msra.mxu0 0
      %548 = vmatprep.subr.bf16.mxu0 0
      %549 = vmatpush1.bf16.msra.mxu0 0
      %550 = vmatprep.subr.bf16.mxu0 0
      %551 = vmatpush1.bf16.msra.mxu0 0
      %552 = vmatprep.subr.bf16.mxu0 0
      %553 = vmatpush1.bf16.msra.mxu0 0
      %554 = vmatprep.subr.bf16.mxu0 0
      %555 = vmatpush1.bf16.msra.mxu0 0
      %556 = vmatprep.subr.bf16.mxu0 0
      %557 = vmatpush1.bf16.msra.mxu0 0
      %558 = vmatprep.subr.bf16.mxu0 0
      %559 = vmatpush1.bf16.msra.mxu0 0
      %560 = vmatprep.subr.bf16.mxu0 0
      %561 = vmatpush1.bf16.msra.mxu0 0
      %562 = vmatprep.mubr.bf16.mxu0 0
      %563 = vmatmul.mubr.bf16.gmra.mrb[0].mxu0 %v521
      %v564 = vpop.f32.mrb[0].mxu0
      %v565 = vadd.f32 %v474, %v564
      %v566 = vpop.f32.mrb[0].mxu0
      %v567 = vpop.f32.mrb[0].mxu0
      %v568 = vadd.f32 %v474, %v567
      %v569 = vpop.f32.mrb[0].mxu0
      %570 = vmatprep.mubr.bf16.mxu0 0
      %571 = vmatmul.mubr.bf16.gmra.mrb[0].mxu0 %v524
      %v572 = vpop.f32.mrb[0].mxu0
      %v573 = vadd.f32 %v474, %v572
      %v574 = vpop.f32.mrb[0].mxu0
      %v575 = vpop.f32.mrb[0].mxu0
      %v576 = vadd.f32 %v474, %v575
      %v577 = vpop.f32.mrb[0].mxu0
      %578 = vdwg.mxu0
      %vm579 = vcmask 588800
      %v580 = vsel %vm579, %v565, 0.0
      %581 = vadd.xlane.f32.xlu0 %v580
      %v582 = vpop.xlane.xlu0 %581
      %v583 = vsel %vm579, %v568, 0.0
      %584 = vadd.xlane.f32.xlu0 %v583
      %v585 = vpop.xlane.xlu0 %584
      %v586 = vsel %vm579, %v573, 0.0
      %587 = vadd.xlane.f32.xlu0 %v586
      %v588 = vpop.xlane.xlu0 %587
      %vm589 = vcmask 586752
      %v590 = vsel %vm589, %v576, 0.0
      %591 = vadd.xlane.f32.xlu0 %v590
      %v592 = vpop.xlane.xlu0 %591
      %v593 = vrcp.pop 72.0
      %v594 = vmul.f32 %v582, %v593
      %v595 = vmul.f32 %v585, %v593
      %v596 = vmul.f32 %v588, %v593
      %v597 = vmul.f32 %v592, %v593
      %v598 = vsub.f32 %v565, %v594
      %v599 = vsub.f32 %v568, %v595
      %v600 = vsub.f32 %v573, %v596
      %v601 = vsub.f32 %v576, %v597
      %v602 = vmul.f32 %v598, %v598
      %v603 = vmul.f32 %v599, %v599
      %v604 = vmul.f32 %v600, %v600
      %v605 = vmul.f32 %v601, %v601
      %v606 = vsel %vm579, %v602, 0.0
      %607 = vadd.xlane.f32.xlu0 %v606
      %v608 = vpop.xlane.xlu0 %607
      %v609 = vsel %vm579, %v603, 0.0
      %610 = vadd.xlane.f32.xlu0 %v609
      %v611 = vpop.xlane.xlu0 %610
      %v612 = vsel %vm579, %v604, 0.0
      %613 = vadd.xlane.f32.xlu0 %v612
      %v614 = vpop.xlane.xlu0 %613
      %v615 = vsel %vm589, %v605, 0.0
      %616 = vadd.xlane.f32.xlu0 %v615
      %v617 = vpop.xlane.xlu0 %616
      %v618 = vmul.f32 %v608, %v593
      %v619 = vmul.f32 %v611, %v593
      %v620 = vmul.f32 %v614, %v593
      %v621 = vmul.f32 %v617, %v593
      %v622 = vadd.f32 %v618, 1e-05
      %v623 = vadd.f32 %v619, 1e-05
      %v624 = vadd.f32 %v620, 1e-05
      %v625 = vadd.f32 %v621, 1e-05
      %v626 = vrsqrt.pop %v622
      %v627 = vrsqrt.pop %v623
      %v628 = vrsqrt.pop %v624
      %v629 = vrsqrt.pop %v625
      %v630 = vmul.f32 %v598, %v626
      %v631 = vmul.f32 %v599, %v627
      %v632 = vmul.f32 %v600, %v628
      %v633 = vmul.f32 %v601, %v629
      %v634 = vlaneseq
      %v635 = vshrl.u32 %v634, 7
      %v636 = vsub.s32 1, %v635
      %v637 = vrot.slane %v453, %v636
      %v638 = vmul.f32 %v630, %v637
      %v639 = vmul.f32 %v631, %v637
      %v640 = vmul.f32 %v632, %v637
      %v641 = vmul.f32 %v633, %v637
      %v642 = vlaneseq
      %v643 = vshrl.u32 %v642, 7
      %v644 = vsub.s32 2, %v643
      %v645 = vrot.slane %v453, %v644
      %v646 = vadd.f32 %v638, %v645
      %v647 = vadd.f32 %v639, %v645
      %v648 = vadd.f32 %v640, %v645
      %v649 = vadd.f32 %v641, %v645
      %v650 = vsub.f32 0.0, %v646
      %v651 = vsub.f32 0.0, %v647
      %v652 = vsub.f32 0.0, %v648
      %v653 = vsub.f32 0.0, %v649
      %v654 = vmul.f32 %v650, 1.442695
      %v655 = vpow.pop %v654
      %v656 = vmul.f32 %v651, 1.442695
      %v657 = vpow.pop %v656
      %v658 = vmul.f32 %v652, 1.442695
      %v659 = vpow.pop %v658
      %v660 = vmul.f32 %v653, 1.442695
      %v661 = vpow.pop %v660
      %v662 = vadd.f32 %v655, 1.0
      %v663 = vadd.f32 %v657, 1.0
      %v664 = vadd.f32 %v659, 1.0
      %v665 = vadd.f32 %v661, 1.0
      %v666 = vrcp.pop %v662
      %v667 = vmul.f32 1.0, %v666
      %v668 = vrcp.pop %v663
      %v669 = vmul.f32 1.0, %v668
      %v670 = vrcp.pop %v664
      %v671 = vmul.f32 1.0, %v670
      %v672 = vrcp.pop %v665
      %v673 = vmul.f32 1.0, %v672
      %v674 = vmul.f32 %v646, %v667
      %v675 = vmul.f32 %v647, %v669
      %v676 = vmul.f32 %v648, %v671
      %v677 = vmul.f32 %v649, %v673
      %v678 = vld [vmem:[%s1 + $0x170] sm:$0x7]
      %v679 = vld [vmem:[%s2 + $0x40] sm:$0xf]
      %v680 = vld [vmem:[%s2 + $0x44] sm:$0xf]
      %v681 = vld [vmem:[%s2 + $0x48] sm:$0xf]
      %v682 = vld [vmem:[%s2 + $0x4c] sm:$0xf]
      %v683 = vld [vmem:[%s2 + $0x50] sm:$0xf]
      %v684 = vld [vmem:[%s2 + $0x54] sm:$0xf]
      %v685 = vld [vmem:[%s2 + $0x58] sm:$0xf]
      %v686 = vld [vmem:[%s2 + $0x5c] sm:$0xf]
      %v687 = vld [vmem:[%s2 + $0x60] sm:$0xf]
      %v688 = vpack.c.bf16 %v675, %v674
      %v689 = vpack.c.bf16 %v677, %v676
      %v690 = vlaneseq
      %v691 = vshrl.u32 %v690, 7
      %v692 = vsub.s32 0, %v691
      %v693 = vrot.slane %v678, %v692
      %v703 = vunpack.c.l.b16 %v679
      %v704 = vunpack.c.l.b16 %v680
      %v705 = vunpack.c.l.b16 %v681
      %v706 = vunpack.c.l.b16 %v682
      %v707 = vunpack.c.l.b16 %v683
      %v708 = vunpack.c.l.b16 %v684
      %v709 = vunpack.c.l.b16 %v685
      %v710 = vunpack.c.l.b16 %v686
      %v711 = vunpack.c.l.b16 %v687
      %v712 = vpack.c.b16 %v704, %v703
      %v713 = vpack.c.b16 %v706, %v705
      %v714 = vpack.c.b16 %v708, %v707
      %v715 = vpack.c.b16 %v710, %v709
      %v716 = vpack.c.b16 %v711, %v711
      %v722 = vsel %vm579, %v688, 0
      %v725 = vsel %vm579, %v689, 0
      %v728 = vsel %vm265, %v716, 0
      %730 = vmatprep.subr.bf16.mxu0 0
      %731 = vmatpush1.bf16.msra.mxu0 %v712
      %732 = vmatprep.subr.bf16.mxu0 0
      %733 = vmatpush1.bf16.msra.mxu0 %v713
      %734 = vmatprep.subr.bf16.mxu0 0
      %735 = vmatpush1.bf16.msra.mxu0 %v714
      %736 = vmatprep.subr.bf16.mxu0 0
      %737 = vmatpush1.bf16.msra.mxu0 %v715
      %738 = vmatprep.subr.bf16.mxu0 0
      %739 = vmatpush1.bf16.msra.mxu0 %v728
      %740 = vmatprep.subr.bf16.mxu0 0
      %741 = vmatpush1.bf16.msra.mxu0 0
      %742 = vmatprep.subr.bf16.mxu0 0
      %743 = vmatpush1.bf16.msra.mxu0 0
      %744 = vmatprep.subr.bf16.mxu0 0
      %745 = vmatpush1.bf16.msra.mxu0 0
      %746 = vmatprep.subr.bf16.mxu0 0
      %747 = vmatpush1.bf16.msra.mxu0 0
      %748 = vmatprep.subr.bf16.mxu0 0
      %749 = vmatpush1.bf16.msra.mxu0 0
      %750 = vmatprep.subr.bf16.mxu0 0
      %751 = vmatpush1.bf16.msra.mxu0 0
      %752 = vmatprep.subr.bf16.mxu0 0
      %753 = vmatpush1.bf16.msra.mxu0 0
      %754 = vmatprep.subr.bf16.mxu0 0
      %755 = vmatpush1.bf16.msra.mxu0 0
      %756 = vmatprep.subr.bf16.mxu0 0
      %757 = vmatpush1.bf16.msra.mxu0 0
      %758 = vmatprep.subr.bf16.mxu0 0
      %759 = vmatpush1.bf16.msra.mxu0 0
      %760 = vmatprep.subr.bf16.mxu0 0
      %761 = vmatpush1.bf16.msra.mxu0 0
      %762 = vmatprep.mubr.bf16.mxu0 0
      %763 = vmatmul.mubr.bf16.gmra.mrb[0].mxu0 %v722
      %v764 = vpop.f32.mrb[0].mxu0
      %v765 = vadd.f32 %v693, %v764
      %v766 = vpop.f32.mrb[0].mxu0
      %v767 = vpop.f32.mrb[0].mxu0
      %v768 = vadd.f32 %v693, %v767
      %v769 = vpop.f32.mrb[0].mxu0
      %770 = vmatprep.mubr.bf16.mxu0 0
      %771 = vmatmul.mubr.bf16.gmra.mrb[0].mxu0 %v725
      %v772 = vpop.f32.mrb[0].mxu0
      %v773 = vadd.f32 %v693, %v772
      %v774 = vpop.f32.mrb[0].mxu0
      %v775 = vpop.f32.mrb[0].mxu0
      %v776 = vadd.f32 %v693, %v775
      %v777 = vpop.f32.mrb[0].mxu0
      %778 = vdwg.mxu0
      %vm779 = vcmask 392192
      %v780 = vsel %vm779, %v765, 0.0
      %781 = vadd.xlane.f32.xlu0 %v780
      %v782 = vpop.xlane.xlu0 %781
      %v783 = vsel %vm779, %v768, 0.0
      %784 = vadd.xlane.f32.xlu0 %v783
      %v785 = vpop.xlane.xlu0 %784
      %v786 = vsel %vm779, %v773, 0.0
      %787 = vadd.xlane.f32.xlu0 %v786
      %v788 = vpop.xlane.xlu0 %787
      %vm789 = vcmask 390144
      %v790 = vsel %vm789, %v776, 0.0
      %791 = vadd.xlane.f32.xlu0 %v790
      %v792 = vpop.xlane.xlu0 %791
      %v793 = vrcp.pop 48.0
      %v794 = vmul.f32 %v782, %v793
      %v795 = vmul.f32 %v785, %v793
      %v796 = vmul.f32 %v788, %v793
      %v797 = vmul.f32 %v792, %v793
      %v798 = vsub.f32 %v765, %v794
      %v799 = vsub.f32 %v768, %v795
      %v800 = vsub.f32 %v773, %v796
      %v801 = vsub.f32 %v776, %v797
      %v802 = vmul.f32 %v798, %v798
      %v803 = vmul.f32 %v799, %v799
      %v804 = vmul.f32 %v800, %v800
      %v805 = vmul.f32 %v801, %v801
      %v806 = vsel %vm779, %v802, 0.0
      %807 = vadd.xlane.f32.xlu0 %v806
      %v808 = vpop.xlane.xlu0 %807
      %v809 = vsel %vm779, %v803, 0.0
      %810 = vadd.xlane.f32.xlu0 %v809
      %v811 = vpop.xlane.xlu0 %810
      %v812 = vsel %vm779, %v804, 0.0
      %813 = vadd.xlane.f32.xlu0 %v812
      %v814 = vpop.xlane.xlu0 %813
      %v815 = vsel %vm789, %v805, 0.0
      %816 = vadd.xlane.f32.xlu0 %v815
      %v817 = vpop.xlane.xlu0 %816
      %v818 = vmul.f32 %v808, %v793
      %v819 = vmul.f32 %v811, %v793
      %v820 = vmul.f32 %v814, %v793
      %v821 = vmul.f32 %v817, %v793
      %v822 = vadd.f32 %v818, 1e-05
      %v823 = vadd.f32 %v819, 1e-05
      %v824 = vadd.f32 %v820, 1e-05
      %v825 = vadd.f32 %v821, 1e-05
      %v826 = vrsqrt.pop %v822
      %v827 = vrsqrt.pop %v823
      %v828 = vrsqrt.pop %v824
      %v829 = vrsqrt.pop %v825
      %v830 = vmul.f32 %v798, %v826
      %v831 = vmul.f32 %v799, %v827
      %v832 = vmul.f32 %v800, %v828
      %v833 = vmul.f32 %v801, %v829
      %v834 = vlaneseq
      %v835 = vshrl.u32 %v834, 7
      %v836 = vsub.s32 1, %v835
      %v837 = vrot.slane %v678, %v836
      %v838 = vmul.f32 %v830, %v837
      %v839 = vmul.f32 %v831, %v837
      %v840 = vmul.f32 %v832, %v837
      %v841 = vmul.f32 %v833, %v837
      %v842 = vlaneseq
      %v843 = vshrl.u32 %v842, 7
      %v844 = vsub.s32 2, %v843
      %v845 = vrot.slane %v678, %v844
      %v846 = vadd.f32 %v838, %v845
      %v847 = vadd.f32 %v839, %v845
      %v848 = vadd.f32 %v840, %v845
      %v849 = vadd.f32 %v841, %v845
      %v850 = vsub.f32 0.0, %v846
      %v851 = vsub.f32 0.0, %v847
      %v852 = vsub.f32 0.0, %v848
      %v853 = vsub.f32 0.0, %v849
      %v854 = vmul.f32 %v850, 1.442695
      %v855 = vpow.pop %v854
      %v856 = vmul.f32 %v851, 1.442695
      %v857 = vpow.pop %v856
      %v858 = vmul.f32 %v852, 1.442695
      %v859 = vpow.pop %v858
      %v860 = vmul.f32 %v853, 1.442695
      %v861 = vpow.pop %v860
      %v862 = vadd.f32 %v855, 1.0
      %v863 = vadd.f32 %v857, 1.0
      %v864 = vadd.f32 %v859, 1.0
      %v865 = vadd.f32 %v861, 1.0
      %v866 = vrcp.pop %v862
      %v867 = vmul.f32 1.0, %v866
      %v868 = vrcp.pop %v863
      %v869 = vmul.f32 1.0, %v868
      %v870 = vrcp.pop %v864
      %v871 = vmul.f32 1.0, %v870
      %v872 = vrcp.pop %v865
      %v873 = vmul.f32 1.0, %v872
      %v874 = vmul.f32 %v846, %v867
      %v875 = vmul.f32 %v847, %v869
      %v876 = vmul.f32 %v848, %v871
      %v877 = vmul.f32 %v849, %v873
      %v878 = vld [vmem:[%s1 + $0x178] sm:$0x7]
      %v879 = vld [vmem:[%s2 + $0x68] sm:$0xf]
      %v880 = vld [vmem:[%s2 + $0x6c] sm:$0xf]
      %v881 = vld [vmem:[%s2 + $0x70] sm:$0xf]
      %v882 = vld [vmem:[%s2 + $0x74] sm:$0xf]
      %v883 = vld [vmem:[%s2 + $0x78] sm:$0xf]
      %v884 = vld [vmem:[%s2 + $0x7c] sm:$0xf]
      %v885 = vpack.c.bf16 %v875, %v874
      %v886 = vpack.c.bf16 %v877, %v876
      %v887 = vlaneseq
      %v888 = vshrl.u32 %v887, 7
      %v889 = vsub.s32 0, %v888
      %v890 = vrot.slane %v878, %v889
      %v897 = vunpack.c.l.b16 %v879
      %v898 = vunpack.c.l.b16 %v880
      %v899 = vunpack.c.l.b16 %v881
      %v900 = vunpack.c.l.b16 %v882
      %v901 = vunpack.c.l.b16 %v883
      %v902 = vunpack.c.l.b16 %v884
      %v903 = vpack.c.b16 %v898, %v897
      %v904 = vpack.c.b16 %v900, %v899
      %v905 = vpack.c.b16 %v902, %v901
      %v910 = vsel %vm779, %v885, 0
      %v913 = vsel %vm779, %v886, 0
      %915 = vmatprep.subr.bf16.mxu0 0
      %916 = vmatpush1.bf16.msra.mxu0 %v903
      %917 = vmatprep.subr.bf16.mxu0 0
      %918 = vmatpush1.bf16.msra.mxu0 %v904
      %919 = vmatprep.subr.bf16.mxu0 0
      %920 = vmatpush1.bf16.msra.mxu0 %v905
      %921 = vmatprep.subr.bf16.mxu0 0
      %922 = vmatpush1.bf16.msra.mxu0 0
      %923 = vmatprep.subr.bf16.mxu0 0
      %924 = vmatpush1.bf16.msra.mxu0 0
      %925 = vmatprep.subr.bf16.mxu0 0
      %926 = vmatpush1.bf16.msra.mxu0 0
      %927 = vmatprep.subr.bf16.mxu0 0
      %928 = vmatpush1.bf16.msra.mxu0 0
      %929 = vmatprep.subr.bf16.mxu0 0
      %930 = vmatpush1.bf16.msra.mxu0 0
      %931 = vmatprep.subr.bf16.mxu0 0
      %932 = vmatpush1.bf16.msra.mxu0 0
      %933 = vmatprep.subr.bf16.mxu0 0
      %934 = vmatpush1.bf16.msra.mxu0 0
      %935 = vmatprep.subr.bf16.mxu0 0
      %936 = vmatpush1.bf16.msra.mxu0 0
      %937 = vmatprep.subr.bf16.mxu0 0
      %938 = vmatpush1.bf16.msra.mxu0 0
      %939 = vmatprep.subr.bf16.mxu0 0
      %940 = vmatpush1.bf16.msra.mxu0 0
      %941 = vmatprep.subr.bf16.mxu0 0
      %942 = vmatpush1.bf16.msra.mxu0 0
      %943 = vmatprep.subr.bf16.mxu0 0
      %944 = vmatpush1.bf16.msra.mxu0 0
      %945 = vmatprep.subr.bf16.mxu0 0
      %946 = vmatpush1.bf16.msra.mxu0 0
      %947 = vmatprep.mubr.bf16.mxu0 0
      %948 = vmatmul.mubr.bf16.gmra.mrb[0].mxu0 %v910
      %v949 = vpop.f32.mrb[0].mxu0
      %v950 = vadd.f32 %v890, %v949
      %v951 = vpop.f32.mrb[0].mxu0
      %v952 = vpop.f32.mrb[0].mxu0
      %v953 = vadd.f32 %v890, %v952
      %v954 = vpop.f32.mrb[0].mxu0
      %955 = vmatprep.mubr.bf16.mxu0 0
      %956 = vmatmul.mubr.bf16.gmra.mrb[0].mxu0 %v913
      %v957 = vpop.f32.mrb[0].mxu0
      %v958 = vadd.f32 %v890, %v957
      %v959 = vpop.f32.mrb[0].mxu0
      %v960 = vpop.f32.mrb[0].mxu0
      %v961 = vadd.f32 %v890, %v960
      %v962 = vpop.f32.mrb[0].mxu0
      %963 = vdwg.mxu0
      %vm964 = vcmask 261120
      %v965 = vsel %vm964, %v950, 0.0
      %966 = vadd.xlane.f32.xlu0 %v965
      %v967 = vpop.xlane.xlu0 %966
      %v968 = vsel %vm964, %v953, 0.0
      %969 = vadd.xlane.f32.xlu0 %v968
      %v970 = vpop.xlane.xlu0 %969
      %v971 = vsel %vm964, %v958, 0.0
      %972 = vadd.xlane.f32.xlu0 %v971
      %v973 = vpop.xlane.xlu0 %972
      %vm974 = vcmask 259072
      %v975 = vsel %vm974, %v961, 0.0
      %976 = vadd.xlane.f32.xlu0 %v975
      %v977 = vpop.xlane.xlu0 %976
      %v978 = vrcp.pop 32.0
      %v979 = vmul.f32 %v967, %v978
      %v980 = vmul.f32 %v970, %v978
      %v981 = vmul.f32 %v973, %v978
      %v982 = vmul.f32 %v977, %v978
      %v983 = vsub.f32 %v950, %v979
      %v984 = vsub.f32 %v953, %v980
      %v985 = vsub.f32 %v958, %v981
      %v986 = vsub.f32 %v961, %v982
      %v987 = vmul.f32 %v983, %v983
      %v988 = vmul.f32 %v984, %v984
      %v989 = vmul.f32 %v985, %v985
      %v990 = vmul.f32 %v986, %v986
      %v991 = vsel %vm964, %v987, 0.0
      %992 = vadd.xlane.f32.xlu0 %v991
      %v993 = vpop.xlane.xlu0 %992
      %v994 = vsel %vm964, %v988, 0.0
      %995 = vadd.xlane.f32.xlu0 %v994
      %v996 = vpop.xlane.xlu0 %995
      %v997 = vsel %vm964, %v989, 0.0
      %998 = vadd.xlane.f32.xlu0 %v997
      %v999 = vpop.xlane.xlu0 %998
      %v1000 = vsel %vm974, %v990, 0.0
      %1001 = vadd.xlane.f32.xlu0 %v1000
      %v1002 = vpop.xlane.xlu0 %1001
      %v1003 = vmul.f32 %v993, %v978
      %v1004 = vmul.f32 %v996, %v978
      %v1005 = vmul.f32 %v999, %v978
      %v1006 = vmul.f32 %v1002, %v978
      %v1007 = vadd.f32 %v1003, 1e-05
      %v1008 = vadd.f32 %v1004, 1e-05
      %v1009 = vadd.f32 %v1005, 1e-05
      %v1010 = vadd.f32 %v1006, 1e-05
      %v1011 = vrsqrt.pop %v1007
      %v1012 = vrsqrt.pop %v1008
      %v1013 = vrsqrt.pop %v1009
      %v1014 = vrsqrt.pop %v1010
      %v1015 = vmul.f32 %v983, %v1011
      %v1016 = vmul.f32 %v984, %v1012
      %v1017 = vmul.f32 %v985, %v1013
      %v1018 = vmul.f32 %v986, %v1014
      %v1019 = vlaneseq
      %v1020 = vshrl.u32 %v1019, 7
      %v1021 = vsub.s32 1, %v1020
      %v1022 = vrot.slane %v878, %v1021
      %v1023 = vmul.f32 %v1015, %v1022
      %v1024 = vmul.f32 %v1016, %v1022
      %v1025 = vmul.f32 %v1017, %v1022
      %v1026 = vmul.f32 %v1018, %v1022
      %v1027 = vlaneseq
      %v1028 = vshrl.u32 %v1027, 7
      %v1029 = vsub.s32 2, %v1028
      %v1030 = vrot.slane %v878, %v1029
      %v1031 = vadd.f32 %v1023, %v1030
      %v1032 = vadd.f32 %v1024, %v1030
      %v1033 = vadd.f32 %v1025, %v1030
      %v1034 = vadd.f32 %v1026, %v1030
      %v1035 = vsub.f32 0.0, %v1031
      %v1036 = vsub.f32 0.0, %v1032
      %v1037 = vsub.f32 0.0, %v1033
      %v1038 = vsub.f32 0.0, %v1034
      %v1039 = vmul.f32 %v1035, 1.442695
      %v1040 = vpow.pop %v1039
      %v1041 = vmul.f32 %v1036, 1.442695
      %v1042 = vpow.pop %v1041
      %v1043 = vmul.f32 %v1037, 1.442695
      %v1044 = vpow.pop %v1043
      %v1045 = vmul.f32 %v1038, 1.442695
      %v1046 = vpow.pop %v1045
      %v1047 = vadd.f32 %v1040, 1.0
      %v1048 = vadd.f32 %v1042, 1.0
      %v1049 = vadd.f32 %v1044, 1.0
      %v1050 = vadd.f32 %v1046, 1.0
      %v1051 = vrcp.pop %v1047
      %v1052 = vmul.f32 1.0, %v1051
      %v1053 = vrcp.pop %v1048
      %v1054 = vmul.f32 1.0, %v1053
      %v1055 = vrcp.pop %v1049
      %v1056 = vmul.f32 1.0, %v1055
      %v1057 = vrcp.pop %v1050
      %v1058 = vmul.f32 1.0, %v1057
      %v1059 = vmul.f32 %v1031, %v1052
      %v1060 = vmul.f32 %v1032, %v1054
      %v1061 = vmul.f32 %v1033, %v1056
      %v1062 = vmul.f32 %v1034, %v1058
      %v1063 = vmul.f32 %v220, %v1059
      %v1064 = vmul.f32 %v221, %v1060
      %v1065 = vmul.f32 %v222, %v1061
      %v1066 = vmul.f32 %v223, %v1062
      %v1067 = vsub.f32 1.0, %v220
      %v1068 = vsub.f32 1.0, %v221
      %v1069 = vsub.f32 1.0, %v222
      %v1070 = vsub.f32 1.0, %v223
      %v1071 = vld [vmem:[%s1 + $0x180] sm:$0x7]
      %v1072 = vld [vmem:[%s1 + $0x188] sm:$0xff]
      %v1073 = vld [vmem:[%s1 + $0x190] sm:$0xff]
      %v1074 = vld [vmem:[%s1 + $0x198] sm:$0xff]
      %v1075 = vld [vmem:[%s1 + $0x1a0] sm:$0xff]
      %v1076 = vld [vmem:[%s1 + $0x1a8] sm:$0xff]
      %v1077 = vld [vmem:[%s1 + $0x1b0] sm:$0xff]
      %v1078 = vld [vmem:[%s1 + $0x1b8] sm:$0xff]
      %v1079 = vld [vmem:[%s1 + $0x1c0] sm:$0xff]
      %v1080 = vld [vmem:[%s1 + $0x1c8] sm:$0xff]
      %v1081 = vld [vmem:[%s1 + $0x1d0] sm:$0xff]
      %v1082 = vld [vmem:[%s1 + $0x1d8] sm:$0xff]
      %v1083 = vld [vmem:[%s1 + $0x1e0] sm:$0xff]
      %v1084 = vld [vmem:[%s1 + $0x1e8] sm:$0xff]
      %v1085 = vld [vmem:[%s1 + $0x1f0] sm:$0xff]
      %v1086 = vld [vmem:[%s1 + $0x1f8] sm:$0xff]
      %v1087 = vld [vmem:[%s1 + $0x200] sm:$0xff]
      %v1088 = vld [vmem:[%s1 + $0x208] sm:$0xff]
      %v1089 = vld [vmem:[%s1 + $0x210] sm:$0xff]
      %v1090 = vld [vmem:[%s1 + $0x218] sm:$0xff]
      %v1091 = vld [vmem:[%s1 + $0x220] sm:$0xff]
      %v1092 = vld [vmem:[%s1 + $0x228] sm:$0xff]
      %v1093 = vld [vmem:[%s1 + $0x230] sm:$0xff]
      %v1094 = vld [vmem:[%s1 + $0x238] sm:$0xf]
      %v1095 = vlaneseq
      %v1096 = vshrl.u32 %v1095, 7
      %v1097 = vsub.s32 0, %v1096
      %v1098 = vrot.slane %v1071, %v1097
      %v1100 = vsel %vm265, %v1094, 0
      %1102 = vmatprep.subr.mxu0 0.0
      %1103 = vmatpush1.msra.mxu0 %v1072
      %1104 = vmatprep.subr.mxu0 0.0
      %1105 = vmatpush1.msra.mxu0 %v1073
      %1106 = vmatprep.subr.mxu0 0.0
      %1107 = vmatpush1.msra.mxu0 %v1074
      %1108 = vmatprep.subr.mxu0 0.0
      %1109 = vmatpush1.msra.mxu0 %v1075
      %1110 = vmatprep.subr.mxu0 0.0
      %1111 = vmatpush1.msra.mxu0 %v1076
      %1112 = vmatprep.subr.mxu0 0.0
      %1113 = vmatpush1.msra.mxu0 %v1077
      %1114 = vmatprep.subr.mxu0 0.0
      %1115 = vmatpush1.msra.mxu0 %v1078
      %1116 = vmatprep.subr.mxu0 0.0
      %1117 = vmatpush1.msra.mxu0 %v1079
      %1118 = vmatprep.subr.mxu0 0.0
      %1119 = vmatpush1.msra.mxu0 %v1080
      %1120 = vmatprep.subr.mxu0 0.0
      %1121 = vmatpush1.msra.mxu0 %v1081
      %1122 = vmatprep.subr.mxu0 0.0
      %1123 = vmatpush1.msra.mxu0 %v1082
      %1124 = vmatprep.subr.mxu0 0.0
      %1125 = vmatpush1.msra.mxu0 %v1083
      %1126 = vmatprep.subr.mxu0 0.0
      %1127 = vmatpush1.msra.mxu0 %v1084
      %1128 = vmatprep.subr.mxu0 0.0
      %1129 = vmatpush1.msra.mxu0 %v1085
      %1130 = vmatprep.subr.mxu0 0.0
      %1131 = vmatpush1.msra.mxu0 %v1086
      %1132 = vmatprep.subr.mxu0 0.0
      %1133 = vmatpush1.msra.mxu0 %v1087
      %1134 = vmatprep.subr.mxu0 0.0
      %1135 = vmatpush1.msra.mxu0 %v1088
      %1136 = vmatprep.subr.mxu0 0.0
      %1137 = vmatpush1.msra.mxu0 %v1089
      %1138 = vmatprep.subr.mxu0 0.0
      %1139 = vmatpush1.msra.mxu0 %v1090
      %1140 = vmatprep.subr.mxu0 0.0
      %1141 = vmatpush1.msra.mxu0 %v1091
      %1142 = vmatprep.subr.mxu0 0.0
      %1143 = vmatpush1.msra.mxu0 %v1092
      %1144 = vmatprep.subr.mxu0 0.0
      %1145 = vmatpush1.msra.mxu0 %v1093
      %1146 = vmatprep.subr.mxu0 0.0
      %1147 = vmatpush1.msra.mxu0 %v1100
      %1148 = vmatprep.subr.mxu0 0.0
      %1149 = vmatpush1.msra.mxu0 0.0
      %1150 = vmatprep.subr.mxu0 0.0
      %1151 = vmatpush1.msra.mxu0 0.0
      %1152 = vmatprep.subr.mxu0 0.0
      %1153 = vmatpush1.msra.mxu0 0.0
      %1154 = vmatprep.subr.mxu0 0.0
      %1155 = vmatpush1.msra.mxu0 0.0
      %1156 = vmatprep.subr.mxu0 0.0
      %1157 = vmatpush1.msra.mxu0 0.0
      %1158 = vmatprep.subr.mxu0 0.0
      %1159 = vmatpush1.msra.mxu0 0.0
      %1160 = vmatprep.subr.mxu0 0.0
      %1161 = vmatpush1.msra.mxu0 0.0
      %1162 = vmatprep.subr.mxu0 0.0
      %1163 = vmatpush1.msra.mxu0 0.0
      %1164 = vmatprep.subr.mxu0 0.0
      %1165 = vmatpush1.msra.mxu0 0.0
      %1166 = vmatprep.mubr.f32.mxu0 %v254
      %1167 = vmatmul.mubr.f32.gmra.mrb[0].mxu0 %v212
      %v1168 = vpop.f32.mrb[0].mxu0
      %v1169 = vadd.f32 %v1098, %v1168
      %v1170 = vpop.f32.mrb[0].mxu0
      %1171 = vmatprep.mubr.f32.mxu0 %v257
      %1172 = vmatmul.mubr.f32.gmra.mrb[0].mxu0 %v214
      %v1173 = vpop.f32.mrb[0].mxu0
      %v1174 = vadd.f32 %v1098, %v1173
      %v1175 = vpop.f32.mrb[0].mxu0
      %1176 = vmatprep.mubr.f32.mxu0 %v260
      %1177 = vmatmul.mubr.f32.gmra.mrb[0].mxu0 %v216
      %v1178 = vpop.f32.mrb[0].mxu0
      %v1179 = vadd.f32 %v1098, %v1178
      %v1180 = vpop.f32.mrb[0].mxu0
      %1181 = vmatprep.mubr.f32.mxu0 %v263
      %1182 = vmatmul.mubr.f32.gmra.mrb[0].mxu0 %v218
      %v1183 = vpop.f32.mrb[0].mxu0
      %v1184 = vadd.f32 %v1098, %v1183
      %v1185 = vpop.f32.mrb[0].mxu0
      %1186 = vdwg.mxu0
      %v1187 = vsel %vm354, %v1169, 0.0
      %1188 = vadd.xlane.f32.xlu0 %v1187
      %v1189 = vpop.xlane.xlu0 %1188
      %v1190 = vsel %vm354, %v1174, 0.0
      %1191 = vadd.xlane.f32.xlu0 %v1190
      %v1192 = vpop.xlane.xlu0 %1191
      %v1193 = vsel %vm354, %v1179, 0.0
      %1194 = vadd.xlane.f32.xlu0 %v1193
      %v1195 = vpop.xlane.xlu0 %1194
      %v1196 = vsel %vm364, %v1184, 0.0
      %1197 = vadd.xlane.f32.xlu0 %v1196
      %v1198 = vpop.xlane.xlu0 %1197
      %v1199 = vmul.f32 %v1189, %v368
      %v1200 = vmul.f32 %v1192, %v368
      %v1201 = vmul.f32 %v1195, %v368
      %v1202 = vmul.f32 %v1198, %v368
      %v1203 = vsub.f32 %v1169, %v1199
      %v1204 = vsub.f32 %v1174, %v1200
      %v1205 = vsub.f32 %v1179, %v1201
      %v1206 = vsub.f32 %v1184, %v1202
      %v1207 = vmul.f32 %v1203, %v1203
      %v1208 = vmul.f32 %v1204, %v1204
      %v1209 = vmul.f32 %v1205, %v1205
      %v1210 = vmul.f32 %v1206, %v1206
      %v1211 = vsel %vm354, %v1207, 0.0
      %1212 = vadd.xlane.f32.xlu0 %v1211
      %v1213 = vpop.xlane.xlu0 %1212
      %v1214 = vsel %vm354, %v1208, 0.0
      %1215 = vadd.xlane.f32.xlu0 %v1214
      %v1216 = vpop.xlane.xlu0 %1215
      %v1217 = vsel %vm354, %v1209, 0.0
      %1218 = vadd.xlane.f32.xlu0 %v1217
      %v1219 = vpop.xlane.xlu0 %1218
      %v1220 = vsel %vm364, %v1210, 0.0
      %1221 = vadd.xlane.f32.xlu0 %v1220
      %v1222 = vpop.xlane.xlu0 %1221
      %v1223 = vmul.f32 %v1213, %v368
      %v1224 = vmul.f32 %v1216, %v368
      %v1225 = vmul.f32 %v1219, %v368
      %v1226 = vmul.f32 %v1222, %v368
      %v1227 = vadd.f32 %v1223, 1e-05
      %v1228 = vadd.f32 %v1224, 1e-05
      %v1229 = vadd.f32 %v1225, 1e-05
      %v1230 = vadd.f32 %v1226, 1e-05
      %v1231 = vrsqrt.pop %v1227
      %v1232 = vrsqrt.pop %v1228
      %v1233 = vrsqrt.pop %v1229
      %v1234 = vrsqrt.pop %v1230
      %v1235 = vmul.f32 %v1203, %v1231
      %v1236 = vmul.f32 %v1204, %v1232
      %v1237 = vmul.f32 %v1205, %v1233
      %v1238 = vmul.f32 %v1206, %v1234
      %v1239 = vlaneseq
      %v1240 = vshrl.u32 %v1239, 7
      %v1241 = vsub.s32 1, %v1240
      %v1242 = vrot.slane %v1071, %v1241
      %v1243 = vmul.f32 %v1235, %v1242
      %v1244 = vmul.f32 %v1236, %v1242
      %v1245 = vmul.f32 %v1237, %v1242
      %v1246 = vmul.f32 %v1238, %v1242
      %v1247 = vlaneseq
      %v1248 = vshrl.u32 %v1247, 7
      %v1249 = vsub.s32 2, %v1248
      %v1250 = vrot.slane %v1071, %v1249
      %v1251 = vadd.f32 %v1243, %v1250
      %v1252 = vadd.f32 %v1244, %v1250
      %v1253 = vadd.f32 %v1245, %v1250
      %v1254 = vadd.f32 %v1246, %v1250
      %v1255 = vsub.f32 0.0, %v1251
      %v1256 = vsub.f32 0.0, %v1252
      %v1257 = vsub.f32 0.0, %v1253
      %v1258 = vsub.f32 0.0, %v1254
      %v1259 = vmul.f32 %v1255, 1.442695
      %v1260 = vpow.pop %v1259
      %v1261 = vmul.f32 %v1256, 1.442695
      %v1262 = vpow.pop %v1261
      %v1263 = vmul.f32 %v1257, 1.442695
      %v1264 = vpow.pop %v1263
      %v1265 = vmul.f32 %v1258, 1.442695
      %v1266 = vpow.pop %v1265
      %v1267 = vadd.f32 %v1260, 1.0
      %v1268 = vadd.f32 %v1262, 1.0
      %v1269 = vadd.f32 %v1264, 1.0
      %v1270 = vadd.f32 %v1266, 1.0
      %v1271 = vrcp.pop %v1267
      %v1272 = vmul.f32 1.0, %v1271
      %v1273 = vrcp.pop %v1268
      %v1274 = vmul.f32 1.0, %v1273
      %v1275 = vrcp.pop %v1269
      %v1276 = vmul.f32 1.0, %v1275
      %v1277 = vrcp.pop %v1270
      %v1278 = vmul.f32 1.0, %v1277
      %v1279 = vmul.f32 %v1251, %v1272
      %v1280 = vmul.f32 %v1252, %v1274
      %v1281 = vmul.f32 %v1253, %v1276
      %v1282 = vmul.f32 %v1254, %v1278
      %v1283 = vld [vmem:[%s1 + $0x240] sm:$0x7]
      %v1284 = vld [vmem:[%s2 + $0x80] sm:$0xf]
      %v1285 = vld [vmem:[%s2 + $0x84] sm:$0xf]
      %v1286 = vld [vmem:[%s2 + $0x88] sm:$0xf]
      %v1287 = vld [vmem:[%s2 + $0x8c] sm:$0xf]
      %v1288 = vld [vmem:[%s2 + $0x90] sm:$0xf]
      %v1289 = vld [vmem:[%s2 + $0x94] sm:$0xf]
      %v1290 = vld [vmem:[%s2 + $0x98] sm:$0xf]
      %v1291 = vld [vmem:[%s2 + $0x9c] sm:$0xf]
      %v1292 = vld [vmem:[%s2 + $0xa0] sm:$0xf]
      %v1293 = vld [vmem:[%s2 + $0xa4] sm:$0xf]
      %v1294 = vld [vmem:[%s2 + $0xa8] sm:$0xf]
      %v1295 = vld [vmem:[%s2 + $0xac] sm:$0xf]
      %v1296 = vld [vmem:[%s2 + $0xb0] sm:$0xf]
      %v1297 = vld [vmem:[%s2 + $0xb4] sm:$0xf]
      %v1298 = vld [vmem:[%s2 + $0xb8] sm:$0x3]
      %v1299 = vpack.c.bf16 %v1280, %v1279
      %v1300 = vpack.c.bf16 %v1282, %v1281
      %v1301 = vlaneseq
      %v1302 = vshrl.u32 %v1301, 7
      %v1303 = vsub.s32 0, %v1302
      %v1304 = vrot.slane %v1283, %v1303
      %v1320 = vunpack.c.l.b16 %v1284
      %v1321 = vunpack.c.l.b16 %v1285
      %v1322 = vunpack.c.l.b16 %v1286
      %v1323 = vunpack.c.l.b16 %v1287
      %v1324 = vunpack.c.l.b16 %v1288
      %v1325 = vunpack.c.l.b16 %v1289
      %v1326 = vunpack.c.l.b16 %v1290
      %v1327 = vunpack.c.l.b16 %v1291
      %v1328 = vunpack.c.l.b16 %v1292
      %v1329 = vunpack.c.l.b16 %v1293
      %v1330 = vunpack.c.l.b16 %v1294
      %v1331 = vunpack.c.l.b16 %v1295
      %v1332 = vunpack.c.l.b16 %v1296
      %v1333 = vunpack.c.l.b16 %v1297
      %v1334 = vunpack.c.l.b16 %v1298
      %v1335 = vpack.c.b16 %v1321, %v1320
      %v1336 = vpack.c.b16 %v1323, %v1322
      %v1337 = vpack.c.b16 %v1325, %v1324
      %v1338 = vpack.c.b16 %v1327, %v1326
      %v1339 = vpack.c.b16 %v1329, %v1328
      %v1340 = vpack.c.b16 %v1331, %v1330
      %v1341 = vpack.c.b16 %v1333, %v1332
      %v1342 = vpack.c.b16 %v1334, %v1334
      %v1351 = vsel %vm354, %v1299, 0
      %v1354 = vsel %vm354, %v1300, 0
      %v1357 = vsel %vm526, %v1342, 0
      %1359 = vmatprep.subr.bf16.mxu0 0
      %1360 = vmatpush1.bf16.msra.mxu0 %v1335
      %1361 = vmatprep.subr.bf16.mxu0 0
      %1362 = vmatpush1.bf16.msra.mxu0 %v1336
      %1363 = vmatprep.subr.bf16.mxu0 0
      %1364 = vmatpush1.bf16.msra.mxu0 %v1337
      %1365 = vmatprep.subr.bf16.mxu0 0
      %1366 = vmatpush1.bf16.msra.mxu0 %v1338
      %1367 = vmatprep.subr.bf16.mxu0 0
      %1368 = vmatpush1.bf16.msra.mxu0 %v1339
      %1369 = vmatprep.subr.bf16.mxu0 0
      %1370 = vmatpush1.bf16.msra.mxu0 %v1340
      %1371 = vmatprep.subr.bf16.mxu0 0
      %1372 = vmatpush1.bf16.msra.mxu0 %v1341
      %1373 = vmatprep.subr.bf16.mxu0 0
      %1374 = vmatpush1.bf16.msra.mxu0 %v1357
      %1375 = vmatprep.subr.bf16.mxu0 0
      %1376 = vmatpush1.bf16.msra.mxu0 0
      %1377 = vmatprep.subr.bf16.mxu0 0
      %1378 = vmatpush1.bf16.msra.mxu0 0
      %1379 = vmatprep.subr.bf16.mxu0 0
      %1380 = vmatpush1.bf16.msra.mxu0 0
      %1381 = vmatprep.subr.bf16.mxu0 0
      %1382 = vmatpush1.bf16.msra.mxu0 0
      %1383 = vmatprep.subr.bf16.mxu0 0
      %1384 = vmatpush1.bf16.msra.mxu0 0
      %1385 = vmatprep.subr.bf16.mxu0 0
      %1386 = vmatpush1.bf16.msra.mxu0 0
      %1387 = vmatprep.subr.bf16.mxu0 0
      %1388 = vmatpush1.bf16.msra.mxu0 0
      %1389 = vmatprep.subr.bf16.mxu0 0
      %1390 = vmatpush1.bf16.msra.mxu0 0
      %1391 = vmatprep.mubr.bf16.mxu0 0
      %1392 = vmatmul.mubr.bf16.gmra.mrb[0].mxu0 %v1351
      %v1393 = vpop.f32.mrb[0].mxu0
      %v1394 = vadd.f32 %v1304, %v1393
      %v1395 = vpop.f32.mrb[0].mxu0
      %v1396 = vpop.f32.mrb[0].mxu0
      %v1397 = vadd.f32 %v1304, %v1396
      %v1398 = vpop.f32.mrb[0].mxu0
      %1399 = vmatprep.mubr.bf16.mxu0 0
      %1400 = vmatmul.mubr.bf16.gmra.mrb[0].mxu0 %v1354
      %v1401 = vpop.f32.mrb[0].mxu0
      %v1402 = vadd.f32 %v1304, %v1401
      %v1403 = vpop.f32.mrb[0].mxu0
      %v1404 = vpop.f32.mrb[0].mxu0
      %v1405 = vadd.f32 %v1304, %v1404
      %v1406 = vpop.f32.mrb[0].mxu0
      %1407 = vdwg.mxu0
      %v1408 = vsel %vm579, %v1394, 0.0
      %1409 = vadd.xlane.f32.xlu0 %v1408
      %v1410 = vpop.xlane.xlu0 %1409
      %v1411 = vsel %vm579, %v1397, 0.0
      %1412 = vadd.xlane.f32.xlu0 %v1411
      %v1413 = vpop.xlane.xlu0 %1412
      %v1414 = vsel %vm579, %v1402, 0.0
      %1415 = vadd.xlane.f32.xlu0 %v1414
      %v1416 = vpop.xlane.xlu0 %1415
      %v1417 = vsel %vm589, %v1405, 0.0
      %1418 = vadd.xlane.f32.xlu0 %v1417
      %v1419 = vpop.xlane.xlu0 %1418
      %v1420 = vmul.f32 %v1410, %v593
      %v1421 = vmul.f32 %v1413, %v593
      %v1422 = vmul.f32 %v1416, %v593
      %v1423 = vmul.f32 %v1419, %v593
      %v1424 = vsub.f32 %v1394, %v1420
      %v1425 = vsub.f32 %v1397, %v1421
      %v1426 = vsub.f32 %v1402, %v1422
      %v1427 = vsub.f32 %v1405, %v1423
      %v1428 = vmul.f32 %v1424, %v1424
      %v1429 = vmul.f32 %v1425, %v1425
      %v1430 = vmul.f32 %v1426, %v1426
      %v1431 = vmul.f32 %v1427, %v1427
      %v1432 = vsel %vm579, %v1428, 0.0
      %1433 = vadd.xlane.f32.xlu0 %v1432
      %v1434 = vpop.xlane.xlu0 %1433
      %v1435 = vsel %vm579, %v1429, 0.0
      %1436 = vadd.xlane.f32.xlu0 %v1435
      %v1437 = vpop.xlane.xlu0 %1436
      %v1438 = vsel %vm579, %v1430, 0.0
      %1439 = vadd.xlane.f32.xlu0 %v1438
      %v1440 = vpop.xlane.xlu0 %1439
      %v1441 = vsel %vm589, %v1431, 0.0
      %1442 = vadd.xlane.f32.xlu0 %v1441
      %v1443 = vpop.xlane.xlu0 %1442
      %v1444 = vmul.f32 %v1434, %v593
      %v1445 = vmul.f32 %v1437, %v593
      %v1446 = vmul.f32 %v1440, %v593
      %v1447 = vmul.f32 %v1443, %v593
      %v1448 = vadd.f32 %v1444, 1e-05
      %v1449 = vadd.f32 %v1445, 1e-05
      %v1450 = vadd.f32 %v1446, 1e-05
      %v1451 = vadd.f32 %v1447, 1e-05
      %v1452 = vrsqrt.pop %v1448
      %v1453 = vrsqrt.pop %v1449
      %v1454 = vrsqrt.pop %v1450
      %v1455 = vrsqrt.pop %v1451
      %v1456 = vmul.f32 %v1424, %v1452
      %v1457 = vmul.f32 %v1425, %v1453
      %v1458 = vmul.f32 %v1426, %v1454
      %v1459 = vmul.f32 %v1427, %v1455
      %v1460 = vlaneseq
      %v1461 = vshrl.u32 %v1460, 7
      %v1462 = vsub.s32 1, %v1461
      %v1463 = vrot.slane %v1283, %v1462
      %v1464 = vmul.f32 %v1456, %v1463
      %v1465 = vmul.f32 %v1457, %v1463
      %v1466 = vmul.f32 %v1458, %v1463
      %v1467 = vmul.f32 %v1459, %v1463
      %v1468 = vlaneseq
      %v1469 = vshrl.u32 %v1468, 7
      %v1470 = vsub.s32 2, %v1469
      %v1471 = vrot.slane %v1283, %v1470
      %v1472 = vadd.f32 %v1464, %v1471
      %v1473 = vadd.f32 %v1465, %v1471
      %v1474 = vadd.f32 %v1466, %v1471
      %v1475 = vadd.f32 %v1467, %v1471
      %v1476 = vsub.f32 0.0, %v1472
      %v1477 = vsub.f32 0.0, %v1473
      %v1478 = vsub.f32 0.0, %v1474
      %v1479 = vsub.f32 0.0, %v1475
      %v1480 = vmul.f32 %v1476, 1.442695
      %v1481 = vpow.pop %v1480
      %v1482 = vmul.f32 %v1477, 1.442695
      %v1483 = vpow.pop %v1482
      %v1484 = vmul.f32 %v1478, 1.442695
      %v1485 = vpow.pop %v1484
      %v1486 = vmul.f32 %v1479, 1.442695
      %v1487 = vpow.pop %v1486
      %v1488 = vadd.f32 %v1481, 1.0
      %v1489 = vadd.f32 %v1483, 1.0
      %v1490 = vadd.f32 %v1485, 1.0
      %v1491 = vadd.f32 %v1487, 1.0
      %v1492 = vrcp.pop %v1488
      %v1493 = vmul.f32 1.0, %v1492
      %v1494 = vrcp.pop %v1489
      %v1495 = vmul.f32 1.0, %v1494
      %v1496 = vrcp.pop %v1490
      %v1497 = vmul.f32 1.0, %v1496
      %v1498 = vrcp.pop %v1491
      %v1499 = vmul.f32 1.0, %v1498
      %v1500 = vmul.f32 %v1472, %v1493
      %v1501 = vmul.f32 %v1473, %v1495
      %v1502 = vmul.f32 %v1474, %v1497
      %v1503 = vmul.f32 %v1475, %v1499
      %v1504 = vld [vmem:[%s1 + $0x248] sm:$0x7]
      %v1505 = vld [vmem:[%s2 + $0xc0] sm:$0xf]
      %v1506 = vld [vmem:[%s2 + $0xc4] sm:$0xf]
      %v1507 = vld [vmem:[%s2 + $0xc8] sm:$0xf]
      %v1508 = vld [vmem:[%s2 + $0xcc] sm:$0xf]
      %v1509 = vld [vmem:[%s2 + $0xd0] sm:$0xf]
      %v1510 = vld [vmem:[%s2 + $0xd4] sm:$0xf]
      %v1511 = vld [vmem:[%s2 + $0xd8] sm:$0xf]
      %v1512 = vld [vmem:[%s2 + $0xdc] sm:$0xf]
      %v1513 = vld [vmem:[%s2 + $0xe0] sm:$0xf]
      %v1514 = vpack.c.bf16 %v1501, %v1500
      %v1515 = vpack.c.bf16 %v1503, %v1502
      %v1516 = vlaneseq
      %v1517 = vshrl.u32 %v1516, 7
      %v1518 = vsub.s32 0, %v1517
      %v1519 = vrot.slane %v1504, %v1518
      %v1529 = vunpack.c.l.b16 %v1505
      %v1530 = vunpack.c.l.b16 %v1506
      %v1531 = vunpack.c.l.b16 %v1507
      %v1532 = vunpack.c.l.b16 %v1508
      %v1533 = vunpack.c.l.b16 %v1509
      %v1534 = vunpack.c.l.b16 %v1510
      %v1535 = vunpack.c.l.b16 %v1511
      %v1536 = vunpack.c.l.b16 %v1512
      %v1537 = vunpack.c.l.b16 %v1513
      %v1538 = vpack.c.b16 %v1530, %v1529
      %v1539 = vpack.c.b16 %v1532, %v1531
      %v1540 = vpack.c.b16 %v1534, %v1533
      %v1541 = vpack.c.b16 %v1536, %v1535
      %v1542 = vpack.c.b16 %v1537, %v1537
      %v1548 = vsel %vm579, %v1514, 0
      %v1551 = vsel %vm579, %v1515, 0
      %v1554 = vsel %vm265, %v1542, 0
      %1556 = vmatprep.subr.bf16.mxu0 0
      %1557 = vmatpush1.bf16.msra.mxu0 %v1538
      %1558 = vmatprep.subr.bf16.mxu0 0
      %1559 = vmatpush1.bf16.msra.mxu0 %v1539
      %1560 = vmatprep.subr.bf16.mxu0 0
      %1561 = vmatpush1.bf16.msra.mxu0 %v1540
      %1562 = vmatprep.subr.bf16.mxu0 0
      %1563 = vmatpush1.bf16.msra.mxu0 %v1541
      %1564 = vmatprep.subr.bf16.mxu0 0
      %1565 = vmatpush1.bf16.msra.mxu0 %v1554
      %1566 = vmatprep.subr.bf16.mxu0 0
      %1567 = vmatpush1.bf16.msra.mxu0 0
      %1568 = vmatprep.subr.bf16.mxu0 0
      %1569 = vmatpush1.bf16.msra.mxu0 0
      %1570 = vmatprep.subr.bf16.mxu0 0
      %1571 = vmatpush1.bf16.msra.mxu0 0
      %1572 = vmatprep.subr.bf16.mxu0 0
      %1573 = vmatpush1.bf16.msra.mxu0 0
      %1574 = vmatprep.subr.bf16.mxu0 0
      %1575 = vmatpush1.bf16.msra.mxu0 0
      %1576 = vmatprep.subr.bf16.mxu0 0
      %1577 = vmatpush1.bf16.msra.mxu0 0
      %1578 = vmatprep.subr.bf16.mxu0 0
      %1579 = vmatpush1.bf16.msra.mxu0 0
      %1580 = vmatprep.subr.bf16.mxu0 0
      %1581 = vmatpush1.bf16.msra.mxu0 0
      %1582 = vmatprep.subr.bf16.mxu0 0
      %1583 = vmatpush1.bf16.msra.mxu0 0
      %1584 = vmatprep.subr.bf16.mxu0 0
      %1585 = vmatpush1.bf16.msra.mxu0 0
      %1586 = vmatprep.subr.bf16.mxu0 0
      %1587 = vmatpush1.bf16.msra.mxu0 0
      %1588 = vmatprep.mubr.bf16.mxu0 0
      %1589 = vmatmul.mubr.bf16.gmra.mrb[0].mxu0 %v1548
      %v1590 = vpop.f32.mrb[0].mxu0
      %v1591 = vadd.f32 %v1519, %v1590
      %v1592 = vpop.f32.mrb[0].mxu0
      %v1593 = vpop.f32.mrb[0].mxu0
      %v1594 = vadd.f32 %v1519, %v1593
      %v1595 = vpop.f32.mrb[0].mxu0
      %1596 = vmatprep.mubr.bf16.mxu0 0
      %1597 = vmatmul.mubr.bf16.gmra.mrb[0].mxu0 %v1551
      %v1598 = vpop.f32.mrb[0].mxu0
      %v1599 = vadd.f32 %v1519, %v1598
      %v1600 = vpop.f32.mrb[0].mxu0
      %v1601 = vpop.f32.mrb[0].mxu0
      %v1602 = vadd.f32 %v1519, %v1601
      %v1603 = vpop.f32.mrb[0].mxu0
      %1604 = vdwg.mxu0
      %v1605 = vsel %vm779, %v1591, 0.0
      %1606 = vadd.xlane.f32.xlu0 %v1605
      %v1607 = vpop.xlane.xlu0 %1606
      %v1608 = vsel %vm779, %v1594, 0.0
      %1609 = vadd.xlane.f32.xlu0 %v1608
      %v1610 = vpop.xlane.xlu0 %1609
      %v1611 = vsel %vm779, %v1599, 0.0
      %1612 = vadd.xlane.f32.xlu0 %v1611
      %v1613 = vpop.xlane.xlu0 %1612
      %v1614 = vsel %vm789, %v1602, 0.0
      %1615 = vadd.xlane.f32.xlu0 %v1614
      %v1616 = vpop.xlane.xlu0 %1615
      %v1617 = vmul.f32 %v1607, %v793
      %v1618 = vmul.f32 %v1610, %v793
      %v1619 = vmul.f32 %v1613, %v793
      %v1620 = vmul.f32 %v1616, %v793
      %v1621 = vsub.f32 %v1591, %v1617
      %v1622 = vsub.f32 %v1594, %v1618
      %v1623 = vsub.f32 %v1599, %v1619
      %v1624 = vsub.f32 %v1602, %v1620
      %v1625 = vmul.f32 %v1621, %v1621
      %v1626 = vmul.f32 %v1622, %v1622
      %v1627 = vmul.f32 %v1623, %v1623
      %v1628 = vmul.f32 %v1624, %v1624
      %v1629 = vsel %vm779, %v1625, 0.0
      %1630 = vadd.xlane.f32.xlu0 %v1629
      %v1631 = vpop.xlane.xlu0 %1630
      %v1632 = vsel %vm779, %v1626, 0.0
      %1633 = vadd.xlane.f32.xlu0 %v1632
      %v1634 = vpop.xlane.xlu0 %1633
      %v1635 = vsel %vm779, %v1627, 0.0
      %1636 = vadd.xlane.f32.xlu0 %v1635
      %v1637 = vpop.xlane.xlu0 %1636
      %v1638 = vsel %vm789, %v1628, 0.0
      %1639 = vadd.xlane.f32.xlu0 %v1638
      %v1640 = vpop.xlane.xlu0 %1639
      %v1641 = vmul.f32 %v1631, %v793
      %v1642 = vmul.f32 %v1634, %v793
      %v1643 = vmul.f32 %v1637, %v793
      %v1644 = vmul.f32 %v1640, %v793
      %v1645 = vadd.f32 %v1641, 1e-05
      %v1646 = vadd.f32 %v1642, 1e-05
      %v1647 = vadd.f32 %v1643, 1e-05
      %v1648 = vadd.f32 %v1644, 1e-05
      %v1649 = vrsqrt.pop %v1645
      %v1650 = vrsqrt.pop %v1646
      %v1651 = vrsqrt.pop %v1647
      %v1652 = vrsqrt.pop %v1648
      %v1653 = vmul.f32 %v1621, %v1649
      %v1654 = vmul.f32 %v1622, %v1650
      %v1655 = vmul.f32 %v1623, %v1651
      %v1656 = vmul.f32 %v1624, %v1652
      %v1657 = vlaneseq
      %v1658 = vshrl.u32 %v1657, 7
      %v1659 = vsub.s32 1, %v1658
      %v1660 = vrot.slane %v1504, %v1659
      %v1661 = vmul.f32 %v1653, %v1660
      %v1662 = vmul.f32 %v1654, %v1660
      %v1663 = vmul.f32 %v1655, %v1660
      %v1664 = vmul.f32 %v1656, %v1660
      %v1665 = vlaneseq
      %v1666 = vshrl.u32 %v1665, 7
      %v1667 = vsub.s32 2, %v1666
      %v1668 = vrot.slane %v1504, %v1667
      %v1669 = vadd.f32 %v1661, %v1668
      %v1670 = vadd.f32 %v1662, %v1668
      %v1671 = vadd.f32 %v1663, %v1668
      %v1672 = vadd.f32 %v1664, %v1668
      %v1673 = vsub.f32 0.0, %v1669
      %v1674 = vsub.f32 0.0, %v1670
      %v1675 = vsub.f32 0.0, %v1671
      %v1676 = vsub.f32 0.0, %v1672
      %v1677 = vmul.f32 %v1673, 1.442695
      %v1678 = vpow.pop %v1677
      %v1679 = vmul.f32 %v1674, 1.442695
      %v1680 = vpow.pop %v1679
      %v1681 = vmul.f32 %v1675, 1.442695
      %v1682 = vpow.pop %v1681
      %v1683 = vmul.f32 %v1676, 1.442695
      %v1684 = vpow.pop %v1683
      %v1685 = vadd.f32 %v1678, 1.0
      %v1686 = vadd.f32 %v1680, 1.0
      %v1687 = vadd.f32 %v1682, 1.0
      %v1688 = vadd.f32 %v1684, 1.0
      %v1689 = vrcp.pop %v1685
      %v1690 = vmul.f32 1.0, %v1689
      %v1691 = vrcp.pop %v1686
      %v1692 = vmul.f32 1.0, %v1691
      %v1693 = vrcp.pop %v1687
      %v1694 = vmul.f32 1.0, %v1693
      %v1695 = vrcp.pop %v1688
      %v1696 = vmul.f32 1.0, %v1695
      %v1697 = vmul.f32 %v1669, %v1690
      %v1698 = vmul.f32 %v1670, %v1692
      %v1699 = vmul.f32 %v1671, %v1694
      %v1700 = vmul.f32 %v1672, %v1696
      %v1701 = vld [vmem:[%s1 + $0x250] sm:$0x7]
      %v1702 = vld [vmem:[%s2 + $0xe8] sm:$0xf]
      %v1703 = vld [vmem:[%s2 + $0xec] sm:$0xf]
      %v1704 = vld [vmem:[%s2 + $0xf0] sm:$0xf]
      %v1705 = vld [vmem:[%s2 + $0xf4] sm:$0xf]
      %v1706 = vld [vmem:[%s2 + $0xf8] sm:$0xf]
      %v1707 = vld [vmem:[%s2 + $0xfc] sm:$0xf]
      %v1708 = vpack.c.bf16 %v1698, %v1697
      %v1709 = vpack.c.bf16 %v1700, %v1699
      %v1710 = vlaneseq
      %v1711 = vshrl.u32 %v1710, 7
      %v1712 = vsub.s32 0, %v1711
      %v1713 = vrot.slane %v1701, %v1712
      %v1720 = vunpack.c.l.b16 %v1702
      %v1721 = vunpack.c.l.b16 %v1703
      %v1722 = vunpack.c.l.b16 %v1704
      %v1723 = vunpack.c.l.b16 %v1705
      %v1724 = vunpack.c.l.b16 %v1706
      %v1725 = vunpack.c.l.b16 %v1707
      %v1726 = vpack.c.b16 %v1721, %v1720
      %v1727 = vpack.c.b16 %v1723, %v1722
      %v1728 = vpack.c.b16 %v1725, %v1724
      %v1733 = vsel %vm779, %v1708, 0
      %v1736 = vsel %vm779, %v1709, 0
      %1738 = vmatprep.subr.bf16.mxu0 0
      %1739 = vmatpush1.bf16.msra.mxu0 %v1726
      %1740 = vmatprep.subr.bf16.mxu0 0
      %1741 = vmatpush1.bf16.msra.mxu0 %v1727
      %1742 = vmatprep.subr.bf16.mxu0 0
      %1743 = vmatpush1.bf16.msra.mxu0 %v1728
      %1744 = vmatprep.subr.bf16.mxu0 0
      %1745 = vmatpush1.bf16.msra.mxu0 0
      %1746 = vmatprep.subr.bf16.mxu0 0
      %1747 = vmatpush1.bf16.msra.mxu0 0
      %1748 = vmatprep.subr.bf16.mxu0 0
      %1749 = vmatpush1.bf16.msra.mxu0 0
      %1750 = vmatprep.subr.bf16.mxu0 0
      %1751 = vmatpush1.bf16.msra.mxu0 0
      %1752 = vmatprep.subr.bf16.mxu0 0
      %1753 = vmatpush1.bf16.msra.mxu0 0
      %1754 = vmatprep.subr.bf16.mxu0 0
      %1755 = vmatpush1.bf16.msra.mxu0 0
      %1756 = vmatprep.subr.bf16.mxu0 0
      %1757 = vmatpush1.bf16.msra.mxu0 0
      %1758 = vmatprep.subr.bf16.mxu0 0
      %1759 = vmatpush1.bf16.msra.mxu0 0
      %1760 = vmatprep.subr.bf16.mxu0 0
      %1761 = vmatpush1.bf16.msra.mxu0 0
      %1762 = vmatprep.subr.bf16.mxu0 0
      %1763 = vmatpush1.bf16.msra.mxu0 0
      %1764 = vmatprep.subr.bf16.mxu0 0
      %1765 = vmatpush1.bf16.msra.mxu0 0
      %1766 = vmatprep.subr.bf16.mxu0 0
      %1767 = vmatpush1.bf16.msra.mxu0 0
      %1768 = vmatprep.subr.bf16.mxu0 0
      %1769 = vmatpush1.bf16.msra.mxu0 0
      %1770 = vmatprep.mubr.bf16.mxu0 0
      %1771 = vmatmul.mubr.bf16.gmra.mrb[0].mxu0 %v1733
      %v1772 = vpop.f32.mrb[0].mxu0
      %v1773 = vadd.f32 %v1713, %v1772
      %v1774 = vpop.f32.mrb[0].mxu0
      %v1775 = vpop.f32.mrb[0].mxu0
      %v1776 = vadd.f32 %v1713, %v1775
      %v1777 = vpop.f32.mrb[0].mxu0
      %1778 = vmatprep.mubr.bf16.mxu0 0
      %1779 = vmatmul.mubr.bf16.gmra.mrb[0].mxu0 %v1736
      %v1780 = vpop.f32.mrb[0].mxu0
      %v1781 = vadd.f32 %v1713, %v1780
      %v1782 = vpop.f32.mrb[0].mxu0
      %v1783 = vpop.f32.mrb[0].mxu0
      %v1784 = vadd.f32 %v1713, %v1783
      %v1785 = vpop.f32.mrb[0].mxu0
      %1786 = vdwg.mxu0
      %v1787 = vsel %vm964, %v1773, 0.0
      %1788 = vadd.xlane.f32.xlu0 %v1787
      %v1789 = vpop.xlane.xlu0 %1788
      %v1790 = vsel %vm964, %v1776, 0.0
      %1791 = vadd.xlane.f32.xlu0 %v1790
      %v1792 = vpop.xlane.xlu0 %1791
      %v1793 = vsel %vm964, %v1781, 0.0
      %1794 = vadd.xlane.f32.xlu0 %v1793
      %v1795 = vpop.xlane.xlu0 %1794
      %v1796 = vsel %vm974, %v1784, 0.0
      %1797 = vadd.xlane.f32.xlu0 %v1796
      %v1798 = vpop.xlane.xlu0 %1797
      %v1799 = vmul.f32 %v1789, %v978
      %v1800 = vmul.f32 %v1792, %v978
      %v1801 = vmul.f32 %v1795, %v978
      %v1802 = vmul.f32 %v1798, %v978
      %v1803 = vsub.f32 %v1773, %v1799
      %v1804 = vsub.f32 %v1776, %v1800
      %v1805 = vsub.f32 %v1781, %v1801
      %v1806 = vsub.f32 %v1784, %v1802
      %v1807 = vmul.f32 %v1803, %v1803
      %v1808 = vmul.f32 %v1804, %v1804
      %v1809 = vmul.f32 %v1805, %v1805
      %v1810 = vmul.f32 %v1806, %v1806
      %v1811 = vsel %vm964, %v1807, 0.0
      %1812 = vadd.xlane.f32.xlu0 %v1811
      %v1813 = vpop.xlane.xlu0 %1812
      %v1814 = vsel %vm964, %v1808, 0.0
      %1815 = vadd.xlane.f32.xlu0 %v1814
      %v1816 = vpop.xlane.xlu0 %1815
      %v1817 = vsel %vm964, %v1809, 0.0
      %1818 = vadd.xlane.f32.xlu0 %v1817
      %v1819 = vpop.xlane.xlu0 %1818
      %v1820 = vsel %vm974, %v1810, 0.0
      %1821 = vadd.xlane.f32.xlu0 %v1820
      %v1822 = vpop.xlane.xlu0 %1821
      %v1823 = vmul.f32 %v1813, %v978
      %v1824 = vmul.f32 %v1816, %v978
      %v1825 = vmul.f32 %v1819, %v978
      %v1826 = vmul.f32 %v1822, %v978
      %v1827 = vadd.f32 %v1823, 1e-05
      %v1828 = vadd.f32 %v1824, 1e-05
      %v1829 = vadd.f32 %v1825, 1e-05
      %v1830 = vadd.f32 %v1826, 1e-05
      %v1831 = vrsqrt.pop %v1827
      %v1832 = vrsqrt.pop %v1828
      %v1833 = vrsqrt.pop %v1829
      %v1834 = vrsqrt.pop %v1830
      %v1835 = vmul.f32 %v1803, %v1831
      %v1836 = vmul.f32 %v1804, %v1832
      %v1837 = vmul.f32 %v1805, %v1833
      %v1838 = vmul.f32 %v1806, %v1834
      %v1839 = vlaneseq
      %v1840 = vshrl.u32 %v1839, 7
      %v1841 = vsub.s32 1, %v1840
      %v1842 = vrot.slane %v1701, %v1841
      %v1843 = vmul.f32 %v1835, %v1842
      %v1844 = vmul.f32 %v1836, %v1842
      %v1845 = vmul.f32 %v1837, %v1842
      %v1846 = vmul.f32 %v1838, %v1842
      %v1847 = vlaneseq
      %v1848 = vshrl.u32 %v1847, 7
      %v1849 = vsub.s32 2, %v1848
      %v1850 = vrot.slane %v1701, %v1849
      %v1851 = vadd.f32 %v1843, %v1850
      %v1852 = vadd.f32 %v1844, %v1850
      %v1853 = vadd.f32 %v1845, %v1850
      %v1854 = vadd.f32 %v1846, %v1850
      %v1855 = vsub.f32 0.0, %v1851
      %v1856 = vsub.f32 0.0, %v1852
      %v1857 = vsub.f32 0.0, %v1853
      %v1858 = vsub.f32 0.0, %v1854
      %v1859 = vmul.f32 %v1855, 1.442695
      %v1860 = vpow.pop %v1859
      %v1861 = vmul.f32 %v1856, 1.442695
      %v1862 = vpow.pop %v1861
      %v1863 = vmul.f32 %v1857, 1.442695
      %v1864 = vpow.pop %v1863
      %v1865 = vmul.f32 %v1858, 1.442695
      %v1866 = vpow.pop %v1865
      %v1867 = vadd.f32 %v1860, 1.0
      %v1868 = vadd.f32 %v1862, 1.0
      %v1869 = vadd.f32 %v1864, 1.0
      %v1870 = vadd.f32 %v1866, 1.0
      %v1871 = vrcp.pop %v1867
      %v1872 = vmul.f32 1.0, %v1871
      %v1873 = vrcp.pop %v1868
      %v1874 = vmul.f32 1.0, %v1873
      %v1875 = vrcp.pop %v1869
      %v1876 = vmul.f32 1.0, %v1875
      %v1877 = vrcp.pop %v1870
      %v1878 = vmul.f32 1.0, %v1877
      %v1879 = vmul.f32 %v1851, %v1872
      %v1880 = vmul.f32 %v1852, %v1874
      %v1881 = vmul.f32 %v1853, %v1876
      %v1882 = vmul.f32 %v1854, %v1878
      %v1883 = vmul.f32 %v1067, %v1879
      %v1884 = vmul.f32 %v1068, %v1880
      %v1885 = vmul.f32 %v1069, %v1881
      %v1886 = vmul.f32 %v1070, %v1882
      %v1887 = vadd.f32 %v1063, %v1883
      %v1888 = vadd.f32 %v1064, %v1884
      %v1889 = vadd.f32 %v1065, %v1885
      %v1890 = vadd.f32 %v1066, %v1886
      %v1891 = vld [vmem:[%s1] sm:$0xff]
      %v1892 = vld [vmem:[%s1 + $0x8] sm:$0xff]
      %v1893 = vld [vmem:[%s1 + $0x10] sm:$0xff]
      %v1894 = vld [vmem:[%s1 + $0x18] sm:$0x3f]
      %v1895 = vmul.f32 %v1887, %v1891
      %v1896 = vmul.f32 %v1888, %v1892
      %v1897 = vmul.f32 %v1889, %v1893
      %v1898 = vmul.f32 %v1890, %v1894
      %v1899 = vld [vmem:[%s1 + $0x40] sm:$0xff]
      %v1900 = vld [vmem:[%s1 + $0x48] sm:$0xff]
      %v1901 = vld [vmem:[%s1 + $0x50] sm:$0xff]
      %v1902 = vld [vmem:[%s1 + $0x58] sm:$0xff]
      %v1904 = vsel %vm964, %v1887, 0
      %v1907 = vsel %vm964, %v1888, 0
      %v1910 = vsel %vm964, %v1889, 0
      %v1913 = vsel %vm964, %v1890, 0
      %1915 = vmatprep.subr.mxu0 0.0
      %1916 = vmatpush1.msra.mxu0 %v1899
      %1917 = vmatprep.subr.mxu0 0.0
      %1918 = vmatpush1.msra.mxu0 %v1900
      %1919 = vmatprep.subr.mxu0 0.0
      %1920 = vmatpush1.msra.mxu0 %v1901
      %1921 = vmatprep.subr.mxu0 0.0
      %1922 = vmatpush1.msra.mxu0 %v1902
      %1923 = vmatprep.subr.mxu0 0.0
      %1924 = vmatpush1.msra.mxu0 0.0
      %1925 = vmatprep.subr.mxu0 0.0
      %1926 = vmatpush1.msra.mxu0 0.0
      %1927 = vmatprep.subr.mxu0 0.0
      %1928 = vmatpush1.msra.mxu0 0.0
      %1929 = vmatprep.subr.mxu0 0.0
      %1930 = vmatpush1.msra.mxu0 0.0
      %1931 = vmatprep.subr.mxu0 0.0
      %1932 = vmatpush1.msra.mxu0 0.0
      %1933 = vmatprep.subr.mxu0 0.0
      %1934 = vmatpush1.msra.mxu0 0.0
      %1935 = vmatprep.subr.mxu0 0.0
      %1936 = vmatpush1.msra.mxu0 0.0
      %1937 = vmatprep.subr.mxu0 0.0
      %1938 = vmatpush1.msra.mxu0 0.0
      %1939 = vmatprep.subr.mxu0 0.0
      %1940 = vmatpush1.msra.mxu0 0.0
      %1941 = vmatprep.subr.mxu0 0.0
      %1942 = vmatpush1.msra.mxu0 0.0
      %1943 = vmatprep.subr.mxu0 0.0
      %1944 = vmatpush1.msra.mxu0 0.0
      %1945 = vmatprep.subr.mxu0 0.0
      %1946 = vmatpush1.msra.mxu0 0.0
      %1947 = vmatprep.subr.mxu0 0.0
      %1948 = vmatpush1.msra.mxu0 0.0
      %1949 = vmatprep.subr.mxu0 0.0
      %1950 = vmatpush1.msra.mxu0 0.0
      %1951 = vmatprep.subr.mxu0 0.0
      %1952 = vmatpush1.msra.mxu0 0.0
      %1953 = vmatprep.subr.mxu0 0.0
      %1954 = vmatpush1.msra.mxu0 0.0
      %1955 = vmatprep.subr.mxu0 0.0
      %1956 = vmatpush1.msra.mxu0 0.0
      %1957 = vmatprep.subr.mxu0 0.0
      %1958 = vmatpush1.msra.mxu0 0.0
      %1959 = vmatprep.subr.mxu0 0.0
      %1960 = vmatpush1.msra.mxu0 0.0
      %1961 = vmatprep.subr.mxu0 0.0
      %1962 = vmatpush1.msra.mxu0 0.0
      %1963 = vmatprep.subr.mxu0 0.0
      %1964 = vmatpush1.msra.mxu0 0.0
      %1965 = vmatprep.subr.mxu0 0.0
      %1966 = vmatpush1.msra.mxu0 0.0
      %1967 = vmatprep.subr.mxu0 0.0
      %1968 = vmatpush1.msra.mxu0 0.0
      %1969 = vmatprep.subr.mxu0 0.0
      %1970 = vmatpush1.msra.mxu0 0.0
      %1971 = vmatprep.subr.mxu0 0.0
      %1972 = vmatpush1.msra.mxu0 0.0
      %1973 = vmatprep.subr.mxu0 0.0
      %1974 = vmatpush1.msra.mxu0 0.0
      %1975 = vmatprep.subr.mxu0 0.0
      %1976 = vmatpush1.msra.mxu0 0.0
      %1977 = vmatprep.subr.mxu0 0.0
      %1978 = vmatpush1.msra.mxu0 0.0
      %1979 = vmatprep.mubr.f32.mxu0 0.0
      %1980 = vmatmul.mubr.f32.gmra.mrb[0].mxu0 %v1904
      %v1981 = vpop.f32.mrb[0].mxu0
      %v1982 = vadd.f32 0.0, %v1981
      %v1983 = vpop.f32.mrb[0].mxu0
      %1984 = vmatprep.mubr.f32.mxu0 0.0
      %1985 = vmatmul.mubr.f32.gmra.mrb[0].mxu0 %v1907
      %v1986 = vpop.f32.mrb[0].mxu0
      %v1987 = vadd.f32 0.0, %v1986
      %v1988 = vpop.f32.mrb[0].mxu0
      %1989 = vmatprep.mubr.f32.mxu0 0.0
      %1990 = vmatmul.mubr.f32.gmra.mrb[0].mxu0 %v1910
      %v1991 = vpop.f32.mrb[0].mxu0
      %v1992 = vadd.f32 0.0, %v1991
      %v1993 = vpop.f32.mrb[0].mxu0
      %1994 = vmatprep.mubr.f32.mxu0 0.0
      %1995 = vmatmul.mubr.f32.gmra.mrb[0].mxu0 %v1913
      %v1996 = vpop.f32.mrb[0].mxu0
      %v1997 = vadd.f32 0.0, %v1996
      %v1998 = vpop.f32.mrb[0].mxu0
      %1999 = vdwg.mxu0
      %v2000 = vld [vmem:[%s1 + $0x20] sm:$0xff]
      %v2001 = vld [vmem:[%s1 + $0x28] sm:$0xff]
      %v2002 = vld [vmem:[%s1 + $0x30] sm:$0xff]
      %v2003 = vld [vmem:[%s1 + $0x38] sm:$0x3f]
      %v2004 = vmul.f32 %v1982, %v2000
      %v2005 = vmul.f32 %v1987, %v2001
      %v2006 = vmul.f32 %v1992, %v2002
      %v2007 = vmul.f32 %v1997, %v2003
      %v2008 = vadd.f32 %v1895, %v2004
      %v2009 = vadd.f32 %v1896, %v2005
      %v2010 = vadd.f32 %v1897, %v2006
      %v2011 = vadd.f32 %v1898, %v2007
      %v2012 = vld [vmem:[%s1 + $0x80] sm:$0xff]
      %v2013 = vld [vmem:[%s1 + $0x88] sm:$0xff]
      %v2014 = vld [vmem:[%s1 + $0x90] sm:$0xff]
      %v2015 = vld [vmem:[%s1 + $0x98] sm:$0x3f]
      %v2016 = vld [vmem:[%s1 + $0xa0] sm:$0xf]
      %v2017 = vld [vmem:[%s1 + $0x258] sm:$0xff]
      %v2018 = vld [vmem:[%s2 + $0x100] sm:$0xf]
      %v2019 = vld [vmem:[%s2 + $0x104] sm:$0xf]
      %v2020 = vld [vmem:[%s2 + $0x108] sm:$0xf]
      %v2021 = vld [vmem:[%s2 + $0x10c] sm:$0xf]
      %v2022 = vpack.c.bf16 %v2009, %v2008
      %v2023 = vpack.c.bf16 %v2011, %v2010
      %v2024 = vlaneseq
      %v2025 = vshrl.u32 %v2024, 7
      %v2026 = vsub.s32 0, %v2025
      %v2027 = vrot.slane %v2017, %v2026
      %v2032 = vunpack.c.l.b16 %v2018
      %v2033 = vunpack.c.l.b16 %v2019
      %v2034 = vunpack.c.l.b16 %v2020
      %v2035 = vunpack.c.l.b16 %v2021
      %v2036 = vpack.c.b16 %v2033, %v2032
      %v2037 = vpack.c.b16 %v2035, %v2034
      %v2041 = vsel %vm964, %v2022, 0
      %v2044 = vsel %vm964, %v2023, 0
      %2046 = vmatprep.subr.bf16.mxu0 0
      %2047 = vmatpush1.bf16.msra.mxu0 %v2036
      %2048 = vmatprep.subr.bf16.mxu0 0
      %2049 = vmatpush1.bf16.msra.mxu0 %v2037
      %2050 = vmatprep.subr.bf16.mxu0 0
      %2051 = vmatpush1.bf16.msra.mxu0 0
      %2052 = vmatprep.subr.bf16.mxu0 0
      %2053 = vmatpush1.bf16.msra.mxu0 0
      %2054 = vmatprep.subr.bf16.mxu0 0
      %2055 = vmatpush1.bf16.msra.mxu0 0
      %2056 = vmatprep.subr.bf16.mxu0 0
      %2057 = vmatpush1.bf16.msra.mxu0 0
      %2058 = vmatprep.subr.bf16.mxu0 0
      %2059 = vmatpush1.bf16.msra.mxu0 0
      %2060 = vmatprep.subr.bf16.mxu0 0
      %2061 = vmatpush1.bf16.msra.mxu0 0
      %2062 = vmatprep.subr.bf16.mxu0 0
      %2063 = vmatpush1.bf16.msra.mxu0 0
      %2064 = vmatprep.subr.bf16.mxu0 0
      %2065 = vmatpush1.bf16.msra.mxu0 0
      %2066 = vmatprep.subr.bf16.mxu0 0
      %2067 = vmatpush1.bf16.msra.mxu0 0
      %2068 = vmatprep.subr.bf16.mxu0 0
      %2069 = vmatpush1.bf16.msra.mxu0 0
      %2070 = vmatprep.subr.bf16.mxu0 0
      %2071 = vmatpush1.bf16.msra.mxu0 0
      %2072 = vmatprep.subr.bf16.mxu0 0
      %2073 = vmatpush1.bf16.msra.mxu0 0
      %2074 = vmatprep.subr.bf16.mxu0 0
      %2075 = vmatpush1.bf16.msra.mxu0 0
      %2076 = vmatprep.subr.bf16.mxu0 0
      %2077 = vmatpush1.bf16.msra.mxu0 0
      %2078 = vmatprep.mubr.bf16.mxu0 0
      %2079 = vmatmul.mubr.bf16.gmra.mrb[0].mxu0 %v2041
      %v2080 = vpop.f32.mrb[0].mxu0
      %v2081 = vadd.f32 %v2027, %v2080
      %v2082 = vpop.f32.mrb[0].mxu0
      %v2083 = vpop.f32.mrb[0].mxu0
      %v2084 = vadd.f32 %v2027, %v2083
      %v2085 = vpop.f32.mrb[0].mxu0
      %2086 = vmatprep.mubr.bf16.mxu0 0
      %2087 = vmatmul.mubr.bf16.gmra.mrb[0].mxu0 %v2044
      %v2088 = vpop.f32.mrb[0].mxu0
      %v2089 = vadd.f32 %v2027, %v2088
      %v2090 = vpop.f32.mrb[0].mxu0
      %v2091 = vpop.f32.mrb[0].mxu0
      %v2092 = vadd.f32 %v2027, %v2091
      %v2093 = vpop.f32.mrb[0].mxu0
      %2094 = vdwg.mxu0
      %2099 = vrot.lane.b32.xlu0 %v2081, 96
      %v2100 = vpop.permute.xlu0 %2099
      %2101 = vrot.lane.b32.xlu0 %v2084, 96
      %v2102 = vpop.permute.xlu0 %2101
      %2103 = vrot.lane.b32.xlu0 %v2089, 96
      %v2104 = vpop.permute.xlu0 %2103
      %2105 = vrot.lane.b32.xlu0 %v2092, 96
      %v2106 = vpop.permute.xlu0 %2105
      %vm2107 = vcmask 64512
      %v2108 = vsel %vm2107, %v2081, 0
      %v2110 = vsel %vm2107, %v2084, 0
      %v2112 = vsel %vm2107, %v2089, 0
      %v2114 = vsel %vm2107, %v2092, 0
      %v2116 = vsel %vm2107, %v2100, 0
      %v2118 = vsel %vm2107, %v2102, 0
      %v2120 = vsel %vm2107, %v2104, 0
      %v2122 = vsel %vm2107, %v2106, 0
      %2124 = vmatprep.subr.mxu0 0.0
      %2125 = vmatpush1.xpose.msra.mxu0 %v2116
      %2126 = vmatprep.subr.mxu0 0.0
      %2127 = vmatpush1.xpose.msra.mxu0 %v2118
      %2128 = vmatprep.subr.mxu0 0.0
      %2129 = vmatpush1.xpose.msra.mxu0 %v2120
      %2130 = vmatprep.subr.mxu0 0.0
      %2131 = vmatpush1.xpose.msra.mxu0 %v2122
      %2132 = vmatprep.subr.mxu0 0.0
      %2133 = vmatpush1.xpose.msra.mxu0 0.0
      %2134 = vmatprep.subr.mxu0 0.0
      %2135 = vmatpush1.xpose.msra.mxu0 0.0
      %2136 = vmatprep.subr.mxu0 0.0
      %2137 = vmatpush1.xpose.msra.mxu0 0.0
      %2138 = vmatprep.subr.mxu0 0.0
      %2139 = vmatpush1.xpose.msra.mxu0 0.0
      %2140 = vmatprep.subr.mxu0 0.0
      %2141 = vmatpush1.xpose.msra.mxu0 0.0
      %2142 = vmatprep.subr.mxu0 0.0
      %2143 = vmatpush1.xpose.msra.mxu0 0.0
      %2144 = vmatprep.subr.mxu0 0.0
      %2145 = vmatpush1.xpose.msra.mxu0 0.0
      %2146 = vmatprep.subr.mxu0 0.0
      %2147 = vmatpush1.xpose.msra.mxu0 0.0
      %2148 = vmatprep.subr.mxu0 0.0
      %2149 = vmatpush1.xpose.msra.mxu0 0.0
      %2150 = vmatprep.subr.mxu0 0.0
      %2151 = vmatpush1.xpose.msra.mxu0 0.0
      %2152 = vmatprep.subr.mxu0 0.0
      %2153 = vmatpush1.xpose.msra.mxu0 0.0
      %2154 = vmatprep.subr.mxu0 0.0
      %2155 = vmatpush1.xpose.msra.mxu0 0.0
      %2156 = vmatprep.subr.mxu0 0.0
      %2157 = vmatpush1.xpose.msra.mxu0 0.0
      %2158 = vmatprep.subr.mxu0 0.0
      %2159 = vmatpush1.xpose.msra.mxu0 0.0
      %2160 = vmatprep.subr.mxu0 0.0
      %2161 = vmatpush1.xpose.msra.mxu0 0.0
      %2162 = vmatprep.subr.mxu0 0.0
      %2163 = vmatpush1.xpose.msra.mxu0 0.0
      %2164 = vmatprep.subr.mxu0 0.0
      %2165 = vmatpush1.xpose.msra.mxu0 0.0
      %2166 = vmatprep.subr.mxu0 0.0
      %2167 = vmatpush1.xpose.msra.mxu0 0.0
      %2168 = vmatprep.subr.mxu0 0.0
      %2169 = vmatpush1.xpose.msra.mxu0 0.0
      %2170 = vmatprep.subr.mxu0 0.0
      %2171 = vmatpush1.xpose.msra.mxu0 0.0
      %2172 = vmatprep.subr.mxu0 0.0
      %2173 = vmatpush1.xpose.msra.mxu0 0.0
      %2174 = vmatprep.subr.mxu0 0.0
      %2175 = vmatpush1.xpose.msra.mxu0 0.0
      %2176 = vmatprep.subr.mxu0 0.0
      %2177 = vmatpush1.xpose.msra.mxu0 0.0
      %2178 = vmatprep.subr.mxu0 0.0
      %2179 = vmatpush1.xpose.msra.mxu0 0.0
      %2180 = vmatprep.subr.mxu0 0.0
      %2181 = vmatpush1.xpose.msra.mxu0 0.0
      %2182 = vmatprep.subr.mxu0 0.0
      %2183 = vmatpush1.xpose.msra.mxu0 0.0
      %2184 = vmatprep.subr.mxu0 0.0
      %2185 = vmatpush1.xpose.msra.mxu0 0.0
      %2186 = vmatprep.subr.mxu0 0.0
      %2187 = vmatpush1.xpose.msra.mxu0 0.0
      %2188 = vmatprep.mubr.f32.mxu0 0.0
      %2189 = vmatmul.mubr.f32.gmra.mrb[0].mxu0 %v2108
      %v2190 = vpop.f32.mrb[0].mxu0
      %v2191 = vadd.f32 0.0, %v2190
      %v2192 = vpop.f32.mrb[0].mxu0
      %2193 = vmatprep.mubr.f32.mxu0 0.0
      %2194 = vmatmul.mubr.f32.gmra.mrb[0].mxu0 %v2110
      %v2195 = vpop.f32.mrb[0].mxu0
      %v2196 = vadd.f32 0.0, %v2195
      %v2197 = vpop.f32.mrb[0].mxu0
      %2198 = vmatprep.mubr.f32.mxu0 0.0
      %2199 = vmatmul.mubr.f32.gmra.mrb[0].mxu0 %v2112
      %v2200 = vpop.f32.mrb[0].mxu0
      %v2201 = vadd.f32 0.0, %v2200
      %v2202 = vpop.f32.mrb[0].mxu0
      %2203 = vmatprep.mubr.f32.mxu0 0.0
      %2204 = vmatmul.mubr.f32.gmra.mrb[0].mxu0 %v2114
      %v2205 = vpop.f32.mrb[0].mxu0
      %v2206 = vadd.f32 0.0, %v2205
      %v2207 = vpop.f32.mrb[0].mxu0
      %2208 = vdwg.mxu0
      %v2209 = vmul.f32 %v2191, 0.35355338
      %v2210 = vmul.f32 %v2196, 0.35355338
      %v2211 = vmul.f32 %v2201, 0.35355338
      %v2212 = vmul.f32 %v2206, 0.35355338
      %v2213 = vadd.f32 %v2209, %v2012
      %v2214 = vadd.f32 %v2210, %v2013
      %v2215 = vadd.f32 %v2211, %v2014
      %v2216 = vadd.f32 %v2212, %v2015
      %vm2217 = vcmask 244736
      %v2218 = vsel %vm2217, %v2213, -inf
      %2219 = vmax.xlane.f32.xlu0 %v2218
      %v2220 = vpop.xlane.xlu0 %2219
      %v2221 = vsel %vm2217, %v2214, -inf
      %2222 = vmax.xlane.f32.xlu0 %v2221
      %v2223 = vpop.xlane.xlu0 %2222
      %v2224 = vsel %vm2217, %v2215, -inf
      %2225 = vmax.xlane.f32.xlu0 %v2224
      %v2226 = vpop.xlane.xlu0 %2225
      %vm2227 = vcmask 242688
      %v2228 = vsel %vm2227, %v2216, -inf
      %2229 = vmax.xlane.f32.xlu0 %v2228
      %v2230 = vpop.xlane.xlu0 %2229
      %v2231 = vsub.f32 %v2213, %v2220
      %v2232 = vsub.f32 %v2214, %v2223
      %v2233 = vsub.f32 %v2215, %v2226
      %v2234 = vsub.f32 %v2216, %v2230
      %v2235 = vmul.f32 %v2231, 1.442695
      %v2236 = vpow.pop %v2235
      %v2237 = vmul.f32 %v2232, 1.442695
      %v2238 = vpow.pop %v2237
      %v2239 = vmul.f32 %v2233, 1.442695
      %v2240 = vpow.pop %v2239
      %v2241 = vmul.f32 %v2234, 1.442695
      %v2242 = vpow.pop %v2241
      %v2243 = vsel %vm2217, %v2236, 0.0
      %2244 = vadd.xlane.f32.xlu0 %v2243
      %v2245 = vpop.xlane.xlu0 %2244
      %v2246 = vsel %vm2217, %v2238, 0.0
      %2247 = vadd.xlane.f32.xlu0 %v2246
      %v2248 = vpop.xlane.xlu0 %2247
      %v2249 = vsel %vm2217, %v2240, 0.0
      %2250 = vadd.xlane.f32.xlu0 %v2249
      %v2251 = vpop.xlane.xlu0 %2250
      %v2252 = vsel %vm2227, %v2242, 0.0
      %2253 = vadd.xlane.f32.xlu0 %v2252
      %v2254 = vpop.xlane.xlu0 %2253
      %v2255 = vrcp.pop %v2245
      %v2256 = vmul.f32 1.0, %v2255
      %v2257 = vrcp.pop %v2248
      %v2258 = vmul.f32 1.0, %v2257
      %v2259 = vrcp.pop %v2251
      %v2260 = vmul.f32 1.0, %v2259
      %v2261 = vrcp.pop %v2254
      %v2262 = vmul.f32 1.0, %v2261
      %v2263 = vmul.f32 %v2236, %v2256
      %v2264 = vmul.f32 %v2238, %v2258
      %v2265 = vmul.f32 %v2240, %v2260
      %v2266 = vmul.f32 %v2242, %v2262
      %v2267 = vadd.f32 %v2263, 0.0
      %v2268 = vadd.f32 %v2264, 0.0
      %v2269 = vadd.f32 %v2265, 0.0
      %v2270 = vadd.f32 %v2266, 0.0
      %v2271 = vlaneseq
      %v2272 = vshrl.u32 %v2271, 7
      %v2273 = vsub.s32 0, %v2272
      %v2274 = vrot.slane %v2016, %v2273
      %2276 = vrot.lane.b32.xlu0 %v2274, 64
      %v2277 = vpop.permute.xlu0 %2276
      %v2279 = vmul.f32 %v2081, %v2277
      %v2280 = vmul.f32 %v2084, %v2277
      %v2281 = vmul.f32 %v2089, %v2277
      %v2282 = vmul.f32 %v2092, %v2277
      %v2283 = vpack.c.bf16 %v2280, %v2279
      %v2284 = vpack.c.bf16 %v2282, %v2281
      %v2285 = vpack.c.bf16 %v2264, %v2263
      %v2286 = vpack.c.bf16 %v2266, %v2265
      %2287 = vrot.lane.b32.xlu0 %v2081, 120
      %v2288 = vpop.permute.xlu0 %2287
      %2289 = vrot.lane.b32.xlu0 %v2084, 120
      %v2290 = vpop.permute.xlu0 %2289
      %2291 = vrot.lane.b32.xlu0 %v2089, 120
      %v2292 = vpop.permute.xlu0 %2291
      %2293 = vrot.lane.b32.xlu0 %v2092, 120
      %v2294 = vpop.permute.xlu0 %2293
      %2295 = vrot.lane.b32.xlu0 %v2081, 88
      %v2296 = vpop.permute.xlu0 %2295
      %2297 = vrot.lane.b32.xlu0 %v2084, 88
      %v2298 = vpop.permute.xlu0 %2297
      %2299 = vrot.lane.b32.xlu0 %v2089, 88
      %v2300 = vpop.permute.xlu0 %2299
      %2301 = vrot.lane.b32.xlu0 %v2092, 88
      %v2302 = vpop.permute.xlu0 %2301
      %v2303 = vsel %vm2107, %v2288, 0
      %v2305 = vsel %vm2107, %v2290, 0
      %v2307 = vsel %vm2107, %v2292, 0
      %v2309 = vsel %vm2107, %v2294, 0
      %v2311 = vsel %vm2107, %v2296, 0
      %v2313 = vsel %vm2107, %v2298, 0
      %v2315 = vsel %vm2107, %v2300, 0
      %v2317 = vsel %vm2107, %v2302, 0
      %2319 = vmatprep.subr.mxu0 0.0
      %2320 = vmatpush1.xpose.msra.mxu0 %v2311
      %2321 = vmatprep.subr.mxu0 0.0
      %2322 = vmatpush1.xpose.msra.mxu0 %v2313
      %2323 = vmatprep.subr.mxu0 0.0
      %2324 = vmatpush1.xpose.msra.mxu0 %v2315
      %2325 = vmatprep.subr.mxu0 0.0
      %2326 = vmatpush1.xpose.msra.mxu0 %v2317
      %2327 = vmatprep.subr.mxu0 0.0
      %2328 = vmatpush1.xpose.msra.mxu0 0.0
      %2329 = vmatprep.subr.mxu0 0.0
      %2330 = vmatpush1.xpose.msra.mxu0 0.0
      %2331 = vmatprep.subr.mxu0 0.0
      %2332 = vmatpush1.xpose.msra.mxu0 0.0
      %2333 = vmatprep.subr.mxu0 0.0
      %2334 = vmatpush1.xpose.msra.mxu0 0.0
      %2335 = vmatprep.subr.mxu0 0.0
      %2336 = vmatpush1.xpose.msra.mxu0 0.0
      %2337 = vmatprep.subr.mxu0 0.0
      %2338 = vmatpush1.xpose.msra.mxu0 0.0
      %2339 = vmatprep.subr.mxu0 0.0
      %2340 = vmatpush1.xpose.msra.mxu0 0.0
      %2341 = vmatprep.subr.mxu0 0.0
      %2342 = vmatpush1.xpose.msra.mxu0 0.0
      %2343 = vmatprep.subr.mxu0 0.0
      %2344 = vmatpush1.xpose.msra.mxu0 0.0
      %2345 = vmatprep.subr.mxu0 0.0
      %2346 = vmatpush1.xpose.msra.mxu0 0.0
      %2347 = vmatprep.subr.mxu0 0.0
      %2348 = vmatpush1.xpose.msra.mxu0 0.0
      %2349 = vmatprep.subr.mxu0 0.0
      %2350 = vmatpush1.xpose.msra.mxu0 0.0
      %2351 = vmatprep.subr.mxu0 0.0
      %2352 = vmatpush1.xpose.msra.mxu0 0.0
      %2353 = vmatprep.subr.mxu0 0.0
      %2354 = vmatpush1.xpose.msra.mxu0 0.0
      %2355 = vmatprep.subr.mxu0 0.0
      %2356 = vmatpush1.xpose.msra.mxu0 0.0
      %2357 = vmatprep.subr.mxu0 0.0
      %2358 = vmatpush1.xpose.msra.mxu0 0.0
      %2359 = vmatprep.subr.mxu0 0.0
      %2360 = vmatpush1.xpose.msra.mxu0 0.0
      %2361 = vmatprep.subr.mxu0 0.0
      %2362 = vmatpush1.xpose.msra.mxu0 0.0
      %2363 = vmatprep.subr.mxu0 0.0
      %2364 = vmatpush1.xpose.msra.mxu0 0.0
      %2365 = vmatprep.subr.mxu0 0.0
      %2366 = vmatpush1.xpose.msra.mxu0 0.0
      %2367 = vmatprep.subr.mxu0 0.0
      %2368 = vmatpush1.xpose.msra.mxu0 0.0
      %2369 = vmatprep.subr.mxu0 0.0
      %2370 = vmatpush1.xpose.msra.mxu0 0.0
      %2371 = vmatprep.subr.mxu0 0.0
      %2372 = vmatpush1.xpose.msra.mxu0 0.0
      %2373 = vmatprep.subr.mxu0 0.0
      %2374 = vmatpush1.xpose.msra.mxu0 0.0
      %2375 = vmatprep.subr.mxu0 0.0
      %2376 = vmatpush1.xpose.msra.mxu0 0.0
      %2377 = vmatprep.subr.mxu0 0.0
      %2378 = vmatpush1.xpose.msra.mxu0 0.0
      %2379 = vmatprep.subr.mxu0 0.0
      %2380 = vmatpush1.xpose.msra.mxu0 0.0
      %2381 = vmatprep.subr.mxu0 0.0
      %2382 = vmatpush1.xpose.msra.mxu0 0.0
      %2383 = vmatprep.mubr.f32.mxu0 0.0
      %2384 = vmatmul.mubr.f32.gmra.mrb[0].mxu0 %v2303
      %v2385 = vpop.f32.mrb[0].mxu0
      %v2386 = vadd.f32 0.0, %v2385
      %v2387 = vpop.f32.mrb[0].mxu0
      %2388 = vmatprep.mubr.f32.mxu0 0.0
      %2389 = vmatmul.mubr.f32.gmra.mrb[0].mxu0 %v2305
      %v2390 = vpop.f32.mrb[0].mxu0
      %v2391 = vadd.f32 0.0, %v2390
      %v2392 = vpop.f32.mrb[0].mxu0
      %2393 = vmatprep.mubr.f32.mxu0 0.0
      %2394 = vmatmul.mubr.f32.gmra.mrb[0].mxu0 %v2307
      %v2395 = vpop.f32.mrb[0].mxu0
      %v2396 = vadd.f32 0.0, %v2395
      %v2397 = vpop.f32.mrb[0].mxu0
      %2398 = vmatprep.mubr.f32.mxu0 0.0
      %2399 = vmatmul.mubr.f32.gmra.mrb[0].mxu0 %v2309
      %v2400 = vpop.f32.mrb[0].mxu0
      %v2401 = vadd.f32 0.0, %v2400
      %v2402 = vpop.f32.mrb[0].mxu0
      %2403 = vdwg.mxu0
      %v2404 = vmul.f32 %v2386, 0.35355338
      %v2405 = vmul.f32 %v2391, 0.35355338
      %v2406 = vmul.f32 %v2396, 0.35355338
      %v2407 = vmul.f32 %v2401, 0.35355338
      %v2408 = vadd.f32 %v2404, %v2012
      %v2409 = vadd.f32 %v2405, %v2013
      %v2410 = vadd.f32 %v2406, %v2014
      %v2411 = vadd.f32 %v2407, %v2015
      %v2412 = vsel %vm2217, %v2408, -inf
      %2413 = vmax.xlane.f32.xlu0 %v2412
      %v2414 = vpop.xlane.xlu0 %2413
      %v2415 = vsel %vm2217, %v2409, -inf
      %2416 = vmax.xlane.f32.xlu0 %v2415
      %v2417 = vpop.xlane.xlu0 %2416
      %v2418 = vsel %vm2217, %v2410, -inf
      %2419 = vmax.xlane.f32.xlu0 %v2418
      %v2420 = vpop.xlane.xlu0 %2419
      %v2421 = vsel %vm2227, %v2411, -inf
      %2422 = vmax.xlane.f32.xlu0 %v2421
      %v2423 = vpop.xlane.xlu0 %2422
      %v2424 = vsub.f32 %v2408, %v2414
      %v2425 = vsub.f32 %v2409, %v2417
      %v2426 = vsub.f32 %v2410, %v2420
      %v2427 = vsub.f32 %v2411, %v2423
      %v2428 = vmul.f32 %v2424, 1.442695
      %v2429 = vpow.pop %v2428
      %v2430 = vmul.f32 %v2425, 1.442695
      %v2431 = vpow.pop %v2430
      %v2432 = vmul.f32 %v2426, 1.442695
      %v2433 = vpow.pop %v2432
      %v2434 = vmul.f32 %v2427, 1.442695
      %v2435 = vpow.pop %v2434
      %v2436 = vsel %vm2217, %v2429, 0.0
      %2437 = vadd.xlane.f32.xlu0 %v2436
      %v2438 = vpop.xlane.xlu0 %2437
      %v2439 = vsel %vm2217, %v2431, 0.0
      %2440 = vadd.xlane.f32.xlu0 %v2439
      %v2441 = vpop.xlane.xlu0 %2440
      %v2442 = vsel %vm2217, %v2433, 0.0
      %2443 = vadd.xlane.f32.xlu0 %v2442
      %v2444 = vpop.xlane.xlu0 %2443
      %v2445 = vsel %vm2227, %v2435, 0.0
      %2446 = vadd.xlane.f32.xlu0 %v2445
      %v2447 = vpop.xlane.xlu0 %2446
      %v2448 = vrcp.pop %v2438
      %v2449 = vmul.f32 1.0, %v2448
      %v2450 = vrcp.pop %v2441
      %v2451 = vmul.f32 1.0, %v2450
      %v2452 = vrcp.pop %v2444
      %v2453 = vmul.f32 1.0, %v2452
      %v2454 = vrcp.pop %v2447
      %v2455 = vmul.f32 1.0, %v2454
      %v2456 = vmul.f32 %v2429, %v2449
      %v2457 = vmul.f32 %v2431, %v2451
      %v2458 = vmul.f32 %v2433, %v2453
      %v2459 = vmul.f32 %v2435, %v2455
      %v2460 = vadd.f32 %v2267, %v2456
      %v2461 = vadd.f32 %v2268, %v2457
      %v2462 = vadd.f32 %v2269, %v2458
      %v2463 = vadd.f32 %v2270, %v2459
      %v2464 = vlaneseq
      %v2465 = vshrl.u32 %v2464, 7
      %v2466 = vsub.s32 1, %v2465
      %v2467 = vrot.slane %v2016, %v2466
      %2469 = vrot.lane.b32.xlu0 %v2467, 64
      %v2470 = vpop.permute.xlu0 %2469
      %v2472 = vmul.f32 %v2081, %v2470
      %v2473 = vmul.f32 %v2084, %v2470
      %v2474 = vmul.f32 %v2089, %v2470
      %v2475 = vmul.f32 %v2092, %v2470
      %v2476 = vpack.c.bf16 %v2473, %v2472
      %v2477 = vpack.c.bf16 %v2475, %v2474
      %v2478 = vpack.c.bf16 %v2457, %v2456
      %v2479 = vpack.c.bf16 %v2459, %v2458
      %2482 = vrot.lane.b32.xlu0 %v2476, 64
      %v2483 = vpop.permute.xlu0 %2482
      %2484 = vrot.lane.b32.xlu0 %v2477, 64
      %v2485 = vpop.permute.xlu0 %2484
      %v2488 = vsel %vm2217, %v2478, 0
      %v2491 = vsel %vm2217, %v2479, 0
      %vm2493 = vcmask 1046528
      %v2495 = vsel %vm2493, %v2485, 0
      %2497 = vmatprep.subr.bf16.mxu0 0
      %2498 = vmatpush1.bf16.msra.mxu0 %v2483
      %2499 = vmatprep.subr.bf16.mxu0 0
      %2500 = vmatpush1.bf16.msra.mxu0 %v2495
      %2501 = vmatprep.subr.bf16.mxu0 0
      %2502 = vmatpush1.bf16.msra.mxu0 0
      %2503 = vmatprep.subr.bf16.mxu0 0
      %2504 = vmatpush1.bf16.msra.mxu0 0
      %2505 = vmatprep.subr.bf16.mxu0 0
      %2506 = vmatpush1.bf16.msra.mxu0 0
      %2507 = vmatprep.subr.bf16.mxu0 0
      %2508 = vmatpush1.bf16.msra.mxu0 0
      %2509 = vmatprep.subr.bf16.mxu0 0
      %2510 = vmatpush1.bf16.msra.mxu0 0
      %2511 = vmatprep.subr.bf16.mxu0 0
      %2512 = vmatpush1.bf16.msra.mxu0 0
      %2513 = vmatprep.subr.bf16.mxu0 0
      %2514 = vmatpush1.bf16.msra.mxu0 0
      %2515 = vmatprep.subr.bf16.mxu0 0
      %2516 = vmatpush1.bf16.msra.mxu0 0
      %2517 = vmatprep.subr.bf16.mxu0 0
      %2518 = vmatpush1.bf16.msra.mxu0 0
      %2519 = vmatprep.subr.bf16.mxu0 0
      %2520 = vmatpush1.bf16.msra.mxu0 0
      %2521 = vmatprep.subr.bf16.mxu0 0
      %2522 = vmatpush1.bf16.msra.mxu0 0
      %2523 = vmatprep.subr.bf16.mxu0 0
      %2524 = vmatpush1.bf16.msra.mxu0 0
      %2525 = vmatprep.subr.bf16.mxu0 0
      %2526 = vmatpush1.bf16.msra.mxu0 0
      %2527 = vmatprep.subr.bf16.mxu0 0
      %2528 = vmatpush1.bf16.msra.mxu0 0
      %2529 = vmatprep.mubr.bf16.mxu0 0
      %2530 = vmatmul.mubr.bf16.gmra.mrb[0].mxu0 %v2488
      %v2531 = vpop.f32.mrb[0].mxu0
      %v2532 = vadd.f32 0.0, %v2531
      %v2533 = vpop.f32.mrb[0].mxu0
      %v2534 = vpop.f32.mrb[0].mxu0
      %v2535 = vadd.f32 0.0, %v2534
      %v2536 = vpop.f32.mrb[0].mxu0
      %2537 = vmatprep.mubr.bf16.mxu0 0
      %2538 = vmatmul.mubr.bf16.gmra.mrb[0].mxu0 %v2491
      %v2539 = vpop.f32.mrb[0].mxu0
      %v2540 = vadd.f32 0.0, %v2539
      %v2541 = vpop.f32.mrb[0].mxu0
      %v2542 = vpop.f32.mrb[0].mxu0
      %v2543 = vadd.f32 0.0, %v2542
      %v2544 = vpop.f32.mrb[0].mxu0
      %2545 = vdwg.mxu0
      %2548 = vrot.lane.b32.xlu0 %v2283, 64
      %v2549 = vpop.permute.xlu0 %2548
      %2550 = vrot.lane.b32.xlu0 %v2284, 64
      %v2551 = vpop.permute.xlu0 %2550
      %v2554 = vsel %vm2217, %v2285, 0
      %v2557 = vsel %vm2217, %v2286, 0
      %v2560 = vsel %vm2493, %v2551, 0
      %2562 = vmatprep.subr.bf16.mxu0 0
      %2563 = vmatpush1.bf16.msra.mxu0 %v2549
      %2564 = vmatprep.subr.bf16.mxu0 0
      %2565 = vmatpush1.bf16.msra.mxu0 %v2560
      %2566 = vmatprep.subr.bf16.mxu0 0
      %2567 = vmatpush1.bf16.msra.mxu0 0
      %2568 = vmatprep.subr.bf16.mxu0 0
      %2569 = vmatpush1.bf16.msra.mxu0 0
      %2570 = vmatprep.subr.bf16.mxu0 0
      %2571 = vmatpush1.bf16.msra.mxu0 0
      %2572 = vmatprep.subr.bf16.mxu0 0
      %2573 = vmatpush1.bf16.msra.mxu0 0
      %2574 = vmatprep.subr.bf16.mxu0 0
      %2575 = vmatpush1.bf16.msra.mxu0 0
      %2576 = vmatprep.subr.bf16.mxu0 0
      %2577 = vmatpush1.bf16.msra.mxu0 0
      %2578 = vmatprep.subr.bf16.mxu0 0
      %2579 = vmatpush1.bf16.msra.mxu0 0
      %2580 = vmatprep.subr.bf16.mxu0 0
      %2581 = vmatpush1.bf16.msra.mxu0 0
      %2582 = vmatprep.subr.bf16.mxu0 0
      %2583 = vmatpush1.bf16.msra.mxu0 0
      %2584 = vmatprep.subr.bf16.mxu0 0
      %2585 = vmatpush1.bf16.msra.mxu0 0
      %2586 = vmatprep.subr.bf16.mxu0 0
      %2587 = vmatpush1.bf16.msra.mxu0 0
      %2588 = vmatprep.subr.bf16.mxu0 0
      %2589 = vmatpush1.bf16.msra.mxu0 0
      %2590 = vmatprep.subr.bf16.mxu0 0
      %2591 = vmatpush1.bf16.msra.mxu0 0
      %2592 = vmatprep.subr.bf16.mxu0 0
      %2593 = vmatpush1.bf16.msra.mxu0 0
      %2594 = vmatprep.mubr.bf16.mxu0 0
      %2595 = vmatmul.mubr.bf16.gmra.mrb[0].mxu0 %v2554
      %v2596 = vpop.f32.mrb[0].mxu0
      %v2597 = vadd.f32 %v2532, %v2596
      %v2598 = vpop.f32.mrb[0].mxu0
      %v2599 = vpop.f32.mrb[0].mxu0
      %v2600 = vadd.f32 %v2535, %v2599
      %v2601 = vpop.f32.mrb[0].mxu0
      %2602 = vmatprep.mubr.bf16.mxu0 0
      %2603 = vmatmul.mubr.bf16.gmra.mrb[0].mxu0 %v2557
      %v2604 = vpop.f32.mrb[0].mxu0
      %v2605 = vadd.f32 %v2540, %v2604
      %v2606 = vpop.f32.mrb[0].mxu0
      %v2607 = vpop.f32.mrb[0].mxu0
      %v2608 = vadd.f32 %v2543, %v2607
      %v2609 = vpop.f32.mrb[0].mxu0
      %2610 = vdwg.mxu0
      %2611 = vrot.lane.b32.xlu0 %v2081, 112
      %v2612 = vpop.permute.xlu0 %2611
      %2613 = vrot.lane.b32.xlu0 %v2084, 112
      %v2614 = vpop.permute.xlu0 %2613
      %2615 = vrot.lane.b32.xlu0 %v2089, 112
      %v2616 = vpop.permute.xlu0 %2615
      %2617 = vrot.lane.b32.xlu0 %v2092, 112
      %v2618 = vpop.permute.xlu0 %2617
      %2619 = vrot.lane.b32.xlu0 %v2081, 80
      %v2620 = vpop.permute.xlu0 %2619
      %2621 = vrot.lane.b32.xlu0 %v2084, 80
      %v2622 = vpop.permute.xlu0 %2621
      %2623 = vrot.lane.b32.xlu0 %v2089, 80
      %v2624 = vpop.permute.xlu0 %2623
      %2625 = vrot.lane.b32.xlu0 %v2092, 80
      %v2626 = vpop.permute.xlu0 %2625
      %v2627 = vsel %vm2107, %v2612, 0
      %v2629 = vsel %vm2107, %v2614, 0
      %v2631 = vsel %vm2107, %v2616, 0
      %v2633 = vsel %vm2107, %v2618, 0
      %v2635 = vsel %vm2107, %v2620, 0
      %v2637 = vsel %vm2107, %v2622, 0
      %v2639 = vsel %vm2107, %v2624, 0
      %v2641 = vsel %vm2107, %v2626, 0
      %2643 = vmatprep.subr.mxu0 0.0
      %2644 = vmatpush1.xpose.msra.mxu0 %v2635
      %2645 = vmatprep.subr.mxu0 0.0
      %2646 = vmatpush1.xpose.msra.mxu0 %v2637
      %2647 = vmatprep.subr.mxu0 0.0
      %2648 = vmatpush1.xpose.msra.mxu0 %v2639
      %2649 = vmatprep.subr.mxu0 0.0
      %2650 = vmatpush1.xpose.msra.mxu0 %v2641
      %2651 = vmatprep.subr.mxu0 0.0
      %2652 = vmatpush1.xpose.msra.mxu0 0.0
      %2653 = vmatprep.subr.mxu0 0.0
      %2654 = vmatpush1.xpose.msra.mxu0 0.0
      %2655 = vmatprep.subr.mxu0 0.0
      %2656 = vmatpush1.xpose.msra.mxu0 0.0
      %2657 = vmatprep.subr.mxu0 0.0
      %2658 = vmatpush1.xpose.msra.mxu0 0.0
      %2659 = vmatprep.subr.mxu0 0.0
      %2660 = vmatpush1.xpose.msra.mxu0 0.0
      %2661 = vmatprep.subr.mxu0 0.0
      %2662 = vmatpush1.xpose.msra.mxu0 0.0
      %2663 = vmatprep.subr.mxu0 0.0
      %2664 = vmatpush1.xpose.msra.mxu0 0.0
      %2665 = vmatprep.subr.mxu0 0.0
      %2666 = vmatpush1.xpose.msra.mxu0 0.0
      %2667 = vmatprep.subr.mxu0 0.0
      %2668 = vmatpush1.xpose.msra.mxu0 0.0
      %2669 = vmatprep.subr.mxu0 0.0
      %2670 = vmatpush1.xpose.msra.mxu0 0.0
      %2671 = vmatprep.subr.mxu0 0.0
      %2672 = vmatpush1.xpose.msra.mxu0 0.0
      %2673 = vmatprep.subr.mxu0 0.0
      %2674 = vmatpush1.xpose.msra.mxu0 0.0
      %2675 = vmatprep.subr.mxu0 0.0
      %2676 = vmatpush1.xpose.msra.mxu0 0.0
      %2677 = vmatprep.subr.mxu0 0.0
      %2678 = vmatpush1.xpose.msra.mxu0 0.0
      %2679 = vmatprep.subr.mxu0 0.0
      %2680 = vmatpush1.xpose.msra.mxu0 0.0
      %2681 = vmatprep.subr.mxu0 0.0
      %2682 = vmatpush1.xpose.msra.mxu0 0.0
      %2683 = vmatprep.subr.mxu0 0.0
      %2684 = vmatpush1.xpose.msra.mxu0 0.0
      %2685 = vmatprep.subr.mxu0 0.0
      %2686 = vmatpush1.xpose.msra.mxu0 0.0
      %2687 = vmatprep.subr.mxu0 0.0
      %2688 = vmatpush1.xpose.msra.mxu0 0.0
      %2689 = vmatprep.subr.mxu0 0.0
      %2690 = vmatpush1.xpose.msra.mxu0 0.0
      %2691 = vmatprep.subr.mxu0 0.0
      %2692 = vmatpush1.xpose.msra.mxu0 0.0
      %2693 = vmatprep.subr.mxu0 0.0
      %2694 = vmatpush1.xpose.msra.mxu0 0.0
      %2695 = vmatprep.subr.mxu0 0.0
      %2696 = vmatpush1.xpose.msra.mxu0 0.0
      %2697 = vmatprep.subr.mxu0 0.0
      %2698 = vmatpush1.xpose.msra.mxu0 0.0
      %2699 = vmatprep.subr.mxu0 0.0
      %2700 = vmatpush1.xpose.msra.mxu0 0.0
      %2701 = vmatprep.subr.mxu0 0.0
      %2702 = vmatpush1.xpose.msra.mxu0 0.0
      %2703 = vmatprep.subr.mxu0 0.0
      %2704 = vmatpush1.xpose.msra.mxu0 0.0
      %2705 = vmatprep.subr.mxu0 0.0
      %2706 = vmatpush1.xpose.msra.mxu0 0.0
      %2707 = vmatprep.mubr.f32.mxu0 0.0
      %2708 = vmatmul.mubr.f32.gmra.mrb[0].mxu0 %v2627
      %v2709 = vpop.f32.mrb[0].mxu0
      %v2710 = vadd.f32 0.0, %v2709
      %v2711 = vpop.f32.mrb[0].mxu0
      %2712 = vmatprep.mubr.f32.mxu0 0.0
      %2713 = vmatmul.mubr.f32.gmra.mrb[0].mxu0 %v2629
      %v2714 = vpop.f32.mrb[0].mxu0
      %v2715 = vadd.f32 0.0, %v2714
      %v2716 = vpop.f32.mrb[0].mxu0
      %2717 = vmatprep.mubr.f32.mxu0 0.0
      %2718 = vmatmul.mubr.f32.gmra.mrb[0].mxu0 %v2631
      %v2719 = vpop.f32.mrb[0].mxu0
      %v2720 = vadd.f32 0.0, %v2719
      %v2721 = vpop.f32.mrb[0].mxu0
      %2722 = vmatprep.mubr.f32.mxu0 0.0
      %2723 = vmatmul.mubr.f32.gmra.mrb[0].mxu0 %v2633
      %v2724 = vpop.f32.mrb[0].mxu0
      %v2725 = vadd.f32 0.0, %v2724
      %v2726 = vpop.f32.mrb[0].mxu0
      %2727 = vdwg.mxu0
      %v2728 = vmul.f32 %v2710, 0.35355338
      %v2729 = vmul.f32 %v2715, 0.35355338
      %v2730 = vmul.f32 %v2720, 0.35355338
      %v2731 = vmul.f32 %v2725, 0.35355338
      %v2732 = vadd.f32 %v2728, %v2012
      %v2733 = vadd.f32 %v2729, %v2013
      %v2734 = vadd.f32 %v2730, %v2014
      %v2735 = vadd.f32 %v2731, %v2015
      %v2736 = vsel %vm2217, %v2732, -inf
      %2737 = vmax.xlane.f32.xlu0 %v2736
      %v2738 = vpop.xlane.xlu0 %2737
      %v2739 = vsel %vm2217, %v2733, -inf
      %2740 = vmax.xlane.f32.xlu0 %v2739
      %v2741 = vpop.xlane.xlu0 %2740
      %v2742 = vsel %vm2217, %v2734, -inf
      %2743 = vmax.xlane.f32.xlu0 %v2742
      %v2744 = vpop.xlane.xlu0 %2743
      %v2745 = vsel %vm2227, %v2735, -inf
      %2746 = vmax.xlane.f32.xlu0 %v2745
      %v2747 = vpop.xlane.xlu0 %2746
      %v2748 = vsub.f32 %v2732, %v2738
      %v2749 = vsub.f32 %v2733, %v2741
      %v2750 = vsub.f32 %v2734, %v2744
      %v2751 = vsub.f32 %v2735, %v2747
      %v2752 = vmul.f32 %v2748, 1.442695
      %v2753 = vpow.pop %v2752
      %v2754 = vmul.f32 %v2749, 1.442695
      %v2755 = vpow.pop %v2754
      %v2756 = vmul.f32 %v2750, 1.442695
      %v2757 = vpow.pop %v2756
      %v2758 = vmul.f32 %v2751, 1.442695
      %v2759 = vpow.pop %v2758
      %v2760 = vsel %vm2217, %v2753, 0.0
      %2761 = vadd.xlane.f32.xlu0 %v2760
      %v2762 = vpop.xlane.xlu0 %2761
      %v2763 = vsel %vm2217, %v2755, 0.0
      %2764 = vadd.xlane.f32.xlu0 %v2763
      %v2765 = vpop.xlane.xlu0 %2764
      %v2766 = vsel %vm2217, %v2757, 0.0
      %2767 = vadd.xlane.f32.xlu0 %v2766
      %v2768 = vpop.xlane.xlu0 %2767
      %v2769 = vsel %vm2227, %v2759, 0.0
      %2770 = vadd.xlane.f32.xlu0 %v2769
      %v2771 = vpop.xlane.xlu0 %2770
      %v2772 = vrcp.pop %v2762
      %v2773 = vmul.f32 1.0, %v2772
      %v2774 = vrcp.pop %v2765
      %v2775 = vmul.f32 1.0, %v2774
      %v2776 = vrcp.pop %v2768
      %v2777 = vmul.f32 1.0, %v2776
      %v2778 = vrcp.pop %v2771
      %v2779 = vmul.f32 1.0, %v2778
      %v2780 = vmul.f32 %v2753, %v2773
      %v2781 = vmul.f32 %v2755, %v2775
      %v2782 = vmul.f32 %v2757, %v2777
      %v2783 = vmul.f32 %v2759, %v2779
      %v2784 = vadd.f32 %v2460, %v2780
      %v2785 = vadd.f32 %v2461, %v2781
      %v2786 = vadd.f32 %v2462, %v2782
      %v2787 = vadd.f32 %v2463, %v2783
      %v2788 = vlaneseq
      %v2789 = vshrl.u32 %v2788, 7
      %v2790 = vsub.s32 2, %v2789
      %v2791 = vrot.slane %v2016, %v2790
      %2793 = vrot.lane.b32.xlu0 %v2791, 64
      %v2794 = vpop.permute.xlu0 %2793
      %v2796 = vmul.f32 %v2081, %v2794
      %v2797 = vmul.f32 %v2084, %v2794
      %v2798 = vmul.f32 %v2089, %v2794
      %v2799 = vmul.f32 %v2092, %v2794
      %v2800 = vpack.c.bf16 %v2797, %v2796
      %v2801 = vpack.c.bf16 %v2799, %v2798
      %v2802 = vpack.c.bf16 %v2781, %v2780
      %v2803 = vpack.c.bf16 %v2783, %v2782
      %2806 = vrot.lane.b32.xlu0 %v2800, 64
      %v2807 = vpop.permute.xlu0 %2806
      %2808 = vrot.lane.b32.xlu0 %v2801, 64
      %v2809 = vpop.permute.xlu0 %2808
      %v2812 = vsel %vm2217, %v2802, 0
      %v2815 = vsel %vm2217, %v2803, 0
      %v2818 = vsel %vm2493, %v2809, 0
      %2820 = vmatprep.subr.bf16.mxu0 0
      %2821 = vmatpush1.bf16.msra.mxu0 %v2807
      %2822 = vmatprep.subr.bf16.mxu0 0
      %2823 = vmatpush1.bf16.msra.mxu0 %v2818
      %2824 = vmatprep.subr.bf16.mxu0 0
      %2825 = vmatpush1.bf16.msra.mxu0 0
      %2826 = vmatprep.subr.bf16.mxu0 0
      %2827 = vmatpush1.bf16.msra.mxu0 0
      %2828 = vmatprep.subr.bf16.mxu0 0
      %2829 = vmatpush1.bf16.msra.mxu0 0
      %2830 = vmatprep.subr.bf16.mxu0 0
      %2831 = vmatpush1.bf16.msra.mxu0 0
      %2832 = vmatprep.subr.bf16.mxu0 0
      %2833 = vmatpush1.bf16.msra.mxu0 0
      %2834 = vmatprep.subr.bf16.mxu0 0
      %2835 = vmatpush1.bf16.msra.mxu0 0
      %2836 = vmatprep.subr.bf16.mxu0 0
      %2837 = vmatpush1.bf16.msra.mxu0 0
      %2838 = vmatprep.subr.bf16.mxu0 0
      %2839 = vmatpush1.bf16.msra.mxu0 0
      %2840 = vmatprep.subr.bf16.mxu0 0
      %2841 = vmatpush1.bf16.msra.mxu0 0
      %2842 = vmatprep.subr.bf16.mxu0 0
      %2843 = vmatpush1.bf16.msra.mxu0 0
      %2844 = vmatprep.subr.bf16.mxu0 0
      %2845 = vmatpush1.bf16.msra.mxu0 0
      %2846 = vmatprep.subr.bf16.mxu0 0
      %2847 = vmatpush1.bf16.msra.mxu0 0
      %2848 = vmatprep.subr.bf16.mxu0 0
      %2849 = vmatpush1.bf16.msra.mxu0 0
      %2850 = vmatprep.subr.bf16.mxu0 0
      %2851 = vmatpush1.bf16.msra.mxu0 0
      %2852 = vmatprep.mubr.bf16.mxu0 0
      %2853 = vmatmul.mubr.bf16.gmra.mrb[0].mxu0 %v2812
      %v2854 = vpop.f32.mrb[0].mxu0
      %v2855 = vadd.f32 0.0, %v2854
      %v2856 = vpop.f32.mrb[0].mxu0
      %v2857 = vpop.f32.mrb[0].mxu0
      %v2858 = vadd.f32 0.0, %v2857
      %v2859 = vpop.f32.mrb[0].mxu0
      %2860 = vmatprep.mubr.bf16.mxu0 0
      %2861 = vmatmul.mubr.bf16.gmra.mrb[0].mxu0 %v2815
      %v2862 = vpop.f32.mrb[0].mxu0
      %v2863 = vadd.f32 0.0, %v2862
      %v2864 = vpop.f32.mrb[0].mxu0
      %v2865 = vpop.f32.mrb[0].mxu0
      %v2866 = vadd.f32 0.0, %v2865
      %v2867 = vpop.f32.mrb[0].mxu0
      %2868 = vdwg.mxu0
      %v2869 = vadd.f32 %v2597, %v2855
      %v2870 = vadd.f32 %v2600, %v2858
      %v2871 = vadd.f32 %v2605, %v2863
      %v2872 = vadd.f32 %v2608, %v2866
      %2873 = vrot.lane.b32.xlu0 %v2081, 104
      %v2874 = vpop.permute.xlu0 %2873
      %2875 = vrot.lane.b32.xlu0 %v2084, 104
      %v2876 = vpop.permute.xlu0 %2875
      %2877 = vrot.lane.b32.xlu0 %v2089, 104
      %v2878 = vpop.permute.xlu0 %2877
      %2879 = vrot.lane.b32.xlu0 %v2092, 104
      %v2880 = vpop.permute.xlu0 %2879
      %2881 = vrot.lane.b32.xlu0 %v2081, 72
      %v2882 = vpop.permute.xlu0 %2881
      %2883 = vrot.lane.b32.xlu0 %v2084, 72
      %v2884 = vpop.permute.xlu0 %2883
      %2885 = vrot.lane.b32.xlu0 %v2089, 72
      %v2886 = vpop.permute.xlu0 %2885
      %2887 = vrot.lane.b32.xlu0 %v2092, 72
      %v2888 = vpop.permute.xlu0 %2887
      %v2889 = vsel %vm2107, %v2874, 0
      %v2891 = vsel %vm2107, %v2876, 0
      %v2893 = vsel %vm2107, %v2878, 0
      %v2895 = vsel %vm2107, %v2880, 0
      %v2897 = vsel %vm2107, %v2882, 0
      %v2899 = vsel %vm2107, %v2884, 0
      %v2901 = vsel %vm2107, %v2886, 0
      %v2903 = vsel %vm2107, %v2888, 0
      %2905 = vmatprep.subr.mxu0 0.0
      %2906 = vmatpush1.xpose.msra.mxu0 %v2897
      %2907 = vmatprep.subr.mxu0 0.0
      %2908 = vmatpush1.xpose.msra.mxu0 %v2899
      %2909 = vmatprep.subr.mxu0 0.0
      %2910 = vmatpush1.xpose.msra.mxu0 %v2901
      %2911 = vmatprep.subr.mxu0 0.0
      %2912 = vmatpush1.xpose.msra.mxu0 %v2903
      %2913 = vmatprep.subr.mxu0 0.0
      %2914 = vmatpush1.xpose.msra.mxu0 0.0
      %2915 = vmatprep.subr.mxu0 0.0
      %2916 = vmatpush1.xpose.msra.mxu0 0.0
      %2917 = vmatprep.subr.mxu0 0.0
      %2918 = vmatpush1.xpose.msra.mxu0 0.0
      %2919 = vmatprep.subr.mxu0 0.0
      %2920 = vmatpush1.xpose.msra.mxu0 0.0
      %2921 = vmatprep.subr.mxu0 0.0
      %2922 = vmatpush1.xpose.msra.mxu0 0.0
      %2923 = vmatprep.subr.mxu0 0.0
      %2924 = vmatpush1.xpose.msra.mxu0 0.0
      %2925 = vmatprep.subr.mxu0 0.0
      %2926 = vmatpush1.xpose.msra.mxu0 0.0
      %2927 = vmatprep.subr.mxu0 0.0
      %2928 = vmatpush1.xpose.msra.mxu0 0.0
      %2929 = vmatprep.subr.mxu0 0.0
      %2930 = vmatpush1.xpose.msra.mxu0 0.0
      %2931 = vmatprep.subr.mxu0 0.0
      %2932 = vmatpush1.xpose.msra.mxu0 0.0
      %2933 = vmatprep.subr.mxu0 0.0
      %2934 = vmatpush1.xpose.msra.mxu0 0.0
      %2935 = vmatprep.subr.mxu0 0.0
      %2936 = vmatpush1.xpose.msra.mxu0 0.0
      %2937 = vmatprep.subr.mxu0 0.0
      %2938 = vmatpush1.xpose.msra.mxu0 0.0
      %2939 = vmatprep.subr.mxu0 0.0
      %2940 = vmatpush1.xpose.msra.mxu0 0.0
      %2941 = vmatprep.subr.mxu0 0.0
      %2942 = vmatpush1.xpose.msra.mxu0 0.0
      %2943 = vmatprep.subr.mxu0 0.0
      %2944 = vmatpush1.xpose.msra.mxu0 0.0
      %2945 = vmatprep.subr.mxu0 0.0
      %2946 = vmatpush1.xpose.msra.mxu0 0.0
      %2947 = vmatprep.subr.mxu0 0.0
      %2948 = vmatpush1.xpose.msra.mxu0 0.0
      %2949 = vmatprep.subr.mxu0 0.0
      %2950 = vmatpush1.xpose.msra.mxu0 0.0
      %2951 = vmatprep.subr.mxu0 0.0
      %2952 = vmatpush1.xpose.msra.mxu0 0.0
      %2953 = vmatprep.subr.mxu0 0.0
      %2954 = vmatpush1.xpose.msra.mxu0 0.0
      %2955 = vmatprep.subr.mxu0 0.0
      %2956 = vmatpush1.xpose.msra.mxu0 0.0
      %2957 = vmatprep.subr.mxu0 0.0
      %2958 = vmatpush1.xpose.msra.mxu0 0.0
      %2959 = vmatprep.subr.mxu0 0.0
      %2960 = vmatpush1.xpose.msra.mxu0 0.0
      %2961 = vmatprep.subr.mxu0 0.0
      %2962 = vmatpush1.xpose.msra.mxu0 0.0
      %2963 = vmatprep.subr.mxu0 0.0
      %2964 = vmatpush1.xpose.msra.mxu0 0.0
      %2965 = vmatprep.subr.mxu0 0.0
      %2966 = vmatpush1.xpose.msra.mxu0 0.0
      %2967 = vmatprep.subr.mxu0 0.0
      %2968 = vmatpush1.xpose.msra.mxu0 0.0
      %2969 = vmatprep.mubr.f32.mxu0 0.0
      %2970 = vmatmul.mubr.f32.gmra.mrb[0].mxu0 %v2889
      %v2971 = vpop.f32.mrb[0].mxu0
      %v2972 = vadd.f32 0.0, %v2971
      %v2973 = vpop.f32.mrb[0].mxu0
      %2974 = vmatprep.mubr.f32.mxu0 0.0
      %2975 = vmatmul.mubr.f32.gmra.mrb[0].mxu0 %v2891
      %v2976 = vpop.f32.mrb[0].mxu0
      %v2977 = vadd.f32 0.0, %v2976
      %v2978 = vpop.f32.mrb[0].mxu0
      %2979 = vmatprep.mubr.f32.mxu0 0.0
      %2980 = vmatmul.mubr.f32.gmra.mrb[0].mxu0 %v2893
      %v2981 = vpop.f32.mrb[0].mxu0
      %v2982 = vadd.f32 0.0, %v2981
      %v2983 = vpop.f32.mrb[0].mxu0
      %2984 = vmatprep.mubr.f32.mxu0 0.0
      %2985 = vmatmul.mubr.f32.gmra.mrb[0].mxu0 %v2895
      %v2986 = vpop.f32.mrb[0].mxu0
      %v2987 = vadd.f32 0.0, %v2986
      %v2988 = vpop.f32.mrb[0].mxu0
      %2989 = vdwg.mxu0
      %v2990 = vmul.f32 %v2972, 0.35355338
      %v2991 = vmul.f32 %v2977, 0.35355338
      %v2992 = vmul.f32 %v2982, 0.35355338
      %v2993 = vmul.f32 %v2987, 0.35355338
      %v2994 = vadd.f32 %v2990, %v2012
      %v2995 = vadd.f32 %v2991, %v2013
      %v2996 = vadd.f32 %v2992, %v2014
      %v2997 = vadd.f32 %v2993, %v2015
      %v2998 = vsel %vm2217, %v2994, -inf
      %2999 = vmax.xlane.f32.xlu0 %v2998
      %v3000 = vpop.xlane.xlu0 %2999
      %v3001 = vsel %vm2217, %v2995, -inf
      %3002 = vmax.xlane.f32.xlu0 %v3001
      %v3003 = vpop.xlane.xlu0 %3002
      %v3004 = vsel %vm2217, %v2996, -inf
      %3005 = vmax.xlane.f32.xlu0 %v3004
      %v3006 = vpop.xlane.xlu0 %3005
      %v3007 = vsel %vm2227, %v2997, -inf
      %3008 = vmax.xlane.f32.xlu0 %v3007
      %v3009 = vpop.xlane.xlu0 %3008
      %v3010 = vsub.f32 %v2994, %v3000
      %v3011 = vsub.f32 %v2995, %v3003
      %v3012 = vsub.f32 %v2996, %v3006
      %v3013 = vsub.f32 %v2997, %v3009
      %v3014 = vmul.f32 %v3010, 1.442695
      %v3015 = vpow.pop %v3014
      %v3016 = vmul.f32 %v3011, 1.442695
      %v3017 = vpow.pop %v3016
      %v3018 = vmul.f32 %v3012, 1.442695
      %v3019 = vpow.pop %v3018
      %v3020 = vmul.f32 %v3013, 1.442695
      %v3021 = vpow.pop %v3020
      %v3022 = vsel %vm2217, %v3015, 0.0
      %3023 = vadd.xlane.f32.xlu0 %v3022
      %v3024 = vpop.xlane.xlu0 %3023
      %v3025 = vsel %vm2217, %v3017, 0.0
      %3026 = vadd.xlane.f32.xlu0 %v3025
      %v3027 = vpop.xlane.xlu0 %3026
      %v3028 = vsel %vm2217, %v3019, 0.0
      %3029 = vadd.xlane.f32.xlu0 %v3028
      %v3030 = vpop.xlane.xlu0 %3029
      %v3031 = vsel %vm2227, %v3021, 0.0
      %3032 = vadd.xlane.f32.xlu0 %v3031
      %v3033 = vpop.xlane.xlu0 %3032
      %v3034 = vrcp.pop %v3024
      %v3035 = vmul.f32 1.0, %v3034
      %v3036 = vrcp.pop %v3027
      %v3037 = vmul.f32 1.0, %v3036
      %v3038 = vrcp.pop %v3030
      %v3039 = vmul.f32 1.0, %v3038
      %v3040 = vrcp.pop %v3033
      %v3041 = vmul.f32 1.0, %v3040
      %v3042 = vmul.f32 %v3015, %v3035
      %v3043 = vmul.f32 %v3017, %v3037
      %v3044 = vmul.f32 %v3019, %v3039
      %v3045 = vmul.f32 %v3021, %v3041
      %v3046 = vadd.f32 %v2784, %v3042
      %v3047 = vadd.f32 %v2785, %v3043
      %v3048 = vadd.f32 %v2786, %v3044
      %v3049 = vadd.f32 %v2787, %v3045
      %v3050 = vlaneseq
      %v3051 = vshrl.u32 %v3050, 7
      %v3052 = vsub.s32 3, %v3051
      %v3053 = vrot.slane %v2016, %v3052
      %3055 = vrot.lane.b32.xlu0 %v3053, 64
      %v3056 = vpop.permute.xlu0 %3055
      %v3058 = vmul.f32 %v2081, %v3056
      %v3059 = vmul.f32 %v2084, %v3056
      %v3060 = vmul.f32 %v2089, %v3056
      %v3061 = vmul.f32 %v2092, %v3056
      %v3062 = vpack.c.bf16 %v3059, %v3058
      %v3063 = vpack.c.bf16 %v3061, %v3060
      %v3064 = vpack.c.bf16 %v3043, %v3042
      %v3065 = vpack.c.bf16 %v3045, %v3044
      %3068 = vrot.lane.b32.xlu0 %v3062, 64
      %v3069 = vpop.permute.xlu0 %3068
      %3070 = vrot.lane.b32.xlu0 %v3063, 64
      %v3071 = vpop.permute.xlu0 %3070
      %v3074 = vsel %vm2217, %v3064, 0
      %v3077 = vsel %vm2217, %v3065, 0
      %v3080 = vsel %vm2493, %v3071, 0
      %3082 = vmatprep.subr.bf16.mxu0 0
      %3083 = vmatpush1.bf16.msra.mxu0 %v3069
      %3084 = vmatprep.subr.bf16.mxu0 0
      %3085 = vmatpush1.bf16.msra.mxu0 %v3080
      %3086 = vmatprep.subr.bf16.mxu0 0
      %3087 = vmatpush1.bf16.msra.mxu0 0
      %3088 = vmatprep.subr.bf16.mxu0 0
      %3089 = vmatpush1.bf16.msra.mxu0 0
      %3090 = vmatprep.subr.bf16.mxu0 0
      %3091 = vmatpush1.bf16.msra.mxu0 0
      %3092 = vmatprep.subr.bf16.mxu0 0
      %3093 = vmatpush1.bf16.msra.mxu0 0
      %3094 = vmatprep.subr.bf16.mxu0 0
      %3095 = vmatpush1.bf16.msra.mxu0 0
      %3096 = vmatprep.subr.bf16.mxu0 0
      %3097 = vmatpush1.bf16.msra.mxu0 0
      %3098 = vmatprep.subr.bf16.mxu0 0
      %3099 = vmatpush1.bf16.msra.mxu0 0
      %3100 = vmatprep.subr.bf16.mxu0 0
      %3101 = vmatpush1.bf16.msra.mxu0 0
      %3102 = vmatprep.subr.bf16.mxu0 0
      %3103 = vmatpush1.bf16.msra.mxu0 0
      %3104 = vmatprep.subr.bf16.mxu0 0
      %3105 = vmatpush1.bf16.msra.mxu0 0
      %3106 = vmatprep.subr.bf16.mxu0 0
      %3107 = vmatpush1.bf16.msra.mxu0 0
      %3108 = vmatprep.subr.bf16.mxu0 0
      %3109 = vmatpush1.bf16.msra.mxu0 0
      %3110 = vmatprep.subr.bf16.mxu0 0
      %3111 = vmatpush1.bf16.msra.mxu0 0
      %3112 = vmatprep.subr.bf16.mxu0 0
      %3113 = vmatpush1.bf16.msra.mxu0 0
      %3114 = vmatprep.mubr.bf16.mxu0 0
      %3115 = vmatmul.mubr.bf16.gmra.mrb[0].mxu0 %v3074
      %v3116 = vpop.f32.mrb[0].mxu0
      %v3117 = vadd.f32 0.0, %v3116
      %v3118 = vpop.f32.mrb[0].mxu0
      %v3119 = vpop.f32.mrb[0].mxu0
      %v3120 = vadd.f32 0.0, %v3119
      %v3121 = vpop.f32.mrb[0].mxu0
      %3122 = vmatprep.mubr.bf16.mxu0 0
      %3123 = vmatmul.mubr.bf16.gmra.mrb[0].mxu0 %v3077
      %v3124 = vpop.f32.mrb[0].mxu0
      %v3125 = vadd.f32 0.0, %v3124
      %v3126 = vpop.f32.mrb[0].mxu0
      %v3127 = vpop.f32.mrb[0].mxu0
      %v3128 = vadd.f32 0.0, %v3127
      %v3129 = vpop.f32.mrb[0].mxu0
      %3130 = vdwg.mxu0
      %v3131 = vadd.f32 %v2869, %v3117
      %v3132 = vadd.f32 %v2870, %v3120
      %v3133 = vadd.f32 %v2871, %v3125
      %v3134 = vadd.f32 %v2872, %v3128
      %v3135 = vld [vmem:[%s2 + $0x110] sm:$0xf]
      %v3136 = vld [vmem:[%s2 + $0x114] sm:$0xf]
      %v3137 = vld [vmem:[%s2 + $0x118] sm:$0xf]
      %v3138 = vld [vmem:[%s2 + $0x11c] sm:$0xf]
      %v3139 = vpack.c.bf16 %v3132, %v3131
      %v3140 = vpack.c.bf16 %v3134, %v3133
      %v3141 = vlaneseq
      %v3142 = vshrl.u32 %v3141, 7
      %v3143 = vsub.s32 1, %v3142
      %v3144 = vrot.slane %v2017, %v3143
      %v3149 = vunpack.c.l.b16 %v3135
      %v3150 = vunpack.c.l.b16 %v3136
      %v3151 = vunpack.c.l.b16 %v3137
      %v3152 = vunpack.c.l.b16 %v3138
      %v3153 = vpack.c.b16 %v3150, %v3149
      %v3154 = vpack.c.b16 %v3152, %v3151
      %v3158 = vsel %vm964, %v3139, 0
      %v3161 = vsel %vm964, %v3140, 0
      %3163 = vmatprep.subr.bf16.mxu0 0
      %3164 = vmatpush1.bf16.msra.mxu0 %v3153
      %3165 = vmatprep.subr.bf16.mxu0 0
      %3166 = vmatpush1.bf16.msra.mxu0 %v3154
      %3167 = vmatprep.subr.bf16.mxu0 0
      %3168 = vmatpush1.bf16.msra.mxu0 0
      %3169 = vmatprep.subr.bf16.mxu0 0
      %3170 = vmatpush1.bf16.msra.mxu0 0
      %3171 = vmatprep.subr.bf16.mxu0 0
      %3172 = vmatpush1.bf16.msra.mxu0 0
      %3173 = vmatprep.subr.bf16.mxu0 0
      %3174 = vmatpush1.bf16.msra.mxu0 0
      %3175 = vmatprep.subr.bf16.mxu0 0
      %3176 = vmatpush1.bf16.msra.mxu0 0
      %3177 = vmatprep.subr.bf16.mxu0 0
      %3178 = vmatpush1.bf16.msra.mxu0 0
      %3179 = vmatprep.subr.bf16.mxu0 0
      %3180 = vmatpush1.bf16.msra.mxu0 0
      %3181 = vmatprep.subr.bf16.mxu0 0
      %3182 = vmatpush1.bf16.msra.mxu0 0
      %3183 = vmatprep.subr.bf16.mxu0 0
      %3184 = vmatpush1.bf16.msra.mxu0 0
      %3185 = vmatprep.subr.bf16.mxu0 0
      %3186 = vmatpush1.bf16.msra.mxu0 0
      %3187 = vmatprep.subr.bf16.mxu0 0
      %3188 = vmatpush1.bf16.msra.mxu0 0
      %3189 = vmatprep.subr.bf16.mxu0 0
      %3190 = vmatpush1.bf16.msra.mxu0 0
      %3191 = vmatprep.subr.bf16.mxu0 0
      %3192 = vmatpush1.bf16.msra.mxu0 0
      %3193 = vmatprep.subr.bf16.mxu0 0
      %3194 = vmatpush1.bf16.msra.mxu0 0
      %3195 = vmatprep.mubr.bf16.mxu0 0
      %3196 = vmatmul.mubr.bf16.gmra.mrb[0].mxu0 %v3158
      %v3197 = vpop.f32.mrb[0].mxu0
      %v3198 = vadd.f32 %v3144, %v3197
      %v3199 = vpop.f32.mrb[0].mxu0
      %v3200 = vpop.f32.mrb[0].mxu0
      %v3201 = vadd.f32 %v3144, %v3200
      %v3202 = vpop.f32.mrb[0].mxu0
      %3203 = vmatprep.mubr.bf16.mxu0 0
      %3204 = vmatmul.mubr.bf16.gmra.mrb[0].mxu0 %v3161
      %v3205 = vpop.f32.mrb[0].mxu0
      %v3206 = vadd.f32 %v3144, %v3205
      %v3207 = vpop.f32.mrb[0].mxu0
      %v3208 = vpop.f32.mrb[0].mxu0
      %v3209 = vadd.f32 %v3144, %v3208
      %v3210 = vpop.f32.mrb[0].mxu0
      %3211 = vdwg.mxu0
      %v3212 = vadd.f32 %v2008, %v3198
      %v3213 = vadd.f32 %v2009, %v3201
      %v3214 = vadd.f32 %v2010, %v3206
      %v3215 = vadd.f32 %v2011, %v3209
      %v3216 = vsel %vm964, %v3212, 0.0
      %3217 = vadd.xlane.f32.xlu0 %v3216
      %v3218 = vpop.xlane.xlu0 %3217
      %v3219 = vsel %vm964, %v3213, 0.0
      %3220 = vadd.xlane.f32.xlu0 %v3219
      %v3221 = vpop.xlane.xlu0 %3220
      %v3222 = vsel %vm964, %v3214, 0.0
      %3223 = vadd.xlane.f32.xlu0 %v3222
      %v3224 = vpop.xlane.xlu0 %3223
      %v3225 = vsel %vm974, %v3215, 0.0
      %3226 = vadd.xlane.f32.xlu0 %v3225
      %v3227 = vpop.xlane.xlu0 %3226
      %v3228 = vmul.f32 %v3218, %v978
      %v3229 = vmul.f32 %v3221, %v978
      %v3230 = vmul.f32 %v3224, %v978
      %v3231 = vmul.f32 %v3227, %v978
      %v3232 = vsub.f32 %v3212, %v3228
      %v3233 = vsub.f32 %v3213, %v3229
      %v3234 = vsub.f32 %v3214, %v3230
      %v3235 = vsub.f32 %v3215, %v3231
      %v3236 = vmul.f32 %v3232, %v3232
      %v3237 = vmul.f32 %v3233, %v3233
      %v3238 = vmul.f32 %v3234, %v3234
      %v3239 = vmul.f32 %v3235, %v3235
      %v3240 = vsel %vm964, %v3236, 0.0
      %3241 = vadd.xlane.f32.xlu0 %v3240
      %v3242 = vpop.xlane.xlu0 %3241
      %v3243 = vsel %vm964, %v3237, 0.0
      %3244 = vadd.xlane.f32.xlu0 %v3243
      %v3245 = vpop.xlane.xlu0 %3244
      %v3246 = vsel %vm964, %v3238, 0.0
      %3247 = vadd.xlane.f32.xlu0 %v3246
      %v3248 = vpop.xlane.xlu0 %3247
      %v3249 = vsel %vm974, %v3239, 0.0
      %3250 = vadd.xlane.f32.xlu0 %v3249
      %v3251 = vpop.xlane.xlu0 %3250
      %v3252 = vmul.f32 %v3242, %v978
      %v3253 = vmul.f32 %v3245, %v978
      %v3254 = vmul.f32 %v3248, %v978
      %v3255 = vmul.f32 %v3251, %v978
      %v3256 = vadd.f32 %v3252, 1e-05
      %v3257 = vadd.f32 %v3253, 1e-05
      %v3258 = vadd.f32 %v3254, 1e-05
      %v3259 = vadd.f32 %v3255, 1e-05
      %v3260 = vrsqrt.pop %v3256
      %v3261 = vrsqrt.pop %v3257
      %v3262 = vrsqrt.pop %v3258
      %v3263 = vrsqrt.pop %v3259
      %v3264 = vmul.f32 %v3232, %v3260
      %v3265 = vmul.f32 %v3233, %v3261
      %v3266 = vmul.f32 %v3234, %v3262
      %v3267 = vmul.f32 %v3235, %v3263
      %v3268 = vlaneseq
      %v3269 = vshrl.u32 %v3268, 7
      %v3270 = vsub.s32 2, %v3269
      %v3271 = vrot.slane %v2017, %v3270
      %v3272 = vmul.f32 %v3264, %v3271
      %v3273 = vmul.f32 %v3265, %v3271
      %v3274 = vmul.f32 %v3266, %v3271
      %v3275 = vmul.f32 %v3267, %v3271
      %v3276 = vlaneseq
      %v3277 = vshrl.u32 %v3276, 7
      %v3278 = vsub.s32 3, %v3277
      %v3279 = vrot.slane %v2017, %v3278
      %v3280 = vadd.f32 %v3272, %v3279
      %v3281 = vadd.f32 %v3273, %v3279
      %v3282 = vadd.f32 %v3274, %v3279
      %v3283 = vadd.f32 %v3275, %v3279
      %v3284 = vld [vmem:[%s2 + $0x120] sm:$0xf]
      %v3285 = vld [vmem:[%s2 + $0x124] sm:$0xf]
      %v3286 = vld [vmem:[%s2 + $0x128] sm:$0xf]
      %v3287 = vld [vmem:[%s2 + $0x12c] sm:$0xf]
      %v3288 = vpack.c.bf16 %v3281, %v3280
      %v3289 = vpack.c.bf16 %v3283, %v3282
      %v3290 = vlaneseq
      %v3291 = vshrl.u32 %v3290, 7
      %v3292 = vsub.s32 4, %v3291
      %v3293 = vrot.slane %v2017, %v3292
      %v3298 = vunpack.c.l.b16 %v3284
      %v3299 = vunpack.c.l.b16 %v3285
      %v3300 = vunpack.c.l.b16 %v3286
      %v3301 = vunpack.c.l.b16 %v3287
      %v3302 = vpack.c.b16 %v3299, %v3298
      %v3303 = vpack.c.b16 %v3301, %v3300
      %v3307 = vsel %vm964, %v3288, 0
      %v3310 = vsel %vm964, %v3289, 0
      %3312 = vmatprep.subr.bf16.mxu0 0
      %3313 = vmatpush1.bf16.msra.mxu0 %v3302
      %3314 = vmatprep.subr.bf16.mxu0 0
      %3315 = vmatpush1.bf16.msra.mxu0 %v3303
      %3316 = vmatprep.subr.bf16.mxu0 0
      %3317 = vmatpush1.bf16.msra.mxu0 0
      %3318 = vmatprep.subr.bf16.mxu0 0
      %3319 = vmatpush1.bf16.msra.mxu0 0
      %3320 = vmatprep.subr.bf16.mxu0 0
      %3321 = vmatpush1.bf16.msra.mxu0 0
      %3322 = vmatprep.subr.bf16.mxu0 0
      %3323 = vmatpush1.bf16.msra.mxu0 0
      %3324 = vmatprep.subr.bf16.mxu0 0
      %3325 = vmatpush1.bf16.msra.mxu0 0
      %3326 = vmatprep.subr.bf16.mxu0 0
      %3327 = vmatpush1.bf16.msra.mxu0 0
      %3328 = vmatprep.subr.bf16.mxu0 0
      %3329 = vmatpush1.bf16.msra.mxu0 0
      %3330 = vmatprep.subr.bf16.mxu0 0
      %3331 = vmatpush1.bf16.msra.mxu0 0
      %3332 = vmatprep.subr.bf16.mxu0 0
      %3333 = vmatpush1.bf16.msra.mxu0 0
      %3334 = vmatprep.subr.bf16.mxu0 0
      %3335 = vmatpush1.bf16.msra.mxu0 0
      %3336 = vmatprep.subr.bf16.mxu0 0
      %3337 = vmatpush1.bf16.msra.mxu0 0
      %3338 = vmatprep.subr.bf16.mxu0 0
      %3339 = vmatpush1.bf16.msra.mxu0 0
      %3340 = vmatprep.subr.bf16.mxu0 0
      %3341 = vmatpush1.bf16.msra.mxu0 0
      %3342 = vmatprep.subr.bf16.mxu0 0
      %3343 = vmatpush1.bf16.msra.mxu0 0
      %3344 = vmatprep.mubr.bf16.mxu0 0
      %3345 = vmatmul.mubr.bf16.gmra.mrb[0].mxu0 %v3307
      %v3346 = vpop.f32.mrb[0].mxu0
      %v3347 = vadd.f32 %v3293, %v3346
      %v3348 = vpop.f32.mrb[0].mxu0
      %v3349 = vpop.f32.mrb[0].mxu0
      %v3350 = vadd.f32 %v3293, %v3349
      %v3351 = vpop.f32.mrb[0].mxu0
      %3352 = vmatprep.mubr.bf16.mxu0 0
      %3353 = vmatmul.mubr.bf16.gmra.mrb[0].mxu0 %v3310
      %v3354 = vpop.f32.mrb[0].mxu0
      %v3355 = vadd.f32 %v3293, %v3354
      %v3356 = vpop.f32.mrb[0].mxu0
      %v3357 = vpop.f32.mrb[0].mxu0
      %v3358 = vadd.f32 %v3293, %v3357
      %v3359 = vpop.f32.mrb[0].mxu0
      %3360 = vdwg.mxu0
      %v3361 = vmax.f32 %v3347, 0.0
      %v3362 = vmax.f32 %v3350, 0.0
      %v3363 = vmax.f32 %v3355, 0.0
      %v3364 = vmax.f32 %v3358, 0.0
      %v3365 = vld [vmem:[%s2 + $0x130] sm:$0xf]
      %v3366 = vld [vmem:[%s2 + $0x134] sm:$0xf]
      %v3367 = vld [vmem:[%s2 + $0x138] sm:$0xf]
      %v3368 = vld [vmem:[%s2 + $0x13c] sm:$0xf]
      %v3369 = vld [vmem:[%s2 + $0x140] sm:$0xf]
      %v3370 = vld [vmem:[%s2 + $0x144] sm:$0xf]
      %v3371 = vld [vmem:[%s2 + $0x148] sm:$0xf]
      %v3372 = vld [vmem:[%s2 + $0x14c] sm:$0xf]
      %v3373 = vld [vmem:[%s2 + $0x150] sm:$0xf]
      %v3374 = vld [vmem:[%s2 + $0x154] sm:$0xf]
      %v3375 = vld [vmem:[%s2 + $0x158] sm:$0xf]
      %v3376 = vld [vmem:[%s2 + $0x15c] sm:$0xf]
      %v3377 = vld [vmem:[%s2 + $0x160] sm:$0xf]
      %v3378 = vld [vmem:[%s2 + $0x164] sm:$0xf]
      %v3379 = vld [vmem:[%s2 + $0x168] sm:$0xf]
      %v3380 = vld [vmem:[%s2 + $0x16c] sm:$0xf]
      %v3381 = vpack.c.bf16 %v3362, %v3361
      %v3382 = vpack.c.bf16 %v3364, %v3363
      %v3383 = vlaneseq
      %v3384 = vshrl.u32 %v3383, 7
      %v3385 = vsub.s32 5, %v3384
      %v3386 = vrot.slane %v2017, %v3385
      %v3403 = vunpack.c.l.b16 %v3365
      %v3404 = vunpack.c.l.b16 %v3366
      %v3405 = vunpack.c.l.b16 %v3367
      %v3406 = vunpack.c.l.b16 %v3368
      %v3407 = vunpack.c.l.b16 %v3369
      %v3408 = vunpack.c.l.b16 %v3370
      %v3409 = vunpack.c.l.b16 %v3371
      %v3410 = vunpack.c.l.b16 %v3372
      %v3411 = vunpack.c.l.b16 %v3373
      %v3412 = vunpack.c.l.b16 %v3374
      %v3413 = vunpack.c.l.b16 %v3375
      %v3414 = vunpack.c.l.b16 %v3376
      %v3415 = vunpack.c.l.b16 %v3377
      %v3416 = vunpack.c.l.b16 %v3378
      %v3417 = vunpack.c.l.b16 %v3379
      %v3418 = vunpack.c.l.b16 %v3380
      %v3419 = vpack.c.b16 %v3404, %v3403
      %v3420 = vpack.c.b16 %v3406, %v3405
      %v3421 = vpack.c.b16 %v3408, %v3407
      %v3422 = vpack.c.b16 %v3410, %v3409
      %v3423 = vpack.c.b16 %v3412, %v3411
      %v3424 = vpack.c.b16 %v3414, %v3413
      %v3425 = vpack.c.b16 %v3416, %v3415
      %v3426 = vpack.c.b16 %v3418, %v3417
      %3435 = vmatprep.subr.bf16.mxu0 0
      %3436 = vmatpush1.bf16.msra.mxu0 %v3419
      %3437 = vmatprep.subr.bf16.mxu0 0
      %3438 = vmatpush1.bf16.msra.mxu0 %v3420
      %3439 = vmatprep.subr.bf16.mxu0 0
      %3440 = vmatpush1.bf16.msra.mxu0 %v3421
      %3441 = vmatprep.subr.bf16.mxu0 0
      %3442 = vmatpush1.bf16.msra.mxu0 %v3422
      %3443 = vmatprep.subr.bf16.mxu0 0
      %3444 = vmatpush1.bf16.msra.mxu0 %v3423
      %3445 = vmatprep.subr.bf16.mxu0 0
      %3446 = vmatpush1.bf16.msra.mxu0 %v3424
      %3447 = vmatprep.subr.bf16.mxu0 0
      %3448 = vmatpush1.bf16.msra.mxu0 %v3425
      %3449 = vmatprep.subr.bf16.mxu0 0
      %3450 = vmatpush1.bf16.msra.mxu0 %v3426
      %3451 = vmatprep.subr.bf16.mxu0 0
      %3452 = vmatpush1.bf16.msra.mxu0 0
      %3453 = vmatprep.subr.bf16.mxu0 0
      %3454 = vmatpush1.bf16.msra.mxu0 0
      %3455 = vmatprep.subr.bf16.mxu0 0
      %3456 = vmatpush1.bf16.msra.mxu0 0
      %3457 = vmatprep.subr.bf16.mxu0 0
      %3458 = vmatpush1.bf16.msra.mxu0 0
      %3459 = vmatprep.subr.bf16.mxu0 0
      %3460 = vmatpush1.bf16.msra.mxu0 0
      %3461 = vmatprep.subr.bf16.mxu0 0
      %3462 = vmatpush1.bf16.msra.mxu0 0
      %3463 = vmatprep.subr.bf16.mxu0 0
      %3464 = vmatpush1.bf16.msra.mxu0 0
      %3465 = vmatprep.subr.bf16.mxu0 0
      %3466 = vmatpush1.bf16.msra.mxu0 0
      %3467 = vmatprep.mubr.bf16.mxu0 0
      %3468 = vmatmul.mubr.bf16.gmra.mrb[0].mxu0 %v3381
      %v3469 = vpop.f32.mrb[0].mxu0
      %v3470 = vadd.f32 %v3386, %v3469
      %v3471 = vpop.f32.mrb[0].mxu0
      %v3472 = vpop.f32.mrb[0].mxu0
      %v3473 = vadd.f32 %v3386, %v3472
      %v3474 = vpop.f32.mrb[0].mxu0
      %3475 = vmatprep.mubr.bf16.mxu0 0
      %3476 = vmatmul.mubr.bf16.gmra.mrb[0].mxu0 %v3382
      %v3477 = vpop.f32.mrb[0].mxu0
      %v3478 = vadd.f32 %v3386, %v3477
      %v3479 = vpop.f32.mrb[0].mxu0
      %v3480 = vpop.f32.mrb[0].mxu0
      %v3481 = vadd.f32 %v3386, %v3480
      %v3482 = vpop.f32.mrb[0].mxu0
      %3483 = vdwg.mxu0
      %v3484 = vadd.f32 %v3280, %v3470
      %v3485 = vadd.f32 %v3281, %v3473
      %v3486 = vadd.f32 %v3282, %v3478
      %v3487 = vadd.f32 %v3283, %v3481
      %v3488 = vsel %vm964, %v3484, 0.0
      %3489 = vadd.xlane.f32.xlu0 %v3488
      %v3490 = vpop.xlane.xlu0 %3489
      %v3491 = vsel %vm964, %v3485, 0.0
      %3492 = vadd.xlane.f32.xlu0 %v3491
      %v3493 = vpop.xlane.xlu0 %3492
      %v3494 = vsel %vm964, %v3486, 0.0
      %3495 = vadd.xlane.f32.xlu0 %v3494
      %v3496 = vpop.xlane.xlu0 %3495
      %v3497 = vsel %vm974, %v3487, 0.0
      %3498 = vadd.xlane.f32.xlu0 %v3497
      %v3499 = vpop.xlane.xlu0 %3498
      %v3500 = vmul.f32 %v3490, %v978
      %v3501 = vmul.f32 %v3493, %v978
      %v3502 = vmul.f32 %v3496, %v978
      %v3503 = vmul.f32 %v3499, %v978
      %v3504 = vsub.f32 %v3484, %v3500
      %v3505 = vsub.f32 %v3485, %v3501
      %v3506 = vsub.f32 %v3486, %v3502
      %v3507 = vsub.f32 %v3487, %v3503
      %v3508 = vmul.f32 %v3504, %v3504
      %v3509 = vmul.f32 %v3505, %v3505
      %v3510 = vmul.f32 %v3506, %v3506
      %v3511 = vmul.f32 %v3507, %v3507
      %v3512 = vsel %vm964, %v3508, 0.0
      %3513 = vadd.xlane.f32.xlu0 %v3512
      %v3514 = vpop.xlane.xlu0 %3513
      %v3515 = vsel %vm964, %v3509, 0.0
      %3516 = vadd.xlane.f32.xlu0 %v3515
      %v3517 = vpop.xlane.xlu0 %3516
      %v3518 = vsel %vm964, %v3510, 0.0
      %3519 = vadd.xlane.f32.xlu0 %v3518
      %v3520 = vpop.xlane.xlu0 %3519
      %v3521 = vsel %vm974, %v3511, 0.0
      %3522 = vadd.xlane.f32.xlu0 %v3521
      %v3523 = vpop.xlane.xlu0 %3522
      %v3524 = vmul.f32 %v3514, %v978
      %v3525 = vmul.f32 %v3517, %v978
      %v3526 = vmul.f32 %v3520, %v978
      %v3527 = vmul.f32 %v3523, %v978
      %v3528 = vadd.f32 %v3524, 1e-05
      %v3529 = vadd.f32 %v3525, 1e-05
      %v3530 = vadd.f32 %v3526, 1e-05
      %v3531 = vadd.f32 %v3527, 1e-05
      %v3532 = vrsqrt.pop %v3528
      %v3533 = vrsqrt.pop %v3529
      %v3534 = vrsqrt.pop %v3530
      %v3535 = vrsqrt.pop %v3531
      %v3536 = vmul.f32 %v3504, %v3532
      %v3537 = vmul.f32 %v3505, %v3533
      %v3538 = vmul.f32 %v3506, %v3534
      %v3539 = vmul.f32 %v3507, %v3535
      %v3540 = vlaneseq
      %v3541 = vshrl.u32 %v3540, 7
      %v3542 = vsub.s32 6, %v3541
      %v3543 = vrot.slane %v2017, %v3542
      %v3544 = vmul.f32 %v3536, %v3543
      %v3545 = vmul.f32 %v3537, %v3543
      %v3546 = vmul.f32 %v3538, %v3543
      %v3547 = vmul.f32 %v3539, %v3543
      %v3548 = vlaneseq
      %v3549 = vshrl.u32 %v3548, 7
      %v3550 = vsub.s32 7, %v3549
      %v3551 = vrot.slane %v2017, %v3550
      %v3552 = vadd.f32 %v3544, %v3551
      %v3553 = vadd.f32 %v3545, %v3551
      %v3554 = vadd.f32 %v3546, %v3551
      %v3555 = vadd.f32 %v3547, %v3551
      %v3556 = vmul.f32 %v3046, 0.25
      %v3557 = vmul.f32 %v3047, 0.25
      %v3558 = vmul.f32 %v3048, 0.25
      %v3559 = vmul.f32 %v3049, 0.25
      %3560 = vst.msk [vmem:[%s210] sm:$0xff] %vm2217, %v3556
      %3561 = vst.msk [vmem:[%s210 + $0x8] sm:$0xff] %vm2217, %v3557
      %3562 = vst.msk [vmem:[%s210 + $0x10] sm:$0xff] %vm2217, %v3558
      %3563 = vst.msk [vmem:[%s210 + $0x18] sm:$0x3f] %vm2227, %v3559
      %v3564 = vld [vmem:[%s1 + $0x260] sm:$0xff]
      %v3565 = vld [vmem:[%s2 + $0x170] sm:$0xf]
      %v3566 = vld [vmem:[%s2 + $0x174] sm:$0xf]
      %v3567 = vld [vmem:[%s2 + $0x178] sm:$0xf]
      %v3568 = vld [vmem:[%s2 + $0x17c] sm:$0xf]
      %v3569 = vpack.c.bf16 %v3553, %v3552
      %v3570 = vpack.c.bf16 %v3555, %v3554
      %v3571 = vlaneseq
      %v3572 = vshrl.u32 %v3571, 7
      %v3573 = vsub.s32 0, %v3572
      %v3574 = vrot.slane %v3564, %v3573
      %v3579 = vunpack.c.l.b16 %v3565
      %v3580 = vunpack.c.l.b16 %v3566
      %v3581 = vunpack.c.l.b16 %v3567
      %v3582 = vunpack.c.l.b16 %v3568
      %v3583 = vpack.c.b16 %v3580, %v3579
      %v3584 = vpack.c.b16 %v3582, %v3581
      %v3588 = vsel %vm964, %v3569, 0
      %v3591 = vsel %vm964, %v3570, 0
      %3593 = vmatprep.subr.bf16.mxu0 0
      %3594 = vmatpush1.bf16.msra.mxu0 %v3583
      %3595 = vmatprep.subr.bf16.mxu0 0
      %3596 = vmatpush1.bf16.msra.mxu0 %v3584
      %3597 = vmatprep.subr.bf16.mxu0 0
      %3598 = vmatpush1.bf16.msra.mxu0 0
      %3599 = vmatprep.subr.bf16.mxu0 0
      %3600 = vmatpush1.bf16.msra.mxu0 0
      %3601 = vmatprep.subr.bf16.mxu0 0
      %3602 = vmatpush1.bf16.msra.mxu0 0
      %3603 = vmatprep.subr.bf16.mxu0 0
      %3604 = vmatpush1.bf16.msra.mxu0 0
      %3605 = vmatprep.subr.bf16.mxu0 0
      %3606 = vmatpush1.bf16.msra.mxu0 0
      %3607 = vmatprep.subr.bf16.mxu0 0
      %3608 = vmatpush1.bf16.msra.mxu0 0
      %3609 = vmatprep.subr.bf16.mxu0 0
      %3610 = vmatpush1.bf16.msra.mxu0 0
      %3611 = vmatprep.subr.bf16.mxu0 0
      %3612 = vmatpush1.bf16.msra.mxu0 0
      %3613 = vmatprep.subr.bf16.mxu0 0
      %3614 = vmatpush1.bf16.msra.mxu0 0
      %3615 = vmatprep.subr.bf16.mxu0 0
      %3616 = vmatpush1.bf16.msra.mxu0 0
      %3617 = vmatprep.subr.bf16.mxu0 0
      %3618 = vmatpush1.bf16.msra.mxu0 0
      %3619 = vmatprep.subr.bf16.mxu0 0
      %3620 = vmatpush1.bf16.msra.mxu0 0
      %3621 = vmatprep.subr.bf16.mxu0 0
      %3622 = vmatpush1.bf16.msra.mxu0 0
      %3623 = vmatprep.subr.bf16.mxu0 0
      %3624 = vmatpush1.bf16.msra.mxu0 0
      %3625 = vmatprep.mubr.bf16.mxu0 0
      %3626 = vmatmul.mubr.bf16.gmra.mrb[0].mxu0 %v3588
      %v3627 = vpop.f32.mrb[0].mxu0
      %v3628 = vadd.f32 %v3574, %v3627
      %v3629 = vpop.f32.mrb[0].mxu0
      %v3630 = vpop.f32.mrb[0].mxu0
      %v3631 = vadd.f32 %v3574, %v3630
      %v3632 = vpop.f32.mrb[0].mxu0
      %3633 = vmatprep.mubr.bf16.mxu0 0
      %3634 = vmatmul.mubr.bf16.gmra.mrb[0].mxu0 %v3591
      %v3635 = vpop.f32.mrb[0].mxu0
      %v3636 = vadd.f32 %v3574, %v3635
      %v3637 = vpop.f32.mrb[0].mxu0
      %v3638 = vpop.f32.mrb[0].mxu0
      %v3639 = vadd.f32 %v3574, %v3638
      %v3640 = vpop.f32.mrb[0].mxu0
      %3641 = vdwg.mxu0
      %3646 = vrot.lane.b32.xlu0 %v3628, 96
      %v3647 = vpop.permute.xlu0 %3646
      %3648 = vrot.lane.b32.xlu0 %v3631, 96
      %v3649 = vpop.permute.xlu0 %3648
      %3650 = vrot.lane.b32.xlu0 %v3636, 96
      %v3651 = vpop.permute.xlu0 %3650
      %3652 = vrot.lane.b32.xlu0 %v3639, 96
      %v3653 = vpop.permute.xlu0 %3652
      %v3654 = vsel %vm2107, %v3628, 0
      %v3656 = vsel %vm2107, %v3631, 0
      %v3658 = vsel %vm2107, %v3636, 0
      %v3660 = vsel %vm2107, %v3639, 0
      %v3662 = vsel %vm2107, %v3647, 0
      %v3664 = vsel %vm2107, %v3649, 0
      %v3666 = vsel %vm2107, %v3651, 0
      %v3668 = vsel %vm2107, %v3653, 0
      %3670 = vmatprep.subr.mxu0 0.0
      %3671 = vmatpush1.xpose.msra.mxu0 %v3662
      %3672 = vmatprep.subr.mxu0 0.0
      %3673 = vmatpush1.xpose.msra.mxu0 %v3664
      %3674 = vmatprep.subr.mxu0 0.0
      %3675 = vmatpush1.xpose.msra.mxu0 %v3666
      %3676 = vmatprep.subr.mxu0 0.0
      %3677 = vmatpush1.xpose.msra.mxu0 %v3668
      %3678 = vmatprep.subr.mxu0 0.0
      %3679 = vmatpush1.xpose.msra.mxu0 0.0
      %3680 = vmatprep.subr.mxu0 0.0
      %3681 = vmatpush1.xpose.msra.mxu0 0.0
      %3682 = vmatprep.subr.mxu0 0.0
      %3683 = vmatpush1.xpose.msra.mxu0 0.0
      %3684 = vmatprep.subr.mxu0 0.0
      %3685 = vmatpush1.xpose.msra.mxu0 0.0
      %3686 = vmatprep.subr.mxu0 0.0
      %3687 = vmatpush1.xpose.msra.mxu0 0.0
      %3688 = vmatprep.subr.mxu0 0.0
      %3689 = vmatpush1.xpose.msra.mxu0 0.0
      %3690 = vmatprep.subr.mxu0 0.0
      %3691 = vmatpush1.xpose.msra.mxu0 0.0
      %3692 = vmatprep.subr.mxu0 0.0
      %3693 = vmatpush1.xpose.msra.mxu0 0.0
      %3694 = vmatprep.subr.mxu0 0.0
      %3695 = vmatpush1.xpose.msra.mxu0 0.0
      %3696 = vmatprep.subr.mxu0 0.0
      %3697 = vmatpush1.xpose.msra.mxu0 0.0
      %3698 = vmatprep.subr.mxu0 0.0
      %3699 = vmatpush1.xpose.msra.mxu0 0.0
      %3700 = vmatprep.subr.mxu0 0.0
      %3701 = vmatpush1.xpose.msra.mxu0 0.0
      %3702 = vmatprep.subr.mxu0 0.0
      %3703 = vmatpush1.xpose.msra.mxu0 0.0
      %3704 = vmatprep.subr.mxu0 0.0
      %3705 = vmatpush1.xpose.msra.mxu0 0.0
      %3706 = vmatprep.subr.mxu0 0.0
      %3707 = vmatpush1.xpose.msra.mxu0 0.0
      %3708 = vmatprep.subr.mxu0 0.0
      %3709 = vmatpush1.xpose.msra.mxu0 0.0
      %3710 = vmatprep.subr.mxu0 0.0
      %3711 = vmatpush1.xpose.msra.mxu0 0.0
      %3712 = vmatprep.subr.mxu0 0.0
      %3713 = vmatpush1.xpose.msra.mxu0 0.0
      %3714 = vmatprep.subr.mxu0 0.0
      %3715 = vmatpush1.xpose.msra.mxu0 0.0
      %3716 = vmatprep.subr.mxu0 0.0
      %3717 = vmatpush1.xpose.msra.mxu0 0.0
      %3718 = vmatprep.subr.mxu0 0.0
      %3719 = vmatpush1.xpose.msra.mxu0 0.0
      %3720 = vmatprep.subr.mxu0 0.0
      %3721 = vmatpush1.xpose.msra.mxu0 0.0
      %3722 = vmatprep.subr.mxu0 0.0
      %3723 = vmatpush1.xpose.msra.mxu0 0.0
      %3724 = vmatprep.subr.mxu0 0.0
      %3725 = vmatpush1.xpose.msra.mxu0 0.0
      %3726 = vmatprep.subr.mxu0 0.0
      %3727 = vmatpush1.xpose.msra.mxu0 0.0
      %3728 = vmatprep.subr.mxu0 0.0
      %3729 = vmatpush1.xpose.msra.mxu0 0.0
      %3730 = vmatprep.subr.mxu0 0.0
      %3731 = vmatpush1.xpose.msra.mxu0 0.0
      %3732 = vmatprep.subr.mxu0 0.0
      %3733 = vmatpush1.xpose.msra.mxu0 0.0
      %3734 = vmatprep.mubr.f32.mxu0 0.0
      %3735 = vmatmul.mubr.f32.gmra.mrb[0].mxu0 %v3654
      %v3736 = vpop.f32.mrb[0].mxu0
      %v3737 = vadd.f32 0.0, %v3736
      %v3738 = vpop.f32.mrb[0].mxu0
      %3739 = vmatprep.mubr.f32.mxu0 0.0
      %3740 = vmatmul.mubr.f32.gmra.mrb[0].mxu0 %v3656
      %v3741 = vpop.f32.mrb[0].mxu0
      %v3742 = vadd.f32 0.0, %v3741
      %v3743 = vpop.f32.mrb[0].mxu0
      %3744 = vmatprep.mubr.f32.mxu0 0.0
      %3745 = vmatmul.mubr.f32.gmra.mrb[0].mxu0 %v3658
      %v3746 = vpop.f32.mrb[0].mxu0
      %v3747 = vadd.f32 0.0, %v3746
      %v3748 = vpop.f32.mrb[0].mxu0
      %3749 = vmatprep.mubr.f32.mxu0 0.0
      %3750 = vmatmul.mubr.f32.gmra.mrb[0].mxu0 %v3660
      %v3751 = vpop.f32.mrb[0].mxu0
      %v3752 = vadd.f32 0.0, %v3751
      %v3753 = vpop.f32.mrb[0].mxu0
      %3754 = vdwg.mxu0
      %v3755 = vmul.f32 %v3737, 0.35355338
      %v3756 = vmul.f32 %v3742, 0.35355338
      %v3757 = vmul.f32 %v3747, 0.35355338
      %v3758 = vmul.f32 %v3752, 0.35355338
      %v3759 = vadd.f32 %v3755, %v2012
      %v3760 = vadd.f32 %v3756, %v2013
      %v3761 = vadd.f32 %v3757, %v2014
      %v3762 = vadd.f32 %v3758, %v2015
      %v3763 = vsel %vm2217, %v3759, -inf
      %3764 = vmax.xlane.f32.xlu0 %v3763
      %v3765 = vpop.xlane.xlu0 %3764
      %v3766 = vsel %vm2217, %v3760, -inf
      %3767 = vmax.xlane.f32.xlu0 %v3766
      %v3768 = vpop.xlane.xlu0 %3767
      %v3769 = vsel %vm2217, %v3761, -inf
      %3770 = vmax.xlane.f32.xlu0 %v3769
      %v3771 = vpop.xlane.xlu0 %3770
      %v3772 = vsel %vm2227, %v3762, -inf
      %3773 = vmax.xlane.f32.xlu0 %v3772
      %v3774 = vpop.xlane.xlu0 %3773
      %v3775 = vsub.f32 %v3759, %v3765
      %v3776 = vsub.f32 %v3760, %v3768
      %v3777 = vsub.f32 %v3761, %v3771
      %v3778 = vsub.f32 %v3762, %v3774
      %v3779 = vmul.f32 %v3775, 1.442695
      %v3780 = vpow.pop %v3779
      %v3781 = vmul.f32 %v3776, 1.442695
      %v3782 = vpow.pop %v3781
      %v3783 = vmul.f32 %v3777, 1.442695
      %v3784 = vpow.pop %v3783
      %v3785 = vmul.f32 %v3778, 1.442695
      %v3786 = vpow.pop %v3785
      %v3787 = vsel %vm2217, %v3780, 0.0
      %3788 = vadd.xlane.f32.xlu0 %v3787
      %v3789 = vpop.xlane.xlu0 %3788
      %v3790 = vsel %vm2217, %v3782, 0.0
      %3791 = vadd.xlane.f32.xlu0 %v3790
      %v3792 = vpop.xlane.xlu0 %3791
      %v3793 = vsel %vm2217, %v3784, 0.0
      %3794 = vadd.xlane.f32.xlu0 %v3793
      %v3795 = vpop.xlane.xlu0 %3794
      %v3796 = vsel %vm2227, %v3786, 0.0
      %3797 = vadd.xlane.f32.xlu0 %v3796
      %v3798 = vpop.xlane.xlu0 %3797
      %v3799 = vrcp.pop %v3789
      %v3800 = vmul.f32 1.0, %v3799
      %v3801 = vrcp.pop %v3792
      %v3802 = vmul.f32 1.0, %v3801
      %v3803 = vrcp.pop %v3795
      %v3804 = vmul.f32 1.0, %v3803
      %v3805 = vrcp.pop %v3798
      %v3806 = vmul.f32 1.0, %v3805
      %v3807 = vmul.f32 %v3780, %v3800
      %v3808 = vmul.f32 %v3782, %v3802
      %v3809 = vmul.f32 %v3784, %v3804
      %v3810 = vmul.f32 %v3786, %v3806
      %v3811 = vadd.f32 %v3807, 0.0
      %v3812 = vadd.f32 %v3808, 0.0
      %v3813 = vadd.f32 %v3809, 0.0
      %v3814 = vadd.f32 %v3810, 0.0
      %v3815 = vmul.f32 %v3628, %v2277
      %v3816 = vmul.f32 %v3631, %v2277
      %v3817 = vmul.f32 %v3636, %v2277
      %v3818 = vmul.f32 %v3639, %v2277
      %v3819 = vpack.c.bf16 %v3816, %v3815
      %v3820 = vpack.c.bf16 %v3818, %v3817
      %v3821 = vpack.c.bf16 %v3808, %v3807
      %v3822 = vpack.c.bf16 %v3810, %v3809
      %3823 = vrot.lane.b32.xlu0 %v3628, 120
      %v3824 = vpop.permute.xlu0 %3823
      %3825 = vrot.lane.b32.xlu0 %v3631, 120
      %v3826 = vpop.permute.xlu0 %3825
      %3827 = vrot.lane.b32.xlu0 %v3636, 120
      %v3828 = vpop.permute.xlu0 %3827
      %3829 = vrot.lane.b32.xlu0 %v3639, 120
      %v3830 = vpop.permute.xlu0 %3829
      %3831 = vrot.lane.b32.xlu0 %v3628, 88
      %v3832 = vpop.permute.xlu0 %3831
      %3833 = vrot.lane.b32.xlu0 %v3631, 88
      %v3834 = vpop.permute.xlu0 %3833
      %3835 = vrot.lane.b32.xlu0 %v3636, 88
      %v3836 = vpop.permute.xlu0 %3835
      %3837 = vrot.lane.b32.xlu0 %v3639, 88
      %v3838 = vpop.permute.xlu0 %3837
      %v3839 = vsel %vm2107, %v3824, 0
      %v3841 = vsel %vm2107, %v3826, 0
      %v3843 = vsel %vm2107, %v3828, 0
      %v3845 = vsel %vm2107, %v3830, 0
      %v3847 = vsel %vm2107, %v3832, 0
      %v3849 = vsel %vm2107, %v3834, 0
      %v3851 = vsel %vm2107, %v3836, 0
      %v3853 = vsel %vm2107, %v3838, 0
      %3855 = vmatprep.subr.mxu0 0.0
      %3856 = vmatpush1.xpose.msra.mxu0 %v3847
      %3857 = vmatprep.subr.mxu0 0.0
      %3858 = vmatpush1.xpose.msra.mxu0 %v3849
      %3859 = vmatprep.subr.mxu0 0.0
      %3860 = vmatpush1.xpose.msra.mxu0 %v3851
      %3861 = vmatprep.subr.mxu0 0.0
      %3862 = vmatpush1.xpose.msra.mxu0 %v3853
      %3863 = vmatprep.subr.mxu0 0.0
      %3864 = vmatpush1.xpose.msra.mxu0 0.0
      %3865 = vmatprep.subr.mxu0 0.0
      %3866 = vmatpush1.xpose.msra.mxu0 0.0
      %3867 = vmatprep.subr.mxu0 0.0
      %3868 = vmatpush1.xpose.msra.mxu0 0.0
      %3869 = vmatprep.subr.mxu0 0.0
      %3870 = vmatpush1.xpose.msra.mxu0 0.0
      %3871 = vmatprep.subr.mxu0 0.0
      %3872 = vmatpush1.xpose.msra.mxu0 0.0
      %3873 = vmatprep.subr.mxu0 0.0
      %3874 = vmatpush1.xpose.msra.mxu0 0.0
      %3875 = vmatprep.subr.mxu0 0.0
      %3876 = vmatpush1.xpose.msra.mxu0 0.0
      %3877 = vmatprep.subr.mxu0 0.0
      %3878 = vmatpush1.xpose.msra.mxu0 0.0
      %3879 = vmatprep.subr.mxu0 0.0
      %3880 = vmatpush1.xpose.msra.mxu0 0.0
      %3881 = vmatprep.subr.mxu0 0.0
      %3882 = vmatpush1.xpose.msra.mxu0 0.0
      %3883 = vmatprep.subr.mxu0 0.0
      %3884 = vmatpush1.xpose.msra.mxu0 0.0
      %3885 = vmatprep.subr.mxu0 0.0
      %3886 = vmatpush1.xpose.msra.mxu0 0.0
      %3887 = vmatprep.subr.mxu0 0.0
      %3888 = vmatpush1.xpose.msra.mxu0 0.0
      %3889 = vmatprep.subr.mxu0 0.0
      %3890 = vmatpush1.xpose.msra.mxu0 0.0
      %3891 = vmatprep.subr.mxu0 0.0
      %3892 = vmatpush1.xpose.msra.mxu0 0.0
      %3893 = vmatprep.subr.mxu0 0.0
      %3894 = vmatpush1.xpose.msra.mxu0 0.0
      %3895 = vmatprep.subr.mxu0 0.0
      %3896 = vmatpush1.xpose.msra.mxu0 0.0
      %3897 = vmatprep.subr.mxu0 0.0
      %3898 = vmatpush1.xpose.msra.mxu0 0.0
      %3899 = vmatprep.subr.mxu0 0.0
      %3900 = vmatpush1.xpose.msra.mxu0 0.0
      %3901 = vmatprep.subr.mxu0 0.0
      %3902 = vmatpush1.xpose.msra.mxu0 0.0
      %3903 = vmatprep.subr.mxu0 0.0
      %3904 = vmatpush1.xpose.msra.mxu0 0.0
      %3905 = vmatprep.subr.mxu0 0.0
      %3906 = vmatpush1.xpose.msra.mxu0 0.0
      %3907 = vmatprep.subr.mxu0 0.0
      %3908 = vmatpush1.xpose.msra.mxu0 0.0
      %3909 = vmatprep.subr.mxu0 0.0
      %3910 = vmatpush1.xpose.msra.mxu0 0.0
      %3911 = vmatprep.subr.mxu0 0.0
      %3912 = vmatpush1.xpose.msra.mxu0 0.0
      %3913 = vmatprep.subr.mxu0 0.0
      %3914 = vmatpush1.xpose.msra.mxu0 0.0
      %3915 = vmatprep.subr.mxu0 0.0
      %3916 = vmatpush1.xpose.msra.mxu0 0.0
      %3917 = vmatprep.subr.mxu0 0.0
      %3918 = vmatpush1.xpose.msra.mxu0 0.0
      %3919 = vmatprep.mubr.f32.mxu0 0.0
      %3920 = vmatmul.mubr.f32.gmra.mrb[0].mxu0 %v3839
      %v3921 = vpop.f32.mrb[0].mxu0
      %v3922 = vadd.f32 0.0, %v3921
      %v3923 = vpop.f32.mrb[0].mxu0
      %3924 = vmatprep.mubr.f32.mxu0 0.0
      %3925 = vmatmul.mubr.f32.gmra.mrb[0].mxu0 %v3841
      %v3926 = vpop.f32.mrb[0].mxu0
      %v3927 = vadd.f32 0.0, %v3926
      %v3928 = vpop.f32.mrb[0].mxu0
      %3929 = vmatprep.mubr.f32.mxu0 0.0
      %3930 = vmatmul.mubr.f32.gmra.mrb[0].mxu0 %v3843
      %v3931 = vpop.f32.mrb[0].mxu0
      %v3932 = vadd.f32 0.0, %v3931
      %v3933 = vpop.f32.mrb[0].mxu0
      %3934 = vmatprep.mubr.f32.mxu0 0.0
      %3935 = vmatmul.mubr.f32.gmra.mrb[0].mxu0 %v3845
      %v3936 = vpop.f32.mrb[0].mxu0
      %v3937 = vadd.f32 0.0, %v3936
      %v3938 = vpop.f32.mrb[0].mxu0
      %3939 = vdwg.mxu0
      %v3940 = vmul.f32 %v3922, 0.35355338
      %v3941 = vmul.f32 %v3927, 0.35355338
      %v3942 = vmul.f32 %v3932, 0.35355338
      %v3943 = vmul.f32 %v3937, 0.35355338
      %v3944 = vadd.f32 %v3940, %v2012
      %v3945 = vadd.f32 %v3941, %v2013
      %v3946 = vadd.f32 %v3942, %v2014
      %v3947 = vadd.f32 %v3943, %v2015
      %v3948 = vsel %vm2217, %v3944, -inf
      %3949 = vmax.xlane.f32.xlu0 %v3948
      %v3950 = vpop.xlane.xlu0 %3949
      %v3951 = vsel %vm2217, %v3945, -inf
      %3952 = vmax.xlane.f32.xlu0 %v3951
      %v3953 = vpop.xlane.xlu0 %3952
      %v3954 = vsel %vm2217, %v3946, -inf
      %3955 = vmax.xlane.f32.xlu0 %v3954
      %v3956 = vpop.xlane.xlu0 %3955
      %v3957 = vsel %vm2227, %v3947, -inf
      %3958 = vmax.xlane.f32.xlu0 %v3957
      %v3959 = vpop.xlane.xlu0 %3958
      %v3960 = vsub.f32 %v3944, %v3950
      %v3961 = vsub.f32 %v3945, %v3953
      %v3962 = vsub.f32 %v3946, %v3956
      %v3963 = vsub.f32 %v3947, %v3959
      %v3964 = vmul.f32 %v3960, 1.442695
      %v3965 = vpow.pop %v3964
      %v3966 = vmul.f32 %v3961, 1.442695
      %v3967 = vpow.pop %v3966
      %v3968 = vmul.f32 %v3962, 1.442695
      %v3969 = vpow.pop %v3968
      %v3970 = vmul.f32 %v3963, 1.442695
      %v3971 = vpow.pop %v3970
      %v3972 = vsel %vm2217, %v3965, 0.0
      %3973 = vadd.xlane.f32.xlu0 %v3972
      %v3974 = vpop.xlane.xlu0 %3973
      %v3975 = vsel %vm2217, %v3967, 0.0
      %3976 = vadd.xlane.f32.xlu0 %v3975
      %v3977 = vpop.xlane.xlu0 %3976
      %v3978 = vsel %vm2217, %v3969, 0.0
      %3979 = vadd.xlane.f32.xlu0 %v3978
      %v3980 = vpop.xlane.xlu0 %3979
      %v3981 = vsel %vm2227, %v3971, 0.0
      %3982 = vadd.xlane.f32.xlu0 %v3981
      %v3983 = vpop.xlane.xlu0 %3982
      %v3984 = vrcp.pop %v3974
      %v3985 = vmul.f32 1.0, %v3984
      %v3986 = vrcp.pop %v3977
      %v3987 = vmul.f32 1.0, %v3986
      %v3988 = vrcp.pop %v3980
      %v3989 = vmul.f32 1.0, %v3988
      %v3990 = vrcp.pop %v3983
      %v3991 = vmul.f32 1.0, %v3990
      %v3992 = vmul.f32 %v3965, %v3985
      %v3993 = vmul.f32 %v3967, %v3987
      %v3994 = vmul.f32 %v3969, %v3989
      %v3995 = vmul.f32 %v3971, %v3991
      %v3996 = vadd.f32 %v3811, %v3992
      %v3997 = vadd.f32 %v3812, %v3993
      %v3998 = vadd.f32 %v3813, %v3994
      %v3999 = vadd.f32 %v3814, %v3995
      %v4000 = vmul.f32 %v3628, %v2470
      %v4001 = vmul.f32 %v3631, %v2470
      %v4002 = vmul.f32 %v3636, %v2470
      %v4003 = vmul.f32 %v3639, %v2470
      %v4004 = vpack.c.bf16 %v4001, %v4000
      %v4005 = vpack.c.bf16 %v4003, %v4002
      %v4006 = vpack.c.bf16 %v3993, %v3992
      %v4007 = vpack.c.bf16 %v3995, %v3994
      %4010 = vrot.lane.b32.xlu0 %v4004, 64
      %v4011 = vpop.permute.xlu0 %4010
      %4012 = vrot.lane.b32.xlu0 %v4005, 64
      %v4013 = vpop.permute.xlu0 %4012
      %v4016 = vsel %vm2217, %v4006, 0
      %v4019 = vsel %vm2217, %v4007, 0
      %v4022 = vsel %vm2493, %v4013, 0
      %4024 = vmatprep.subr.bf16.mxu0 0
      %4025 = vmatpush1.bf16.msra.mxu0 %v4011
      %4026 = vmatprep.subr.bf16.mxu0 0
      %4027 = vmatpush1.bf16.msra.mxu0 %v4022
      %4028 = vmatprep.subr.bf16.mxu0 0
      %4029 = vmatpush1.bf16.msra.mxu0 0
      %4030 = vmatprep.subr.bf16.mxu0 0
      %4031 = vmatpush1.bf16.msra.mxu0 0
      %4032 = vmatprep.subr.bf16.mxu0 0
      %4033 = vmatpush1.bf16.msra.mxu0 0
      %4034 = vmatprep.subr.bf16.mxu0 0
      %4035 = vmatpush1.bf16.msra.mxu0 0
      %4036 = vmatprep.subr.bf16.mxu0 0
      %4037 = vmatpush1.bf16.msra.mxu0 0
      %4038 = vmatprep.subr.bf16.mxu0 0
      %4039 = vmatpush1.bf16.msra.mxu0 0
      %4040 = vmatprep.subr.bf16.mxu0 0
      %4041 = vmatpush1.bf16.msra.mxu0 0
      %4042 = vmatprep.subr.bf16.mxu0 0
      %4043 = vmatpush1.bf16.msra.mxu0 0
      %4044 = vmatprep.subr.bf16.mxu0 0
      %4045 = vmatpush1.bf16.msra.mxu0 0
      %4046 = vmatprep.subr.bf16.mxu0 0
      %4047 = vmatpush1.bf16.msra.mxu0 0
      %4048 = vmatprep.subr.bf16.mxu0 0
      %4049 = vmatpush1.bf16.msra.mxu0 0
      %4050 = vmatprep.subr.bf16.mxu0 0
      %4051 = vmatpush1.bf16.msra.mxu0 0
      %4052 = vmatprep.subr.bf16.mxu0 0
      %4053 = vmatpush1.bf16.msra.mxu0 0
      %4054 = vmatprep.subr.bf16.mxu0 0
      %4055 = vmatpush1.bf16.msra.mxu0 0
      %4056 = vmatprep.mubr.bf16.mxu0 0
      %4057 = vmatmul.mubr.bf16.gmra.mrb[0].mxu0 %v4016
      %v4058 = vpop.f32.mrb[0].mxu0
      %v4059 = vadd.f32 0.0, %v4058
      %v4060 = vpop.f32.mrb[0].mxu0
      %v4061 = vpop.f32.mrb[0].mxu0
      %v4062 = vadd.f32 0.0, %v4061
      %v4063 = vpop.f32.mrb[0].mxu0
      %4064 = vmatprep.mubr.bf16.mxu0 0
      %4065 = vmatmul.mubr.bf16.gmra.mrb[0].mxu0 %v4019
      %v4066 = vpop.f32.mrb[0].mxu0
      %v4067 = vadd.f32 0.0, %v4066
      %v4068 = vpop.f32.mrb[0].mxu0
      %v4069 = vpop.f32.mrb[0].mxu0
      %v4070 = vadd.f32 0.0, %v4069
      %v4071 = vpop.f32.mrb[0].mxu0
      %4072 = vdwg.mxu0
      %4075 = vrot.lane.b32.xlu0 %v3819, 64
      %v4076 = vpop.permute.xlu0 %4075
      %4077 = vrot.lane.b32.xlu0 %v3820, 64
      %v4078 = vpop.permute.xlu0 %4077
      %v4081 = vsel %vm2217, %v3821, 0
      %v4084 = vsel %vm2217, %v3822, 0
      %v4087 = vsel %vm2493, %v4078, 0
      %4089 = vmatprep.subr.bf16.mxu0 0
      %4090 = vmatpush1.bf16.msra.mxu0 %v4076
      %4091 = vmatprep.subr.bf16.mxu0 0
      %4092 = vmatpush1.bf16.msra.mxu0 %v4087
      %4093 = vmatprep.subr.bf16.mxu0 0
      %4094 = vmatpush1.bf16.msra.mxu0 0
      %4095 = vmatprep.subr.bf16.mxu0 0
      %4096 = vmatpush1.bf16.msra.mxu0 0
      %4097 = vmatprep.subr.bf16.mxu0 0
      %4098 = vmatpush1.bf16.msra.mxu0 0
      %4099 = vmatprep.subr.bf16.mxu0 0
      %4100 = vmatpush1.bf16.msra.mxu0 0
      %4101 = vmatprep.subr.bf16.mxu0 0
      %4102 = vmatpush1.bf16.msra.mxu0 0
      %4103 = vmatprep.subr.bf16.mxu0 0
      %4104 = vmatpush1.bf16.msra.mxu0 0
      %4105 = vmatprep.subr.bf16.mxu0 0
      %4106 = vmatpush1.bf16.msra.mxu0 0
      %4107 = vmatprep.subr.bf16.mxu0 0
      %4108 = vmatpush1.bf16.msra.mxu0 0
      %4109 = vmatprep.subr.bf16.mxu0 0
      %4110 = vmatpush1.bf16.msra.mxu0 0
      %4111 = vmatprep.subr.bf16.mxu0 0
      %4112 = vmatpush1.bf16.msra.mxu0 0
      %4113 = vmatprep.subr.bf16.mxu0 0
      %4114 = vmatpush1.bf16.msra.mxu0 0
      %4115 = vmatprep.subr.bf16.mxu0 0
      %4116 = vmatpush1.bf16.msra.mxu0 0
      %4117 = vmatprep.subr.bf16.mxu0 0
      %4118 = vmatpush1.bf16.msra.mxu0 0
      %4119 = vmatprep.subr.bf16.mxu0 0
      %4120 = vmatpush1.bf16.msra.mxu0 0
      %4121 = vmatprep.mubr.bf16.mxu0 0
      %4122 = vmatmul.mubr.bf16.gmra.mrb[0].mxu0 %v4081
      %v4123 = vpop.f32.mrb[0].mxu0
      %v4124 = vadd.f32 %v4059, %v4123
      %v4125 = vpop.f32.mrb[0].mxu0
      %v4126 = vpop.f32.mrb[0].mxu0
      %v4127 = vadd.f32 %v4062, %v4126
      %v4128 = vpop.f32.mrb[0].mxu0
      %4129 = vmatprep.mubr.bf16.mxu0 0
      %4130 = vmatmul.mubr.bf16.gmra.mrb[0].mxu0 %v4084
      %v4131 = vpop.f32.mrb[0].mxu0
      %v4132 = vadd.f32 %v4067, %v4131
      %v4133 = vpop.f32.mrb[0].mxu0
      %v4134 = vpop.f32.mrb[0].mxu0
      %v4135 = vadd.f32 %v4070, %v4134
      %v4136 = vpop.f32.mrb[0].mxu0
      %4137 = vdwg.mxu0
      %4138 = vrot.lane.b32.xlu0 %v3628, 112
      %v4139 = vpop.permute.xlu0 %4138
      %4140 = vrot.lane.b32.xlu0 %v3631, 112
      %v4141 = vpop.permute.xlu0 %4140
      %4142 = vrot.lane.b32.xlu0 %v3636, 112
      %v4143 = vpop.permute.xlu0 %4142
      %4144 = vrot.lane.b32.xlu0 %v3639, 112
      %v4145 = vpop.permute.xlu0 %4144
      %4146 = vrot.lane.b32.xlu0 %v3628, 80
      %v4147 = vpop.permute.xlu0 %4146
      %4148 = vrot.lane.b32.xlu0 %v3631, 80
      %v4149 = vpop.permute.xlu0 %4148
      %4150 = vrot.lane.b32.xlu0 %v3636, 80
      %v4151 = vpop.permute.xlu0 %4150
      %4152 = vrot.lane.b32.xlu0 %v3639, 80
      %v4153 = vpop.permute.xlu0 %4152
      %v4154 = vsel %vm2107, %v4139, 0
      %v4156 = vsel %vm2107, %v4141, 0
      %v4158 = vsel %vm2107, %v4143, 0
      %v4160 = vsel %vm2107, %v4145, 0
      %v4162 = vsel %vm2107, %v4147, 0
      %v4164 = vsel %vm2107, %v4149, 0
      %v4166 = vsel %vm2107, %v4151, 0
      %v4168 = vsel %vm2107, %v4153, 0
      %4170 = vmatprep.subr.mxu0 0.0
      %4171 = vmatpush1.xpose.msra.mxu0 %v4162
      %4172 = vmatprep.subr.mxu0 0.0
      %4173 = vmatpush1.xpose.msra.mxu0 %v4164
      %4174 = vmatprep.subr.mxu0 0.0
      %4175 = vmatpush1.xpose.msra.mxu0 %v4166
      %4176 = vmatprep.subr.mxu0 0.0
      %4177 = vmatpush1.xpose.msra.mxu0 %v4168
      %4178 = vmatprep.subr.mxu0 0.0
      %4179 = vmatpush1.xpose.msra.mxu0 0.0
      %4180 = vmatprep.subr.mxu0 0.0
      %4181 = vmatpush1.xpose.msra.mxu0 0.0
      %4182 = vmatprep.subr.mxu0 0.0
      %4183 = vmatpush1.xpose.msra.mxu0 0.0
      %4184 = vmatprep.subr.mxu0 0.0
      %4185 = vmatpush1.xpose.msra.mxu0 0.0
      %4186 = vmatprep.subr.mxu0 0.0
      %4187 = vmatpush1.xpose.msra.mxu0 0.0
      %4188 = vmatprep.subr.mxu0 0.0
      %4189 = vmatpush1.xpose.msra.mxu0 0.0
      %4190 = vmatprep.subr.mxu0 0.0
      %4191 = vmatpush1.xpose.msra.mxu0 0.0
      %4192 = vmatprep.subr.mxu0 0.0
      %4193 = vmatpush1.xpose.msra.mxu0 0.0
      %4194 = vmatprep.subr.mxu0 0.0
      %4195 = vmatpush1.xpose.msra.mxu0 0.0
      %4196 = vmatprep.subr.mxu0 0.0
      %4197 = vmatpush1.xpose.msra.mxu0 0.0
      %4198 = vmatprep.subr.mxu0 0.0
      %4199 = vmatpush1.xpose.msra.mxu0 0.0
      %4200 = vmatprep.subr.mxu0 0.0
      %4201 = vmatpush1.xpose.msra.mxu0 0.0
      %4202 = vmatprep.subr.mxu0 0.0
      %4203 = vmatpush1.xpose.msra.mxu0 0.0
      %4204 = vmatprep.subr.mxu0 0.0
      %4205 = vmatpush1.xpose.msra.mxu0 0.0
      %4206 = vmatprep.subr.mxu0 0.0
      %4207 = vmatpush1.xpose.msra.mxu0 0.0
      %4208 = vmatprep.subr.mxu0 0.0
      %4209 = vmatpush1.xpose.msra.mxu0 0.0
      %4210 = vmatprep.subr.mxu0 0.0
      %4211 = vmatpush1.xpose.msra.mxu0 0.0
      %4212 = vmatprep.subr.mxu0 0.0
      %4213 = vmatpush1.xpose.msra.mxu0 0.0
      %4214 = vmatprep.subr.mxu0 0.0
      %4215 = vmatpush1.xpose.msra.mxu0 0.0
      %4216 = vmatprep.subr.mxu0 0.0
      %4217 = vmatpush1.xpose.msra.mxu0 0.0
      %4218 = vmatprep.subr.mxu0 0.0
      %4219 = vmatpush1.xpose.msra.mxu0 0.0
      %4220 = vmatprep.subr.mxu0 0.0
      %4221 = vmatpush1.xpose.msra.mxu0 0.0
      %4222 = vmatprep.subr.mxu0 0.0
      %4223 = vmatpush1.xpose.msra.mxu0 0.0
      %4224 = vmatprep.subr.mxu0 0.0
      %4225 = vmatpush1.xpose.msra.mxu0 0.0
      %4226 = vmatprep.subr.mxu0 0.0
      %4227 = vmatpush1.xpose.msra.mxu0 0.0
      %4228 = vmatprep.subr.mxu0 0.0
      %4229 = vmatpush1.xpose.msra.mxu0 0.0
      %4230 = vmatprep.subr.mxu0 0.0
      %4231 = vmatpush1.xpose.msra.mxu0 0.0
      %4232 = vmatprep.subr.mxu0 0.0
      %4233 = vmatpush1.xpose.msra.mxu0 0.0
      %4234 = vmatprep.mubr.f32.mxu0 0.0
      %4235 = vmatmul.mubr.f32.gmra.mrb[0].mxu0 %v4154
      %v4236 = vpop.f32.mrb[0].mxu0
      %v4237 = vadd.f32 0.0, %v4236
      %v4238 = vpop.f32.mrb[0].mxu0
      %4239 = vmatprep.mubr.f32.mxu0 0.0
      %4240 = vmatmul.mubr.f32.gmra.mrb[0].mxu0 %v4156
      %v4241 = vpop.f32.mrb[0].mxu0
      %v4242 = vadd.f32 0.0, %v4241
      %v4243 = vpop.f32.mrb[0].mxu0
      %4244 = vmatprep.mubr.f32.mxu0 0.0
      %4245 = vmatmul.mubr.f32.gmra.mrb[0].mxu0 %v4158
      %v4246 = vpop.f32.mrb[0].mxu0
      %v4247 = vadd.f32 0.0, %v4246
      %v4248 = vpop.f32.mrb[0].mxu0
      %4249 = vmatprep.mubr.f32.mxu0 0.0
      %4250 = vmatmul.mubr.f32.gmra.mrb[0].mxu0 %v4160
      %v4251 = vpop.f32.mrb[0].mxu0
      %v4252 = vadd.f32 0.0, %v4251
      %v4253 = vpop.f32.mrb[0].mxu0
      %4254 = vdwg.mxu0
      %v4255 = vmul.f32 %v4237, 0.35355338
      %v4256 = vmul.f32 %v4242, 0.35355338
      %v4257 = vmul.f32 %v4247, 0.35355338
      %v4258 = vmul.f32 %v4252, 0.35355338
      %v4259 = vadd.f32 %v4255, %v2012
      %v4260 = vadd.f32 %v4256, %v2013
      %v4261 = vadd.f32 %v4257, %v2014
      %v4262 = vadd.f32 %v4258, %v2015
      %v4263 = vsel %vm2217, %v4259, -inf
      %4264 = vmax.xlane.f32.xlu0 %v4263
      %v4265 = vpop.xlane.xlu0 %4264
      %v4266 = vsel %vm2217, %v4260, -inf
      %4267 = vmax.xlane.f32.xlu0 %v4266
      %v4268 = vpop.xlane.xlu0 %4267
      %v4269 = vsel %vm2217, %v4261, -inf
      %4270 = vmax.xlane.f32.xlu0 %v4269
      %v4271 = vpop.xlane.xlu0 %4270
      %v4272 = vsel %vm2227, %v4262, -inf
      %4273 = vmax.xlane.f32.xlu0 %v4272
      %v4274 = vpop.xlane.xlu0 %4273
      %v4275 = vsub.f32 %v4259, %v4265
      %v4276 = vsub.f32 %v4260, %v4268
      %v4277 = vsub.f32 %v4261, %v4271
      %v4278 = vsub.f32 %v4262, %v4274
      %v4279 = vmul.f32 %v4275, 1.442695
      %v4280 = vpow.pop %v4279
      %v4281 = vmul.f32 %v4276, 1.442695
      %v4282 = vpow.pop %v4281
      %v4283 = vmul.f32 %v4277, 1.442695
      %v4284 = vpow.pop %v4283
      %v4285 = vmul.f32 %v4278, 1.442695
      %v4286 = vpow.pop %v4285
      %v4287 = vsel %vm2217, %v4280, 0.0
      %4288 = vadd.xlane.f32.xlu0 %v4287
      %v4289 = vpop.xlane.xlu0 %4288
      %v4290 = vsel %vm2217, %v4282, 0.0
      %4291 = vadd.xlane.f32.xlu0 %v4290
      %v4292 = vpop.xlane.xlu0 %4291
      %v4293 = vsel %vm2217, %v4284, 0.0
      %4294 = vadd.xlane.f32.xlu0 %v4293
      %v4295 = vpop.xlane.xlu0 %4294
      %v4296 = vsel %vm2227, %v4286, 0.0
      %4297 = vadd.xlane.f32.xlu0 %v4296
      %v4298 = vpop.xlane.xlu0 %4297
      %v4299 = vrcp.pop %v4289
      %v4300 = vmul.f32 1.0, %v4299
      %v4301 = vrcp.pop %v4292
      %v4302 = vmul.f32 1.0, %v4301
      %v4303 = vrcp.pop %v4295
      %v4304 = vmul.f32 1.0, %v4303
      %v4305 = vrcp.pop %v4298
      %v4306 = vmul.f32 1.0, %v4305
      %v4307 = vmul.f32 %v4280, %v4300
      %v4308 = vmul.f32 %v4282, %v4302
      %v4309 = vmul.f32 %v4284, %v4304
      %v4310 = vmul.f32 %v4286, %v4306
      %v4311 = vadd.f32 %v3996, %v4307
      %v4312 = vadd.f32 %v3997, %v4308
      %v4313 = vadd.f32 %v3998, %v4309
      %v4314 = vadd.f32 %v3999, %v4310
      %v4315 = vmul.f32 %v3628, %v2794
      %v4316 = vmul.f32 %v3631, %v2794
      %v4317 = vmul.f32 %v3636, %v2794
      %v4318 = vmul.f32 %v3639, %v2794
      %v4319 = vpack.c.bf16 %v4316, %v4315
      %v4320 = vpack.c.bf16 %v4318, %v4317
      %v4321 = vpack.c.bf16 %v4308, %v4307
      %v4322 = vpack.c.bf16 %v4310, %v4309
      %4325 = vrot.lane.b32.xlu0 %v4319, 64
      %v4326 = vpop.permute.xlu0 %4325
      %4327 = vrot.lane.b32.xlu0 %v4320, 64
      %v4328 = vpop.permute.xlu0 %4327
      %v4331 = vsel %vm2217, %v4321, 0
      %v4334 = vsel %vm2217, %v4322, 0
      %v4337 = vsel %vm2493, %v4328, 0
      %4339 = vmatprep.subr.bf16.mxu0 0
      %4340 = vmatpush1.bf16.msra.mxu0 %v4326
      %4341 = vmatprep.subr.bf16.mxu0 0
      %4342 = vmatpush1.bf16.msra.mxu0 %v4337
      %4343 = vmatprep.subr.bf16.mxu0 0
      %4344 = vmatpush1.bf16.msra.mxu0 0
      %4345 = vmatprep.subr.bf16.mxu0 0
      %4346 = vmatpush1.bf16.msra.mxu0 0
      %4347 = vmatprep.subr.bf16.mxu0 0
      %4348 = vmatpush1.bf16.msra.mxu0 0
      %4349 = vmatprep.subr.bf16.mxu0 0
      %4350 = vmatpush1.bf16.msra.mxu0 0
      %4351 = vmatprep.subr.bf16.mxu0 0
      %4352 = vmatpush1.bf16.msra.mxu0 0
      %4353 = vmatprep.subr.bf16.mxu0 0
      %4354 = vmatpush1.bf16.msra.mxu0 0
      %4355 = vmatprep.subr.bf16.mxu0 0
      %4356 = vmatpush1.bf16.msra.mxu0 0
      %4357 = vmatprep.subr.bf16.mxu0 0
      %4358 = vmatpush1.bf16.msra.mxu0 0
      %4359 = vmatprep.subr.bf16.mxu0 0
      %4360 = vmatpush1.bf16.msra.mxu0 0
      %4361 = vmatprep.subr.bf16.mxu0 0
      %4362 = vmatpush1.bf16.msra.mxu0 0
      %4363 = vmatprep.subr.bf16.mxu0 0
      %4364 = vmatpush1.bf16.msra.mxu0 0
      %4365 = vmatprep.subr.bf16.mxu0 0
      %4366 = vmatpush1.bf16.msra.mxu0 0
      %4367 = vmatprep.subr.bf16.mxu0 0
      %4368 = vmatpush1.bf16.msra.mxu0 0
      %4369 = vmatprep.subr.bf16.mxu0 0
      %4370 = vmatpush1.bf16.msra.mxu0 0
      %4371 = vmatprep.mubr.bf16.mxu0 0
      %4372 = vmatmul.mubr.bf16.gmra.mrb[0].mxu0 %v4331
      %v4373 = vpop.f32.mrb[0].mxu0
      %v4374 = vadd.f32 0.0, %v4373
      %v4375 = vpop.f32.mrb[0].mxu0
      %v4376 = vpop.f32.mrb[0].mxu0
      %v4377 = vadd.f32 0.0, %v4376
      %v4378 = vpop.f32.mrb[0].mxu0
      %4379 = vmatprep.mubr.bf16.mxu0 0
      %4380 = vmatmul.mubr.bf16.gmra.mrb[0].mxu0 %v4334
      %v4381 = vpop.f32.mrb[0].mxu0
      %v4382 = vadd.f32 0.0, %v4381
      %v4383 = vpop.f32.mrb[0].mxu0
      %v4384 = vpop.f32.mrb[0].mxu0
      %v4385 = vadd.f32 0.0, %v4384
      %v4386 = vpop.f32.mrb[0].mxu0
      %4387 = vdwg.mxu0
      %v4388 = vadd.f32 %v4124, %v4374
      %v4389 = vadd.f32 %v4127, %v4377
      %v4390 = vadd.f32 %v4132, %v4382
      %v4391 = vadd.f32 %v4135, %v4385
      %4392 = vrot.lane.b32.xlu0 %v3628, 104
      %v4393 = vpop.permute.xlu0 %4392
      %4394 = vrot.lane.b32.xlu0 %v3631, 104
      %v4395 = vpop.permute.xlu0 %4394
      %4396 = vrot.lane.b32.xlu0 %v3636, 104
      %v4397 = vpop.permute.xlu0 %4396
      %4398 = vrot.lane.b32.xlu0 %v3639, 104
      %v4399 = vpop.permute.xlu0 %4398
      %4400 = vrot.lane.b32.xlu0 %v3628, 72
      %v4401 = vpop.permute.xlu0 %4400
      %4402 = vrot.lane.b32.xlu0 %v3631, 72
      %v4403 = vpop.permute.xlu0 %4402
      %4404 = vrot.lane.b32.xlu0 %v3636, 72
      %v4405 = vpop.permute.xlu0 %4404
      %4406 = vrot.lane.b32.xlu0 %v3639, 72
      %v4407 = vpop.permute.xlu0 %4406
      %v4408 = vsel %vm2107, %v4393, 0
      %v4410 = vsel %vm2107, %v4395, 0
      %v4412 = vsel %vm2107, %v4397, 0
      %v4414 = vsel %vm2107, %v4399, 0
      %v4416 = vsel %vm2107, %v4401, 0
      %v4418 = vsel %vm2107, %v4403, 0
      %v4420 = vsel %vm2107, %v4405, 0
      %v4422 = vsel %vm2107, %v4407, 0
      %4424 = vmatprep.subr.mxu0 0.0
      %4425 = vmatpush1.xpose.msra.mxu0 %v4416
      %4426 = vmatprep.subr.mxu0 0.0
      %4427 = vmatpush1.xpose.msra.mxu0 %v4418
      %4428 = vmatprep.subr.mxu0 0.0
      %4429 = vmatpush1.xpose.msra.mxu0 %v4420
      %4430 = vmatprep.subr.mxu0 0.0
      %4431 = vmatpush1.xpose.msra.mxu0 %v4422
      %4432 = vmatprep.subr.mxu0 0.0
      %4433 = vmatpush1.xpose.msra.mxu0 0.0
      %4434 = vmatprep.subr.mxu0 0.0
      %4435 = vmatpush1.xpose.msra.mxu0 0.0
      %4436 = vmatprep.subr.mxu0 0.0
      %4437 = vmatpush1.xpose.msra.mxu0 0.0
      %4438 = vmatprep.subr.mxu0 0.0
      %4439 = vmatpush1.xpose.msra.mxu0 0.0
      %4440 = vmatprep.subr.mxu0 0.0
      %4441 = vmatpush1.xpose.msra.mxu0 0.0
      %4442 = vmatprep.subr.mxu0 0.0
      %4443 = vmatpush1.xpose.msra.mxu0 0.0
      %4444 = vmatprep.subr.mxu0 0.0
      %4445 = vmatpush1.xpose.msra.mxu0 0.0
      %4446 = vmatprep.subr.mxu0 0.0
      %4447 = vmatpush1.xpose.msra.mxu0 0.0
      %4448 = vmatprep.subr.mxu0 0.0
      %4449 = vmatpush1.xpose.msra.mxu0 0.0
      %4450 = vmatprep.subr.mxu0 0.0
      %4451 = vmatpush1.xpose.msra.mxu0 0.0
      %4452 = vmatprep.subr.mxu0 0.0
      %4453 = vmatpush1.xpose.msra.mxu0 0.0
      %4454 = vmatprep.subr.mxu0 0.0
      %4455 = vmatpush1.xpose.msra.mxu0 0.0
      %4456 = vmatprep.subr.mxu0 0.0
      %4457 = vmatpush1.xpose.msra.mxu0 0.0
      %4458 = vmatprep.subr.mxu0 0.0
      %4459 = vmatpush1.xpose.msra.mxu0 0.0
      %4460 = vmatprep.subr.mxu0 0.0
      %4461 = vmatpush1.xpose.msra.mxu0 0.0
      %4462 = vmatprep.subr.mxu0 0.0
      %4463 = vmatpush1.xpose.msra.mxu0 0.0
      %4464 = vmatprep.subr.mxu0 0.0
      %4465 = vmatpush1.xpose.msra.mxu0 0.0
      %4466 = vmatprep.subr.mxu0 0.0
      %4467 = vmatpush1.xpose.msra.mxu0 0.0
      %4468 = vmatprep.subr.mxu0 0.0
      %4469 = vmatpush1.xpose.msra.mxu0 0.0
      %4470 = vmatprep.subr.mxu0 0.0
      %4471 = vmatpush1.xpose.msra.mxu0 0.0
      %4472 = vmatprep.subr.mxu0 0.0
      %4473 = vmatpush1.xpose.msra.mxu0 0.0
      %4474 = vmatprep.subr.mxu0 0.0
      %4475 = vmatpush1.xpose.msra.mxu0 0.0
      %4476 = vmatprep.subr.mxu0 0.0
      %4477 = vmatpush1.xpose.msra.mxu0 0.0
      %4478 = vmatprep.subr.mxu0 0.0
      %4479 = vmatpush1.xpose.msra.mxu0 0.0
      %4480 = vmatprep.subr.mxu0 0.0
      %4481 = vmatpush1.xpose.msra.mxu0 0.0
      %4482 = vmatprep.subr.mxu0 0.0
      %4483 = vmatpush1.xpose.msra.mxu0 0.0
      %4484 = vmatprep.subr.mxu0 0.0
      %4485 = vmatpush1.xpose.msra.mxu0 0.0
      %4486 = vmatprep.subr.mxu0 0.0
      %4487 = vmatpush1.xpose.msra.mxu0 0.0
      %4488 = vmatprep.mubr.f32.mxu0 0.0
      %4489 = vmatmul.mubr.f32.gmra.mrb[0].mxu0 %v4408
      %v4490 = vpop.f32.mrb[0].mxu0
      %v4491 = vadd.f32 0.0, %v4490
      %v4492 = vpop.f32.mrb[0].mxu0
      %4493 = vmatprep.mubr.f32.mxu0 0.0
      %4494 = vmatmul.mubr.f32.gmra.mrb[0].mxu0 %v4410
      %v4495 = vpop.f32.mrb[0].mxu0
      %v4496 = vadd.f32 0.0, %v4495
      %v4497 = vpop.f32.mrb[0].mxu0
      %4498 = vmatprep.mubr.f32.mxu0 0.0
      %4499 = vmatmul.mubr.f32.gmra.mrb[0].mxu0 %v4412
      %v4500 = vpop.f32.mrb[0].mxu0
      %v4501 = vadd.f32 0.0, %v4500
      %v4502 = vpop.f32.mrb[0].mxu0
      %4503 = vmatprep.mubr.f32.mxu0 0.0
      %4504 = vmatmul.mubr.f32.gmra.mrb[0].mxu0 %v4414
      %v4505 = vpop.f32.mrb[0].mxu0
      %v4506 = vadd.f32 0.0, %v4505
      %v4507 = vpop.f32.mrb[0].mxu0
      %4508 = vdwg.mxu0
      %v4509 = vmul.f32 %v4491, 0.35355338
      %v4510 = vmul.f32 %v4496, 0.35355338
      %v4511 = vmul.f32 %v4501, 0.35355338
      %v4512 = vmul.f32 %v4506, 0.35355338
      %v4513 = vadd.f32 %v4509, %v2012
      %v4514 = vadd.f32 %v4510, %v2013
      %v4515 = vadd.f32 %v4511, %v2014
      %v4516 = vadd.f32 %v4512, %v2015
      %v4517 = vsel %vm2217, %v4513, -inf
      %4518 = vmax.xlane.f32.xlu0 %v4517
      %v4519 = vpop.xlane.xlu0 %4518
      %v4520 = vsel %vm2217, %v4514, -inf
      %4521 = vmax.xlane.f32.xlu0 %v4520
      %v4522 = vpop.xlane.xlu0 %4521
      %v4523 = vsel %vm2217, %v4515, -inf
      %4524 = vmax.xlane.f32.xlu0 %v4523
      %v4525 = vpop.xlane.xlu0 %4524
      %v4526 = vsel %vm2227, %v4516, -inf
      %4527 = vmax.xlane.f32.xlu0 %v4526
      %v4528 = vpop.xlane.xlu0 %4527
      %v4529 = vsub.f32 %v4513, %v4519
      %v4530 = vsub.f32 %v4514, %v4522
      %v4531 = vsub.f32 %v4515, %v4525
      %v4532 = vsub.f32 %v4516, %v4528
      %v4533 = vmul.f32 %v4529, 1.442695
      %v4534 = vpow.pop %v4533
      %v4535 = vmul.f32 %v4530, 1.442695
      %v4536 = vpow.pop %v4535
      %v4537 = vmul.f32 %v4531, 1.442695
      %v4538 = vpow.pop %v4537
      %v4539 = vmul.f32 %v4532, 1.442695
      %v4540 = vpow.pop %v4539
      %v4541 = vsel %vm2217, %v4534, 0.0
      %4542 = vadd.xlane.f32.xlu0 %v4541
      %v4543 = vpop.xlane.xlu0 %4542
      %v4544 = vsel %vm2217, %v4536, 0.0
      %4545 = vadd.xlane.f32.xlu0 %v4544
      %v4546 = vpop.xlane.xlu0 %4545
      %v4547 = vsel %vm2217, %v4538, 0.0
      %4548 = vadd.xlane.f32.xlu0 %v4547
      %v4549 = vpop.xlane.xlu0 %4548
      %v4550 = vsel %vm2227, %v4540, 0.0
      %4551 = vadd.xlane.f32.xlu0 %v4550
      %v4552 = vpop.xlane.xlu0 %4551
      %v4553 = vrcp.pop %v4543
      %v4554 = vmul.f32 1.0, %v4553
      %v4555 = vrcp.pop %v4546
      %v4556 = vmul.f32 1.0, %v4555
      %v4557 = vrcp.pop %v4549
      %v4558 = vmul.f32 1.0, %v4557
      %v4559 = vrcp.pop %v4552
      %v4560 = vmul.f32 1.0, %v4559
      %v4561 = vmul.f32 %v4534, %v4554
      %v4562 = vmul.f32 %v4536, %v4556
      %v4563 = vmul.f32 %v4538, %v4558
      %v4564 = vmul.f32 %v4540, %v4560
      %v4565 = vadd.f32 %v4311, %v4561
      %v4566 = vadd.f32 %v4312, %v4562
      %v4567 = vadd.f32 %v4313, %v4563
      %v4568 = vadd.f32 %v4314, %v4564
      %v4569 = vmul.f32 %v3628, %v3056
      %v4570 = vmul.f32 %v3631, %v3056
      %v4571 = vmul.f32 %v3636, %v3056
      %v4572 = vmul.f32 %v3639, %v3056
      %v4573 = vpack.c.bf16 %v4570, %v4569
      %v4574 = vpack.c.bf16 %v4572, %v4571
      %v4575 = vpack.c.bf16 %v4562, %v4561
      %v4576 = vpack.c.bf16 %v4564, %v4563
      %4579 = vrot.lane.b32.xlu0 %v4573, 64
      %v4580 = vpop.permute.xlu0 %4579
      %4581 = vrot.lane.b32.xlu0 %v4574, 64
      %v4582 = vpop.permute.xlu0 %4581
      %v4585 = vsel %vm2217, %v4575, 0
      %v4588 = vsel %vm2217, %v4576, 0
      %v4591 = vsel %vm2493, %v4582, 0
      %4593 = vmatprep.subr.bf16.mxu0 0
      %4594 = vmatpush1.bf16.msra.mxu0 %v4580
      %4595 = vmatprep.subr.bf16.mxu0 0
      %4596 = vmatpush1.bf16.msra.mxu0 %v4591
      %4597 = vmatprep.subr.bf16.mxu0 0
      %4598 = vmatpush1.bf16.msra.mxu0 0
      %4599 = vmatprep.subr.bf16.mxu0 0
      %4600 = vmatpush1.bf16.msra.mxu0 0
      %4601 = vmatprep.subr.bf16.mxu0 0
      %4602 = vmatpush1.bf16.msra.mxu0 0
      %4603 = vmatprep.subr.bf16.mxu0 0
      %4604 = vmatpush1.bf16.msra.mxu0 0
      %4605 = vmatprep.subr.bf16.mxu0 0
      %4606 = vmatpush1.bf16.msra.mxu0 0
      %4607 = vmatprep.subr.bf16.mxu0 0
      %4608 = vmatpush1.bf16.msra.mxu0 0
      %4609 = vmatprep.subr.bf16.mxu0 0
      %4610 = vmatpush1.bf16.msra.mxu0 0
      %4611 = vmatprep.subr.bf16.mxu0 0
      %4612 = vmatpush1.bf16.msra.mxu0 0
      %4613 = vmatprep.subr.bf16.mxu0 0
      %4614 = vmatpush1.bf16.msra.mxu0 0
      %4615 = vmatprep.subr.bf16.mxu0 0
      %4616 = vmatpush1.bf16.msra.mxu0 0
      %4617 = vmatprep.subr.bf16.mxu0 0
      %4618 = vmatpush1.bf16.msra.mxu0 0
      %4619 = vmatprep.subr.bf16.mxu0 0
      %4620 = vmatpush1.bf16.msra.mxu0 0
      %4621 = vmatprep.subr.bf16.mxu0 0
      %4622 = vmatpush1.bf16.msra.mxu0 0
      %4623 = vmatprep.subr.bf16.mxu0 0
      %4624 = vmatpush1.bf16.msra.mxu0 0
      %4625 = vmatprep.mubr.bf16.mxu0 0
      %4626 = vmatmul.mubr.bf16.gmra.mrb[0].mxu0 %v4585
      %v4627 = vpop.f32.mrb[0].mxu0
      %v4628 = vadd.f32 0.0, %v4627
      %v4629 = vpop.f32.mrb[0].mxu0
      %v4630 = vpop.f32.mrb[0].mxu0
      %v4631 = vadd.f32 0.0, %v4630
      %v4632 = vpop.f32.mrb[0].mxu0
      %4633 = vmatprep.mubr.bf16.mxu0 0
      %4634 = vmatmul.mubr.bf16.gmra.mrb[0].mxu0 %v4588
      %v4635 = vpop.f32.mrb[0].mxu0
      %v4636 = vadd.f32 0.0, %v4635
      %v4637 = vpop.f32.mrb[0].mxu0
      %v4638 = vpop.f32.mrb[0].mxu0
      %v4639 = vadd.f32 0.0, %v4638
      %v4640 = vpop.f32.mrb[0].mxu0
      %4641 = vdwg.mxu0
      %v4642 = vadd.f32 %v4388, %v4628
      %v4643 = vadd.f32 %v4389, %v4631
      %v4644 = vadd.f32 %v4390, %v4636
      %v4645 = vadd.f32 %v4391, %v4639
      %v4646 = vld [vmem:[%s2 + $0x180] sm:$0xf]
      %v4647 = vld [vmem:[%s2 + $0x184] sm:$0xf]
      %v4648 = vld [vmem:[%s2 + $0x188] sm:$0xf]
      %v4649 = vld [vmem:[%s2 + $0x18c] sm:$0xf]
      %v4650 = vpack.c.bf16 %v4643, %v4642
      %v4651 = vpack.c.bf16 %v4645, %v4644
      %v4652 = vlaneseq
      %v4653 = vshrl.u32 %v4652, 7
      %v4654 = vsub.s32 1, %v4653
      %v4655 = vrot.slane %v3564, %v4654
      %v4660 = vunpack.c.l.b16 %v4646
      %v4661 = vunpack.c.l.b16 %v4647
      %v4662 = vunpack.c.l.b16 %v4648
      %v4663 = vunpack.c.l.b16 %v4649
      %v4664 = vpack.c.b16 %v4661, %v4660
      %v4665 = vpack.c.b16 %v4663, %v4662
      %v4669 = vsel %vm964, %v4650, 0
      %v4672 = vsel %vm964, %v4651, 0
      %4674 = vmatprep.subr.bf16.mxu0 0
      %4675 = vmatpush1.bf16.msra.mxu0 %v4664
      %4676 = vmatprep.subr.bf16.mxu0 0
      %4677 = vmatpush1.bf16.msra.mxu0 %v4665
      %4678 = vmatprep.subr.bf16.mxu0 0
      %4679 = vmatpush1.bf16.msra.mxu0 0
      %4680 = vmatprep.subr.bf16.mxu0 0
      %4681 = vmatpush1.bf16.msra.mxu0 0
      %4682 = vmatprep.subr.bf16.mxu0 0
      %4683 = vmatpush1.bf16.msra.mxu0 0
      %4684 = vmatprep.subr.bf16.mxu0 0
      %4685 = vmatpush1.bf16.msra.mxu0 0
      %4686 = vmatprep.subr.bf16.mxu0 0
      %4687 = vmatpush1.bf16.msra.mxu0 0
      %4688 = vmatprep.subr.bf16.mxu0 0
      %4689 = vmatpush1.bf16.msra.mxu0 0
      %4690 = vmatprep.subr.bf16.mxu0 0
      %4691 = vmatpush1.bf16.msra.mxu0 0
      %4692 = vmatprep.subr.bf16.mxu0 0
      %4693 = vmatpush1.bf16.msra.mxu0 0
      %4694 = vmatprep.subr.bf16.mxu0 0
      %4695 = vmatpush1.bf16.msra.mxu0 0
      %4696 = vmatprep.subr.bf16.mxu0 0
      %4697 = vmatpush1.bf16.msra.mxu0 0
      %4698 = vmatprep.subr.bf16.mxu0 0
      %4699 = vmatpush1.bf16.msra.mxu0 0
      %4700 = vmatprep.subr.bf16.mxu0 0
      %4701 = vmatpush1.bf16.msra.mxu0 0
      %4702 = vmatprep.subr.bf16.mxu0 0
      %4703 = vmatpush1.bf16.msra.mxu0 0
      %4704 = vmatprep.subr.bf16.mxu0 0
      %4705 = vmatpush1.bf16.msra.mxu0 0
      %4706 = vmatprep.mubr.bf16.mxu0 0
      %4707 = vmatmul.mubr.bf16.gmra.mrb[0].mxu0 %v4669
      %v4708 = vpop.f32.mrb[0].mxu0
      %v4709 = vadd.f32 %v4655, %v4708
      %v4710 = vpop.f32.mrb[0].mxu0
      %v4711 = vpop.f32.mrb[0].mxu0
      %v4712 = vadd.f32 %v4655, %v4711
      %v4713 = vpop.f32.mrb[0].mxu0
      %4714 = vmatprep.mubr.bf16.mxu0 0
      %4715 = vmatmul.mubr.bf16.gmra.mrb[0].mxu0 %v4672
      %v4716 = vpop.f32.mrb[0].mxu0
      %v4717 = vadd.f32 %v4655, %v4716
      %v4718 = vpop.f32.mrb[0].mxu0
      %v4719 = vpop.f32.mrb[0].mxu0
      %v4720 = vadd.f32 %v4655, %v4719
      %v4721 = vpop.f32.mrb[0].mxu0
      %4722 = vdwg.mxu0
      %v4723 = vadd.f32 %v3552, %v4709
      %v4724 = vadd.f32 %v3553, %v4712
      %v4725 = vadd.f32 %v3554, %v4717
      %v4726 = vadd.f32 %v3555, %v4720
      %v4727 = vsel %vm964, %v4723, 0.0
      %4728 = vadd.xlane.f32.xlu0 %v4727
      %v4729 = vpop.xlane.xlu0 %4728
      %v4730 = vsel %vm964, %v4724, 0.0
      %4731 = vadd.xlane.f32.xlu0 %v4730
      %v4732 = vpop.xlane.xlu0 %4731
      %v4733 = vsel %vm964, %v4725, 0.0
      %4734 = vadd.xlane.f32.xlu0 %v4733
      %v4735 = vpop.xlane.xlu0 %4734
      %v4736 = vsel %vm974, %v4726, 0.0
      %4737 = vadd.xlane.f32.xlu0 %v4736
      %v4738 = vpop.xlane.xlu0 %4737
      %v4739 = vmul.f32 %v4729, %v978
      %v4740 = vmul.f32 %v4732, %v978
      %v4741 = vmul.f32 %v4735, %v978
      %v4742 = vmul.f32 %v4738, %v978
      %v4743 = vsub.f32 %v4723, %v4739
      %v4744 = vsub.f32 %v4724, %v4740
      %v4745 = vsub.f32 %v4725, %v4741
      %v4746 = vsub.f32 %v4726, %v4742
      %v4747 = vmul.f32 %v4743, %v4743
      %v4748 = vmul.f32 %v4744, %v4744
      %v4749 = vmul.f32 %v4745, %v4745
      %v4750 = vmul.f32 %v4746, %v4746
      %v4751 = vsel %vm964, %v4747, 0.0
      %4752 = vadd.xlane.f32.xlu0 %v4751
      %v4753 = vpop.xlane.xlu0 %4752
      %v4754 = vsel %vm964, %v4748, 0.0
      %4755 = vadd.xlane.f32.xlu0 %v4754
      %v4756 = vpop.xlane.xlu0 %4755
      %v4757 = vsel %vm964, %v4749, 0.0
      %4758 = vadd.xlane.f32.xlu0 %v4757
      %v4759 = vpop.xlane.xlu0 %4758
      %v4760 = vsel %vm974, %v4750, 0.0
      %4761 = vadd.xlane.f32.xlu0 %v4760
      %v4762 = vpop.xlane.xlu0 %4761
      %v4763 = vmul.f32 %v4753, %v978
      %v4764 = vmul.f32 %v4756, %v978
      %v4765 = vmul.f32 %v4759, %v978
      %v4766 = vmul.f32 %v4762, %v978
      %v4767 = vadd.f32 %v4763, 1e-05
      %v4768 = vadd.f32 %v4764, 1e-05
      %v4769 = vadd.f32 %v4765, 1e-05
      %v4770 = vadd.f32 %v4766, 1e-05
      %v4771 = vrsqrt.pop %v4767
      %v4772 = vrsqrt.pop %v4768
      %v4773 = vrsqrt.pop %v4769
      %v4774 = vrsqrt.pop %v4770
      %v4775 = vmul.f32 %v4743, %v4771
      %v4776 = vmul.f32 %v4744, %v4772
      %v4777 = vmul.f32 %v4745, %v4773
      %v4778 = vmul.f32 %v4746, %v4774
      %v4779 = vlaneseq
      %v4780 = vshrl.u32 %v4779, 7
      %v4781 = vsub.s32 2, %v4780
      %v4782 = vrot.slane %v3564, %v4781
      %v4783 = vmul.f32 %v4775, %v4782
      %v4784 = vmul.f32 %v4776, %v4782
      %v4785 = vmul.f32 %v4777, %v4782
      %v4786 = vmul.f32 %v4778, %v4782
      %v4787 = vlaneseq
      %v4788 = vshrl.u32 %v4787, 7
      %v4789 = vsub.s32 3, %v4788
      %v4790 = vrot.slane %v3564, %v4789
      %v4791 = vadd.f32 %v4783, %v4790
      %v4792 = vadd.f32 %v4784, %v4790
      %v4793 = vadd.f32 %v4785, %v4790
      %v4794 = vadd.f32 %v4786, %v4790
      %v4795 = vld [vmem:[%s2 + $0x190] sm:$0xf]
      %v4796 = vld [vmem:[%s2 + $0x194] sm:$0xf]
      %v4797 = vld [vmem:[%s2 + $0x198] sm:$0xf]
      %v4798 = vld [vmem:[%s2 + $0x19c] sm:$0xf]
      %v4799 = vpack.c.bf16 %v4792, %v4791
      %v4800 = vpack.c.bf16 %v4794, %v4793
      %v4801 = vlaneseq
      %v4802 = vshrl.u32 %v4801, 7
      %v4803 = vsub.s32 4, %v4802
      %v4804 = vrot.slane %v3564, %v4803
      %v4809 = vunpack.c.l.b16 %v4795
      %v4810 = vunpack.c.l.b16 %v4796
      %v4811 = vunpack.c.l.b16 %v4797
      %v4812 = vunpack.c.l.b16 %v4798
      %v4813 = vpack.c.b16 %v4810, %v4809
      %v4814 = vpack.c.b16 %v4812, %v4811
      %v4818 = vsel %vm964, %v4799, 0
      %v4821 = vsel %vm964, %v4800, 0
      %4823 = vmatprep.subr.bf16.mxu0 0
      %4824 = vmatpush1.bf16.msra.mxu0 %v4813
      %4825 = vmatprep.subr.bf16.mxu0 0
      %4826 = vmatpush1.bf16.msra.mxu0 %v4814
      %4827 = vmatprep.subr.bf16.mxu0 0
      %4828 = vmatpush1.bf16.msra.mxu0 0
      %4829 = vmatprep.subr.bf16.mxu0 0
      %4830 = vmatpush1.bf16.msra.mxu0 0
      %4831 = vmatprep.subr.bf16.mxu0 0
      %4832 = vmatpush1.bf16.msra.mxu0 0
      %4833 = vmatprep.subr.bf16.mxu0 0
      %4834 = vmatpush1.bf16.msra.mxu0 0
      %4835 = vmatprep.subr.bf16.mxu0 0
      %4836 = vmatpush1.bf16.msra.mxu0 0
      %4837 = vmatprep.subr.bf16.mxu0 0
      %4838 = vmatpush1.bf16.msra.mxu0 0
      %4839 = vmatprep.subr.bf16.mxu0 0
      %4840 = vmatpush1.bf16.msra.mxu0 0
      %4841 = vmatprep.subr.bf16.mxu0 0
      %4842 = vmatpush1.bf16.msra.mxu0 0
      %4843 = vmatprep.subr.bf16.mxu0 0
      %4844 = vmatpush1.bf16.msra.mxu0 0
      %4845 = vmatprep.subr.bf16.mxu0 0
      %4846 = vmatpush1.bf16.msra.mxu0 0
      %4847 = vmatprep.subr.bf16.mxu0 0
      %4848 = vmatpush1.bf16.msra.mxu0 0
      %4849 = vmatprep.subr.bf16.mxu0 0
      %4850 = vmatpush1.bf16.msra.mxu0 0
      %4851 = vmatprep.subr.bf16.mxu0 0
      %4852 = vmatpush1.bf16.msra.mxu0 0
      %4853 = vmatprep.subr.bf16.mxu0 0
      %4854 = vmatpush1.bf16.msra.mxu0 0
      %4855 = vmatprep.mubr.bf16.mxu0 0
      %4856 = vmatmul.mubr.bf16.gmra.mrb[0].mxu0 %v4818
      %v4857 = vpop.f32.mrb[0].mxu0
      %v4858 = vadd.f32 %v4804, %v4857
      %v4859 = vpop.f32.mrb[0].mxu0
      %v4860 = vpop.f32.mrb[0].mxu0
      %v4861 = vadd.f32 %v4804, %v4860
      %v4862 = vpop.f32.mrb[0].mxu0
      %4863 = vmatprep.mubr.bf16.mxu0 0
      %4864 = vmatmul.mubr.bf16.gmra.mrb[0].mxu0 %v4821
      %v4865 = vpop.f32.mrb[0].mxu0
      %v4866 = vadd.f32 %v4804, %v4865
      %v4867 = vpop.f32.mrb[0].mxu0
      %v4868 = vpop.f32.mrb[0].mxu0
      %v4869 = vadd.f32 %v4804, %v4868
      %v4870 = vpop.f32.mrb[0].mxu0
      %4871 = vdwg.mxu0
      %v4872 = vmax.f32 %v4858, 0.0
      %v4873 = vmax.f32 %v4861, 0.0
      %v4874 = vmax.f32 %v4866, 0.0
      %v4875 = vmax.f32 %v4869, 0.0
      %v4876 = vld [vmem:[%s2 + $0x1a0] sm:$0xf]
      %v4877 = vld [vmem:[%s2 + $0x1a4] sm:$0xf]
      %v4878 = vld [vmem:[%s2 + $0x1a8] sm:$0xf]
      %v4879 = vld [vmem:[%s2 + $0x1ac] sm:$0xf]
      %v4880 = vld [vmem:[%s2 + $0x1b0] sm:$0xf]
      %v4881 = vld [vmem:[%s2 + $0x1b4] sm:$0xf]
      %v4882 = vld [vmem:[%s2 + $0x1b8] sm:$0xf]
      %v4883 = vld [vmem:[%s2 + $0x1bc] sm:$0xf]
      %v4884 = vld [vmem:[%s2 + $0x1c0] sm:$0xf]
      %v4885 = vld [vmem:[%s2 + $0x1c4] sm:$0xf]
      %v4886 = vld [vmem:[%s2 + $0x1c8] sm:$0xf]
      %v4887 = vld [vmem:[%s2 + $0x1cc] sm:$0xf]
      %v4888 = vld [vmem:[%s2 + $0x1d0] sm:$0xf]
      %v4889 = vld [vmem:[%s2 + $0x1d4] sm:$0xf]
      %v4890 = vld [vmem:[%s2 + $0x1d8] sm:$0xf]
      %v4891 = vld [vmem:[%s2 + $0x1dc] sm:$0xf]
      %v4892 = vpack.c.bf16 %v4873, %v4872
      %v4893 = vpack.c.bf16 %v4875, %v4874
      %v4894 = vlaneseq
      %v4895 = vshrl.u32 %v4894, 7
      %v4896 = vsub.s32 5, %v4895
      %v4897 = vrot.slane %v3564, %v4896
      %v4914 = vunpack.c.l.b16 %v4876
      %v4915 = vunpack.c.l.b16 %v4877
      %v4916 = vunpack.c.l.b16 %v4878
      %v4917 = vunpack.c.l.b16 %v4879
      %v4918 = vunpack.c.l.b16 %v4880
      %v4919 = vunpack.c.l.b16 %v4881
      %v4920 = vunpack.c.l.b16 %v4882
      %v4921 = vunpack.c.l.b16 %v4883
      %v4922 = vunpack.c.l.b16 %v4884
      %v4923 = vunpack.c.l.b16 %v4885
      %v4924 = vunpack.c.l.b16 %v4886
      %v4925 = vunpack.c.l.b16 %v4887
      %v4926 = vunpack.c.l.b16 %v4888
      %v4927 = vunpack.c.l.b16 %v4889
      %v4928 = vunpack.c.l.b16 %v4890
      %v4929 = vunpack.c.l.b16 %v4891
      %v4930 = vpack.c.b16 %v4915, %v4914
      %v4931 = vpack.c.b16 %v4917, %v4916
      %v4932 = vpack.c.b16 %v4919, %v4918
      %v4933 = vpack.c.b16 %v4921, %v4920
      %v4934 = vpack.c.b16 %v4923, %v4922
      %v4935 = vpack.c.b16 %v4925, %v4924
      %v4936 = vpack.c.b16 %v4927, %v4926
      %v4937 = vpack.c.b16 %v4929, %v4928
      %4946 = vmatprep.subr.bf16.mxu0 0
      %4947 = vmatpush1.bf16.msra.mxu0 %v4930
      %4948 = vmatprep.subr.bf16.mxu0 0
      %4949 = vmatpush1.bf16.msra.mxu0 %v4931
      %4950 = vmatprep.subr.bf16.mxu0 0
      %4951 = vmatpush1.bf16.msra.mxu0 %v4932
      %4952 = vmatprep.subr.bf16.mxu0 0
      %4953 = vmatpush1.bf16.msra.mxu0 %v4933
      %4954 = vmatprep.subr.bf16.mxu0 0
      %4955 = vmatpush1.bf16.msra.mxu0 %v4934
      %4956 = vmatprep.subr.bf16.mxu0 0
      %4957 = vmatpush1.bf16.msra.mxu0 %v4935
      %4958 = vmatprep.subr.bf16.mxu0 0
      %4959 = vmatpush1.bf16.msra.mxu0 %v4936
      %4960 = vmatprep.subr.bf16.mxu0 0
      %4961 = vmatpush1.bf16.msra.mxu0 %v4937
      %4962 = vmatprep.subr.bf16.mxu0 0
      %4963 = vmatpush1.bf16.msra.mxu0 0
      %4964 = vmatprep.subr.bf16.mxu0 0
      %4965 = vmatpush1.bf16.msra.mxu0 0
      %4966 = vmatprep.subr.bf16.mxu0 0
      %4967 = vmatpush1.bf16.msra.mxu0 0
      %4968 = vmatprep.subr.bf16.mxu0 0
      %4969 = vmatpush1.bf16.msra.mxu0 0
      %4970 = vmatprep.subr.bf16.mxu0 0
      %4971 = vmatpush1.bf16.msra.mxu0 0
      %4972 = vmatprep.subr.bf16.mxu0 0
      %4973 = vmatpush1.bf16.msra.mxu0 0
      %4974 = vmatprep.subr.bf16.mxu0 0
      %4975 = vmatpush1.bf16.msra.mxu0 0
      %4976 = vmatprep.subr.bf16.mxu0 0
      %4977 = vmatpush1.bf16.msra.mxu0 0
      %4978 = vmatprep.mubr.bf16.mxu0 0
      %4979 = vmatmul.mubr.bf16.gmra.mrb[0].mxu0 %v4892
      %v4980 = vpop.f32.mrb[0].mxu0
      %v4981 = vadd.f32 %v4897, %v4980
      %v4982 = vpop.f32.mrb[0].mxu0
      %v4983 = vpop.f32.mrb[0].mxu0
      %v4984 = vadd.f32 %v4897, %v4983
      %v4985 = vpop.f32.mrb[0].mxu0
      %4986 = vmatprep.mubr.bf16.mxu0 0
      %4987 = vmatmul.mubr.bf16.gmra.mrb[0].mxu0 %v4893
      %v4988 = vpop.f32.mrb[0].mxu0
      %v4989 = vadd.f32 %v4897, %v4988
      %v4990 = vpop.f32.mrb[0].mxu0
      %v4991 = vpop.f32.mrb[0].mxu0
      %v4992 = vadd.f32 %v4897, %v4991
      %v4993 = vpop.f32.mrb[0].mxu0
      %4994 = vdwg.mxu0
      %v4995 = vadd.f32 %v4791, %v4981
      %v4996 = vadd.f32 %v4792, %v4984
      %v4997 = vadd.f32 %v4793, %v4989
      %v4998 = vadd.f32 %v4794, %v4992
      %v4999 = vsel %vm964, %v4995, 0.0
      %5000 = vadd.xlane.f32.xlu0 %v4999
      %v5001 = vpop.xlane.xlu0 %5000
      %v5002 = vsel %vm964, %v4996, 0.0
      %5003 = vadd.xlane.f32.xlu0 %v5002
      %v5004 = vpop.xlane.xlu0 %5003
      %v5005 = vsel %vm964, %v4997, 0.0
      %5006 = vadd.xlane.f32.xlu0 %v5005
      %v5007 = vpop.xlane.xlu0 %5006
      %v5008 = vsel %vm974, %v4998, 0.0
      %5009 = vadd.xlane.f32.xlu0 %v5008
      %v5010 = vpop.xlane.xlu0 %5009
      %v5011 = vmul.f32 %v5001, %v978
      %v5012 = vmul.f32 %v5004, %v978
      %v5013 = vmul.f32 %v5007, %v978
      %v5014 = vmul.f32 %v5010, %v978
      %v5015 = vsub.f32 %v4995, %v5011
      %v5016 = vsub.f32 %v4996, %v5012
      %v5017 = vsub.f32 %v4997, %v5013
      %v5018 = vsub.f32 %v4998, %v5014
      %v5019 = vmul.f32 %v5015, %v5015
      %v5020 = vmul.f32 %v5016, %v5016
      %v5021 = vmul.f32 %v5017, %v5017
      %v5022 = vmul.f32 %v5018, %v5018
      %v5023 = vsel %vm964, %v5019, 0.0
      %5024 = vadd.xlane.f32.xlu0 %v5023
      %v5025 = vpop.xlane.xlu0 %5024
      %v5026 = vsel %vm964, %v5020, 0.0
      %5027 = vadd.xlane.f32.xlu0 %v5026
      %v5028 = vpop.xlane.xlu0 %5027
      %v5029 = vsel %vm964, %v5021, 0.0
      %5030 = vadd.xlane.f32.xlu0 %v5029
      %v5031 = vpop.xlane.xlu0 %5030
      %v5032 = vsel %vm974, %v5022, 0.0
      %5033 = vadd.xlane.f32.xlu0 %v5032
      %v5034 = vpop.xlane.xlu0 %5033
      %v5035 = vmul.f32 %v5025, %v978
      %v5036 = vmul.f32 %v5028, %v978
      %v5037 = vmul.f32 %v5031, %v978
      %v5038 = vmul.f32 %v5034, %v978
      %v5039 = vadd.f32 %v5035, 1e-05
      %v5040 = vadd.f32 %v5036, 1e-05
      %v5041 = vadd.f32 %v5037, 1e-05
      %v5042 = vadd.f32 %v5038, 1e-05
      %v5043 = vrsqrt.pop %v5039
      %v5044 = vrsqrt.pop %v5040
      %v5045 = vrsqrt.pop %v5041
      %v5046 = vrsqrt.pop %v5042
      %v5047 = vmul.f32 %v5015, %v5043
      %v5048 = vmul.f32 %v5016, %v5044
      %v5049 = vmul.f32 %v5017, %v5045
      %v5050 = vmul.f32 %v5018, %v5046
      %v5051 = vlaneseq
      %v5052 = vshrl.u32 %v5051, 7
      %v5053 = vsub.s32 6, %v5052
      %v5054 = vrot.slane %v3564, %v5053
      %v5055 = vmul.f32 %v5047, %v5054
      %v5056 = vmul.f32 %v5048, %v5054
      %v5057 = vmul.f32 %v5049, %v5054
      %v5058 = vmul.f32 %v5050, %v5054
      %v5059 = vlaneseq
      %v5060 = vshrl.u32 %v5059, 7
      %v5061 = vsub.s32 7, %v5060
      %v5062 = vrot.slane %v3564, %v5061
      %v5063 = vadd.f32 %v5055, %v5062
      %v5064 = vadd.f32 %v5056, %v5062
      %v5065 = vadd.f32 %v5057, %v5062
      %v5066 = vadd.f32 %v5058, %v5062
      %v5067 = vmul.f32 %v4565, 0.25
      %v5068 = vmul.f32 %v4566, 0.25
      %v5069 = vmul.f32 %v4567, 0.25
      %v5070 = vmul.f32 %v4568, 0.25
      %s5071 = scalar_lea.vmem %s210, 32
      %5072 = vst.msk [vmem:[%s5071] sm:$0xff] %vm2217, %v5067
      %5073 = vst.msk [vmem:[%s5071 + $0x8] sm:$0xff] %vm2217, %v5068
      %5074 = vst.msk [vmem:[%s5071 + $0x10] sm:$0xff] %vm2217, %v5069
      %5075 = vst.msk [vmem:[%s5071 + $0x18] sm:$0x3f] %vm2227, %v5070
      %5076 = vst.msk [vmem:[%s205] sm:$0xff] %vm964, %v5063
      %5077 = vst.msk [vmem:[%s205 + $0x8] sm:$0xff] %vm964, %v5064
      %5078 = vst.msk [vmem:[%s205 + $0x10] sm:$0xff] %vm964, %v5065
      %5079 = vst.msk [vmem:[%s205 + $0x18] sm:$0x3f] %vm974, %v5066
      %p5080 = scmp.lt.s32.totalorder %s16, 1
      %s5081 = scalar_select %p5080, %s16, 1
      %s5082 = smul.addr %s5081, 4
      %s5083 = smul.addr %s5082, 8
      %s5084 = scalar_lea.vmem %s3, %s5083
      %p5085 = scmp.lt.s32.totalorder %s16, 1
      %s5086 = scalar_select %p5085, %s16, 1
      %s5087 = smul.addr %s5086, 8
      %s5088 = smul.addr %s5087, 8
      %s5089 = scalar_lea.vmem %s4, %s5088
      // Predicated region
      $region33: #{encoder_forward.1} parent=31 // pred_check
        %p5090 = pneg %p102
      $region34: #{encoder_forward.1} parent=31 // pred_check_branch
        %5092 = sbr.rel (%p5090) target = $region36
      $region35: #{encoder_forward.1} parent=31 // pred_region
        _
      $region36: #{encoder_forward.1} parent=31 // pred_fallthru
        _
      // Predicated region
      $region37: #{encoder_forward.1} parent=31 // pred_check
        %p5093 = pneg %p128
      $region38: #{encoder_forward.1} parent=31 // pred_check_branch
        %5095 = sbr.rel (%p5093) target = $region40
      $region39: #{encoder_forward.1} parent=31 // pred_region
        _
      $region40: #{encoder_forward.1} parent=31 // pred_fallthru
        _
    $region32: #{encoder_forward.1} parent=5 // pred_fallthru
      _
    %p5096 = scmp.le.s32.totalorder 2, %s11
    // Predicated region
    $region41: #{encoder_forward.1} parent=5 // pred_check
      %p5097 = pneg %p5096
    $region42: #{encoder_forward.1} parent=5 // pred_check_branch
      %5099 = sbr.rel (%p5097) target = $region44
    $region43: #{encoder_forward.1} parent=5 // pred_region
      %s5100 = ssub.s32 %s11, 2
      // Predicated region
      $region45: #{encoder_forward.1} parent=43 // pred_check
        %p5101 = pneg %p108
      $region46: #{encoder_forward.1} parent=43 // pred_check_branch
        %5103 = sbr.rel (%p5101) target = $region48
      $region47: #{encoder_forward.1} parent=43 // pred_region
        %p5104 = scmp.lt.s32.totalorder %s17, 1
        %s5105 = scalar_select %p5104, %s17, 1
        %s5106 = smul.addr %s5105, 4
        %s5107 = smul.addr %s5106, 8
        %s5108 = scalar_lea.vmem %s3, %s5107
      $region48: #{encoder_forward.1} parent=43 // pred_fallthru
        _
      // Predicated region
      $region49: #{encoder_forward.1} parent=43 // pred_check
        %p5109 = pneg %p134
      $region50: #{encoder_forward.1} parent=43 // pred_check_branch
        %5111 = sbr.rel (%p5109) target = $region52
      $region51: #{encoder_forward.1} parent=43 // pred_region
        %p5112 = scmp.lt.s32.totalorder %s17, 1
        %s5113 = scalar_select %p5112, %s17, 1
        %s5114 = smul.addr %s5113, 8
        %s5115 = smul.addr %s5114, 8
        %s5116 = scalar_lea.vmem %s4, %s5115
      $region52: #{encoder_forward.1} parent=43 // pred_fallthru
        _
    $region44: #{encoder_forward.1} parent=5 // pred_fallthru
      _
  $region6: #{encoder_forward.1} parent=0 // loop_footer
    %s15 = sadd.s32 1, %s11
  $region7: #{encoder_forward.1} parent=0 // loop_footer_branch
    %10 = sbr.rel target = $region3
  $region8: #{encoder_forward.1} parent=0 // loop_exit
    _

</llo_original>
